<compile_context>
chip_gen: v7x
topology: tpu7x:2x2x1
jax: 0.10.0
libtpu: 0.0.40
codegen_flags: <defaults>
</compile_context>

<pallas_src>
import functools

import jax
import jax.numpy as jnp
from jax.experimental import pallas as pl
from jax.experimental.pallas import tpu as pltpu

EPS = 1e-3  # BatchNorm2d(eps=0.001)


def _round_up(x, m):
    return ((x + m - 1) // m) * m


def _pick_row_tile(hw, target=2048):
    """Largest multiple-of-8 divisor of hw that is <= target (else full hw)."""
    for t in range(min(hw, target), 7, -1):
        if hw % t == 0 and t % 8 == 0:
            return t
    return hw


def _conv_stats_kernel(xp_ref, w_ref, y_ref, sum_ref, ssq_ref, *, H, W, K):
    """Pass 1: direct conv for one image as K*K accumulating MXU matmuls + channel stats.

    xp_ref : (1, H+2p, W+2p, Cin_p)  bf16/f32  padded NHWC input tile
    w_ref  : (K*K, Cin_p, Cp)        bf16/f32  per-tap weight matrices (resident)
    y_ref  : (1, H*W, Cp)            f32       conv output (pre-BN)
    sum_ref: (1, 1, Cp)              f32       per-image channel sum
    ssq_ref: (1, 1, Cp)              f32       per-image channel sum of squares
    """
    HW = H * W
    Cp = y_ref.shape[-1]

    xp = xp_ref[0]                                    # (Hp, Wp, Cin_p) in VMEM
    acc = jnp.zeros((HW, Cp), jnp.float32)
    for kh in range(K):                               # 9 accumulating MXU matmuls
        for kw in range(K):
            xs = xp[kh:kh + H, kw:kw + W, :].reshape(HW, -1)
            acc = acc + jnp.dot(xs, w_ref[kh * K + kw],
                                preferred_element_type=jnp.float32)

    y_ref[0] = acc
    # One sweep for the stats: sum and sum-of-squares (mean/var finalized in the wrapper).
    sum_ref[0] = jnp.sum(acc, axis=0, keepdims=True)
    ssq_ref[0] = jnp.sum(acc * acc, axis=0, keepdims=True)


def _bn_relu_kernel(y_ref, scale_ref, shift_ref, o_ref):
    """Pass 2: y * scale + shift, ReLU.  Folded affine -> 3 VPU ops per element."""
    y = y_ref[0]                                      # (T, Cp) f32
    o_ref[0] = jnp.maximum(y * scale_ref[...] + shift_ref[...], 0.0).astype(o_ref.dtype)


@functools.partial(
    jax.jit,
    static_argnames=("kernel_size", "padding", "compute_dtype", "channels_last"))
def basic_conv2d(x, weight, gamma, beta, *, kernel_size=3, padding=1,
                 compute_dtype=jnp.bfloat16, channels_last=False):
    """Fused Conv2d(bias=False, stride=1) + BatchNorm2d(training stats, eps=1e-3) + ReLU.

    x:      [N, C_in, H, W]   (NCHW, like PyTorch)
    weight: [C_out, C_in, K, K]
    gamma:  [C_out]  (bn.weight)
    beta:   [C_out]  (bn.bias)
    returns [N, C_out, H, W]  (or NHWC [N, H, W, C_out] if channels_last=True)
    """
    N, C_in, H, W = x.shape
    C_out = weight.shape[0]
    K = kernel_size
    HW = H * W
    Cin_p = _round_up(C_in, 8)        # sublane-aligned contraction
    Cp = _round_up(C_out, 128)        # lane-dense output channels
    Hp, Wp = H + 2 * padding, W + 2 * padding

    # ---- layout prep (each tensor read/written once; no K*K im2col blow-up) ----
    x_nhwc = jnp.transpose(x, (0, 2, 3, 1))
    x_pad = jnp.pad(
        x_nhwc,
        ((0, 0), (padding, padding), (padding, padding), (0, Cin_p - C_in)),
    ).astype(compute_dtype)

    w_t = jnp.transpose(weight, (2, 3, 1, 0)).reshape(K * K, C_in, C_out)
    w_t = jnp.pad(w_t, ((0, 0), (0, Cin_p - C_in), (0, Cp - C_out))).astype(compute_dtype)

    gamma_p = jnp.pad(gamma.astype(jnp.float32), (0, Cp - C_out))
    beta_p = jnp.pad(beta.astype(jnp.float32), (0, Cp - C_out))

    # ---- pass 1: conv + per-image channel statistics (grid over batch, parallel) ----
    kern1 = functools.partial(_conv_stats_kernel, H=H, W=W, K=K)
    y, psum, pssq = pl.pallas_call(
        kern1,
        grid=(N,),
        in_specs=[
            pl.BlockSpec((1, Hp, Wp, Cin_p), lambda n: (n, 0, 0, 0)),
            pl.BlockSpec((K * K, Cin_p, Cp), lambda n: (0, 0, 0)),    # weights resident
        ],
        out_specs=[
            pl.BlockSpec((1, HW, Cp), lambda n: (n, 0, 0)),
            pl.BlockSpec((1, 1, Cp), lambda n: (n, 0, 0)),
            pl.BlockSpec((1, 1, Cp), lambda n: (n, 0, 0)),
        ],
        out_shape=[
            jax.ShapeDtypeStruct((N, HW, Cp), jnp.float32),
            jax.ShapeDtypeStruct((N, 1, Cp), jnp.float32),
            jax.ShapeDtypeStruct((N, 1, Cp), jnp.float32),
        ],
        compiler_params=pltpu.CompilerParams(
            dimension_semantics=("parallel",),
            vmem_limit_bytes=64 * 1024 * 1024),
    )(x_pad, w_t)

    # ---- finalize BN stats + fold affine into two per-channel vectors (tiny O(C) math) ----
    m_tot = jnp.float32(N * HW)
    ch_sum = jnp.sum(psum[:, 0, :], axis=0)
    ch_ssq = jnp.sum(pssq[:, 0, :], axis=0)
    mean = ch_sum / m_tot
    var = jnp.maximum(ch_ssq / m_tot - mean * mean, 0.0)     # biased var, f32
    inv_std = jax.lax.rsqrt(var + EPS)
    scale = (gamma_p * inv_std).reshape(1, Cp)
    shift = (beta_p - mean * gamma_p * inv_std).reshape(1, Cp)

    # ---- pass 2: lane-dense normalize + ReLU sweep (pipelined, memory-bound) ----
    T = _pick_row_tile(HW)
    out_flat = pl.pallas_call(
        _bn_relu_kernel,
        grid=(N, HW // T),
        in_specs=[
            pl.BlockSpec((1, T, Cp), lambda n, t: (n, t, 0)),
            pl.BlockSpec((1, Cp), lambda n, t: (0, 0)),
            pl.BlockSpec((1, Cp), lambda n, t: (0, 0)),
        ],
        out_specs=pl.BlockSpec((1, T, Cp), lambda n, t: (n, t, 0)),
        out_shape=jax.ShapeDtypeStruct((N, HW, Cp), x.dtype),
        compiler_params=pltpu.CompilerParams(
            dimension_semantics=("parallel", "parallel"),
            vmem_limit_bytes=64 * 1024 * 1024),
    )(y, scale, shift)

    out = out_flat.reshape(N, H, W, Cp)[..., :C_out]
    if channels_last:
        return out                                    # NHWC: skips the final HBM transpose
    return jnp.transpose(out, (0, 3, 1, 2))           # NCHW (PyTorch semantics)


def _reference(x, weight, gamma, beta, padding=1, compute_dtype=jnp.bfloat16):
    """Pure-JAX reference matching PyTorch forward (training-mode BN), same bf16 MXU inputs."""
    y = jax.lax.conv_general_dilated(
        x.astype(compute_dtype), weight.astype(compute_dtype),
        window_strides=(1, 1),
        padding=[(padding, padding), (padding, padding)],
        dimension_numbers=("NCHW", "OIHW", "NCHW"),
        preferred_element_type=jnp.float32)
    mean = jnp.mean(y, axis=(0, 2, 3), keepdims=True)
    var = jnp.mean((y - mean) ** 2, axis=(0, 2, 3), keepdims=True)
    y = (y - mean) * jax.lax.rsqrt(var + EPS)
    y = y * gamma.reshape(1, -1, 1, 1) + beta.reshape(1, -1, 1, 1)
    return jnp.maximum(y, 0.0).astype(x.dtype)


if __name__ == "__main__":
    key = jax.random.PRNGKey(0)
    k_x, k_w = jax.random.split(key)

    N, C_in, H, W = 2, 4, 16, 16
    C_out, K, PAD = 8, 3, 1

    x = jax.random.normal(k_x, (N, C_in, H, W), dtype=jnp.float32)
    # Deterministic synthetic params (shapes from nn.Conv2d / nn.BatchNorm2d __init__).
    weight = jax.random.normal(k_w, (C_out, C_in, K, K), dtype=jnp.float32) * 0.1
    gamma = jnp.ones((C_out,), dtype=jnp.float32)   # bn.weight init
    beta = jnp.zeros((C_out,), dtype=jnp.float32)   # bn.bias init

    out = basic_conv2d(x, weight, gamma, beta, kernel_size=K, padding=PAD)
    out = jax.block_until_ready(out)

    ref = jax.block_until_ready(_reference(x, weight, gamma, beta, padding=PAD))
    assert out.shape == (N, C_out, H, W)
    max_err = float(jnp.max(jnp.abs(out - ref)))
    assert jnp.allclose(out, ref, atol=2e-4, rtol=2e-3), f"mismatch vs reference: {max_err}"

    print("KERNEL_OK")
</pallas_src>

<mosaic_0001>
module attributes {stable_mosaic.version = 11 : i64} {
  func.func @_conv_stats_kernel(%arg0: i32, %arg1: memref<1x18x18x8xbf16, #tpu.memory_space<vmem>>, %arg2: memref<9x8x128xbf16, #tpu.memory_space<vmem>>, %arg3: memref<1x256x128xf32, #tpu.memory_space<vmem>>, %arg4: memref<1x1x128xf32, #tpu.memory_space<vmem>>, %arg5: memref<1x1x128xf32, #tpu.memory_space<vmem>>) attributes {dimension_semantics = [#tpu.dimension_semantics<parallel>], iteration_bounds = array<i64: 2>, scalar_prefetch = 0 : i64, scratch_operands = 0 : i64, tpu.core_type = #tpu.core_type<tc>, window_params = [{transform_indices = @transform_0, window_bounds = array<i64: 1, 18, 18, 8>}, {pipeline_mode = #tpu.pipeline_mode<synchronous>, transform_indices = @transform_1, window_bounds = array<i64: 9, 8, 128>}, {transform_indices = @transform_2, window_bounds = array<i64: 1, 256, 128>}, {transform_indices = @transform_3, window_bounds = array<i64: 1, 1, 128>}, {transform_indices = @transform_4, window_bounds = array<i64: 1, 1, 128>}]} {
    %c0 = arith.constant 0 : index
    %c0_0 = arith.constant 0 : index
    %c0_1 = arith.constant 0 : index
    %c0_2 = arith.constant 0 : index
    %0 = vector.load %arg1[%c0, %c0_0, %c0_1, %c0_2] : memref<1x18x18x8xbf16, #tpu.memory_space<vmem>>, vector<1x18x18x8xbf16>
    %1 = vector.shape_cast %0 : vector<1x18x18x8xbf16> to vector<18x18x8xbf16>
    %cst = arith.constant 0.000000e+00 : f32
    %2 = vector.broadcast %cst : f32 to vector<256x128xf32>
    %3 = vector.extract_strided_slice %1 {offsets = [0, 0, 0], sizes = [16, 16, 8], strides = [1, 1, 1]} : vector<18x18x8xbf16> to vector<16x16x8xbf16>
    %4 = vector.shape_cast %3 : vector<16x16x8xbf16> to vector<256x8xbf16>
    %c0_3 = arith.constant 0 : index
    %c0_4 = arith.constant 0 : index
    %c0_5 = arith.constant 0 : index
    %5 = vector.load %arg2[%c0_3, %c0_4, %c0_5] : memref<9x8x128xbf16, #tpu.memory_space<vmem>>, vector<1x8x128xbf16>
    %6 = vector.shape_cast %5 : vector<1x8x128xbf16> to vector<8x128xbf16>
    %cst_6 = arith.constant dense<0.000000e+00> : vector<256x128xf32>
    %7 = tpu.matmul %4, %6, %cst_6 {dimension_numbers = #tpu.dot_dimension_numbers<[1], [0], [0], [1], [0, 0, 1, 1], [], []>} : vector<256x8xbf16>, vector<8x128xbf16>, vector<256x128xf32> -> vector<256x128xf32>
    %8 = arith.addf %2, %7 : vector<256x128xf32>
    %9 = vector.extract_strided_slice %1 {offsets = [0, 1, 0], sizes = [16, 16, 8], strides = [1, 1, 1]} : vector<18x18x8xbf16> to vector<16x16x8xbf16>
    %10 = vector.shape_cast %9 : vector<16x16x8xbf16> to vector<256x8xbf16>
    %c1 = arith.constant 1 : index
    %c0_7 = arith.constant 0 : index
    %c0_8 = arith.constant 0 : index
    %11 = vector.load %arg2[%c1, %c0_7, %c0_8] : memref<9x8x128xbf16, #tpu.memory_space<vmem>>, vector<1x8x128xbf16>
    %12 = vector.shape_cast %11 : vector<1x8x128xbf16> to vector<8x128xbf16>
    %cst_9 = arith.constant dense<0.000000e+00> : vector<256x128xf32>
    %13 = tpu.matmul %10, %12, %cst_9 {dimension_numbers = #tpu.dot_dimension_numbers<[1], [0], [0], [1], [0, 0, 1, 1], [], []>} : vector<256x8xbf16>, vector<8x128xbf16>, vector<256x128xf32> -> vector<256x128xf32>
    %14 = arith.addf %8, %13 : vector<256x128xf32>
    %15 = vector.extract_strided_slice %1 {offsets = [0, 2, 0], sizes = [16, 16, 8], strides = [1, 1, 1]} : vector<18x18x8xbf16> to vector<16x16x8xbf16>
    %16 = vector.shape_cast %15 : vector<16x16x8xbf16> to vector<256x8xbf16>
    %c2 = arith.constant 2 : index
    %c0_10 = arith.constant 0 : index
    %c0_11 = arith.constant 0 : index
    %17 = vector.load %arg2[%c2, %c0_10, %c0_11] : memref<9x8x128xbf16, #tpu.memory_space<vmem>>, vector<1x8x128xbf16>
    %18 = vector.shape_cast %17 : vector<1x8x128xbf16> to vector<8x128xbf16>
    %cst_12 = arith.constant dense<0.000000e+00> : vector<256x128xf32>
    %19 = tpu.matmul %16, %18, %cst_12 {dimension_numbers = #tpu.dot_dimension_numbers<[1], [0], [0], [1], [0, 0, 1, 1], [], []>} : vector<256x8xbf16>, vector<8x128xbf16>, vector<256x128xf32> -> vector<256x128xf32>
    %20 = arith.addf %14, %19 : vector<256x128xf32>
    %21 = vector.extract_strided_slice %1 {offsets = [1, 0, 0], sizes = [16, 16, 8], strides = [1, 1, 1]} : vector<18x18x8xbf16> to vector<16x16x8xbf16>
    %22 = vector.shape_cast %21 : vector<16x16x8xbf16> to vector<256x8xbf16>
    %c3 = arith.constant 3 : index
    %c0_13 = arith.constant 0 : index
    %c0_14 = arith.constant 0 : index
    %23 = vector.load %arg2[%c3, %c0_13, %c0_14] : memref<9x8x128xbf16, #tpu.memory_space<vmem>>, vector<1x8x128xbf16>
    %24 = vector.shape_cast %23 : vector<1x8x128xbf16> to vector<8x128xbf16>
    %cst_15 = arith.constant dense<0.000000e+00> : vector<256x128xf32>
    %25 = tpu.matmul %22, %24, %cst_15 {dimension_numbers = #tpu.dot_dimension_numbers<[1], [0], [0], [1], [0, 0, 1, 1], [], []>} : vector<256x8xbf16>, vector<8x128xbf16>, vector<256x128xf32> -> vector<256x128xf32>
    %26 = arith.addf %20, %25 : vector<256x128xf32>
    %27 = vector.extract_strided_slice %1 {offsets = [1, 1, 0], sizes = [16, 16, 8], strides = [1, 1, 1]} : vector<18x18x8xbf16> to vector<16x16x8xbf16>
    %28 = vector.shape_cast %27 : vector<16x16x8xbf16> to vector<256x8xbf16>
    %c4 = arith.constant 4 : index
    %c0_16 = arith.constant 0 : index
    %c0_17 = arith.constant 0 : index
    %29 = vector.load %arg2[%c4, %c0_16, %c0_17] : memref<9x8x128xbf16, #tpu.memory_space<vmem>>, vector<1x8x128xbf16>
    %30 = vector.shape_cast %29 : vector<1x8x128xbf16> to vector<8x128xbf16>
    %cst_18 = arith.constant dense<0.000000e+00> : vector<256x128xf32>
    %31 = tpu.matmul %28, %30, %cst_18 {dimension_numbers = #tpu.dot_dimension_numbers<[1], [0], [0], [1], [0, 0, 1, 1], [], []>} : vector<256x8xbf16>, vector<8x128xbf16>, vector<256x128xf32> -> vector<256x128xf32>
    %32 = arith.addf %26, %31 : vector<256x128xf32>
    %33 = vector.extract_strided_slice %1 {offsets = [1, 2, 0], sizes = [16, 16, 8], strides = [1, 1, 1]} : vector<18x18x8xbf16> to vector<16x16x8xbf16>
    %34 = vector.shape_cast %33 : vector<16x16x8xbf16> to vector<256x8xbf16>
    %c5 = arith.constant 5 : index
    %c0_19 = arith.constant 0 : index
    %c0_20 = arith.constant 0 : index
    %35 = vector.load %arg2[%c5, %c0_19, %c0_20] : memref<9x8x128xbf16, #tpu.memory_space<vmem>>, vector<1x8x128xbf16>
    %36 = vector.shape_cast %35 : vector<1x8x128xbf16> to vector<8x128xbf16>
    %cst_21 = arith.constant dense<0.000000e+00> : vector<256x128xf32>
    %37 = tpu.matmul %34, %36, %cst_21 {dimension_numbers = #tpu.dot_dimension_numbers<[1], [0], [0], [1], [0, 0, 1, 1], [], []>} : vector<256x8xbf16>, vector<8x128xbf16>, vector<256x128xf32> -> vector<256x128xf32>
    %38 = arith.addf %32, %37 : vector<256x128xf32>
    %39 = vector.extract_strided_slice %1 {offsets = [2, 0, 0], sizes = [16, 16, 8], strides = [1, 1, 1]} : vector<18x18x8xbf16> to vector<16x16x8xbf16>
    %40 = vector.shape_cast %39 : vector<16x16x8xbf16> to vector<256x8xbf16>
    %c6 = arith.constant 6 : index
    %c0_22 = arith.constant 0 : index
    %c0_23 = arith.constant 0 : index
    %41 = vector.load %arg2[%c6, %c0_22, %c0_23] : memref<9x8x128xbf16, #tpu.memory_space<vmem>>, vector<1x8x128xbf16>
    %42 = vector.shape_cast %41 : vector<1x8x128xbf16> to vector<8x128xbf16>
    %cst_24 = arith.constant dense<0.000000e+00> : vector<256x128xf32>
    %43 = tpu.matmul %40, %42, %cst_24 {dimension_numbers = #tpu.dot_dimension_numbers<[1], [0], [0], [1], [0, 0, 1, 1], [], []>} : vector<256x8xbf16>, vector<8x128xbf16>, vector<256x128xf32> -> vector<256x128xf32>
    %44 = arith.addf %38, %43 : vector<256x128xf32>
    %45 = vector.extract_strided_slice %1 {offsets = [2, 1, 0], sizes = [16, 16, 8], strides = [1, 1, 1]} : vector<18x18x8xbf16> to vector<16x16x8xbf16>
    %46 = vector.shape_cast %45 : vector<16x16x8xbf16> to vector<256x8xbf16>
    %c7 = arith.constant 7 : index
    %c0_25 = arith.constant 0 : index
    %c0_26 = arith.constant 0 : index
    %47 = vector.load %arg2[%c7, %c0_25, %c0_26] : memref<9x8x128xbf16, #tpu.memory_space<vmem>>, vector<1x8x128xbf16>
    %48 = vector.shape_cast %47 : vector<1x8x128xbf16> to vector<8x128xbf16>
    %cst_27 = arith.constant dense<0.000000e+00> : vector<256x128xf32>
    %49 = tpu.matmul %46, %48, %cst_27 {dimension_numbers = #tpu.dot_dimension_numbers<[1], [0], [0], [1], [0, 0, 1, 1], [], []>} : vector<256x8xbf16>, vector<8x128xbf16>, vector<256x128xf32> -> vector<256x128xf32>
    %50 = arith.addf %44, %49 : vector<256x128xf32>
    %51 = vector.extract_strided_slice %1 {offsets = [2, 2, 0], sizes = [16, 16, 8], strides = [1, 1, 1]} : vector<18x18x8xbf16> to vector<16x16x8xbf16>
    %52 = vector.shape_cast %51 : vector<16x16x8xbf16> to vector<256x8xbf16>
    %c8 = arith.constant 8 : index
    %c0_28 = arith.constant 0 : index
    %c0_29 = arith.constant 0 : index
    %53 = vector.load %arg2[%c8, %c0_28, %c0_29] : memref<9x8x128xbf16, #tpu.memory_space<vmem>>, vector<1x8x128xbf16>
    %54 = vector.shape_cast %53 : vector<1x8x128xbf16> to vector<8x128xbf16>
    %cst_30 = arith.constant dense<0.000000e+00> : vector<256x128xf32>
    %55 = tpu.matmul %52, %54, %cst_30 {dimension_numbers = #tpu.dot_dimension_numbers<[1], [0], [0], [1], [0, 0, 1, 1], [], []>} : vector<256x8xbf16>, vector<8x128xbf16>, vector<256x128xf32> -> vector<256x128xf32>
    %56 = arith.addf %50, %55 : vector<256x128xf32>
    %c0_31 = arith.constant 0 : index
    %c0_32 = arith.constant 0 : index
    %c0_33 = arith.constant 0 : index
    %57 = vector.load %arg3[%c0_31, %c0_32, %c0_33] : memref<1x256x128xf32, #tpu.memory_space<vmem>>, vector<1x256x128xf32>
    %58 = vector.shape_cast %57 : vector<1x256x128xf32> to vector<256x128xf32>
    %59 = vector.shape_cast %56 : vector<256x128xf32> to vector<1x256x128xf32>
    tpu.vector_store %arg3[%c0_31, %c0_32, %c0_33], %59 {strides = array<i32>} : memref<1x256x128xf32, #tpu.memory_space<vmem>>, vector<1x256x128xf32>,
    %cst_34 = arith.constant dense<0.000000e+00> : vector<128xf32>
    %60 = vector.multi_reduction <add>, %56, %cst_34 [0] : vector<256x128xf32> to vector<128xf32>
    %61 = vector.shape_cast %60 : vector<128xf32> to vector<1x128xf32>
    %c0_35 = arith.constant 0 : index
    %c0_36 = arith.constant 0 : index
    %c0_37 = arith.constant 0 : index
    %62 = vector.load %arg4[%c0_35, %c0_36, %c0_37] : memref<1x1x128xf32, #tpu.memory_space<vmem>>, vector<1x1x128xf32>
    %63 = vector.shape_cast %62 : vector<1x1x128xf32> to vector<1x128xf32>
    %64 = vector.shape_cast %61 : vector<1x128xf32> to vector<1x1x128xf32>
    tpu.vector_store %arg4[%c0_35, %c0_36, %c0_37], %64 {strides = array<i32>} : memref<1x1x128xf32, #tpu.memory_space<vmem>>, vector<1x1x128xf32>,
    %65 = arith.mulf %56, %56 : vector<256x128xf32>
    %cst_38 = arith.constant dense<0.000000e+00> : vector<128xf32>
    %66 = vector.multi_reduction <add>, %65, %cst_38 [0] : vector<256x128xf32> to vector<128xf32>
    %67 = vector.shape_cast %66 : vector<128xf32> to vector<1x128xf32>
    %c0_39 = arith.constant 0 : index
    %c0_40 = arith.constant 0 : index
    %c0_41 = arith.constant 0 : index
    %68 = vector.load %arg5[%c0_39, %c0_40, %c0_41] : memref<1x1x128xf32, #tpu.memory_space<vmem>>, vector<1x1x128xf32>
    %69 = vector.shape_cast %68 : vector<1x1x128xf32> to vector<1x128xf32>
    %70 = vector.shape_cast %67 : vector<1x128xf32> to vector<1x1x128xf32>
    tpu.vector_store %arg5[%c0_39, %c0_40, %c0_41], %70 {strides = array<i32>} : memref<1x1x128xf32, #tpu.memory_space<vmem>>, vector<1x1x128xf32>,
    return
  }
  func.func @transform_0(%arg0: i32) -> (i32, i32, i32, i32) {
    %c0_i32 = arith.constant 0 : i32
    %c0_i32_0 = arith.constant 0 : i32
    %c0_i32_1 = arith.constant 0 : i32
    %c0_i32_2 = arith.constant 0 : i32
    return %arg0, %c0_i32, %c0_i32_0, %c0_i32_1 : i32, i32, i32, i32
  }
  func.func @transform_1(%arg0: i32) -> (i32, i32, i32) {
    %c0_i32 = arith.constant 0 : i32
    %c0_i32_0 = arith.constant 0 : i32
    %c0_i32_1 = arith.constant 0 : i32
    %c0_i32_2 = arith.constant 0 : i32
    return %c0_i32, %c0_i32_0, %c0_i32_1 : i32, i32, i32
  }
  func.func @transform_2(%arg0: i32) -> (i32, i32, i32) {
    %c0_i32 = arith.constant 0 : i32
    %c0_i32_0 = arith.constant 0 : i32
    %c0_i32_1 = arith.constant 0 : i32
    return %arg0, %c0_i32, %c0_i32_0 : i32, i32, i32
  }
  func.func @transform_3(%arg0: i32) -> (i32, i32, i32) {
    %c0_i32 = arith.constant 0 : i32
    %c0_i32_0 = arith.constant 0 : i32
    %c0_i32_1 = arith.constant 0 : i32
    return %arg0, %c0_i32, %c0_i32_0 : i32, i32, i32
  }
  func.func @transform_4(%arg0: i32) -> (i32, i32, i32) {
    %c0_i32 = arith.constant 0 : i32
    %c0_i32_0 = arith.constant 0 : i32
    %c0_i32_1 = arith.constant 0 : i32
    return %arg0, %c0_i32, %c0_i32_0 : i32, i32, i32
  }
}

module attributes {stable_mosaic.version = 11 : i64} {
  func.func @_bn_relu_kernel(%arg0: i32, %arg1: i32, %arg2: memref<1x256x128xf32, #tpu.memory_space<vmem>>, %arg3: memref<1x128xf32, #tpu.memory_space<vmem>>, %arg4: memref<1x128xf32, #tpu.memory_space<vmem>>, %arg5: memref<1x256x128xf32, #tpu.memory_space<vmem>>) attributes {dimension_semantics = [#tpu.dimension_semantics<parallel>, #tpu.dimension_semantics<parallel>], iteration_bounds = array<i64: 2, 1>, scalar_prefetch = 0 : i64, scratch_operands = 0 : i64, tpu.core_type = #tpu.core_type<tc>, window_params = [{transform_indices = @transform_0, window_bounds = array<i64: 1, 256, 128>}, {pipeline_mode = #tpu.pipeline_mode<synchronous>, transform_indices = @transform_1, window_bounds = array<i64: 1, 128>}, {pipeline_mode = #tpu.pipeline_mode<synchronous>, transform_indices = @transform_2, window_bounds = array<i64: 1, 128>}, {transform_indices = @transform_3, window_bounds = array<i64: 1, 256, 128>}]} {
    %c0 = arith.constant 0 : index
    %c0_0 = arith.constant 0 : index
    %c0_1 = arith.constant 0 : index
    %0 = vector.load %arg2[%c0, %c0_0, %c0_1] : memref<1x256x128xf32, #tpu.memory_space<vmem>>, vector<1x256x128xf32>
    %1 = vector.shape_cast %0 : vector<1x256x128xf32> to vector<256x128xf32>
    %c0_2 = arith.constant 0 : index
    %c0_3 = arith.constant 0 : index
    %2 = vector.load %arg3[%c0_2, %c0_3] : memref<1x128xf32, #tpu.memory_space<vmem>>, vector<1x128xf32>
    %3 = vector.broadcast %2 : vector<1x128xf32> to vector<256x128xf32>
    %4 = arith.mulf %1, %3 : vector<256x128xf32>
    %c0_4 = arith.constant 0 : index
    %c0_5 = arith.constant 0 : index
    %5 = vector.load %arg4[%c0_4, %c0_5] : memref<1x128xf32, #tpu.memory_space<vmem>>, vector<1x128xf32>
    %6 = vector.broadcast %5 : vector<1x128xf32> to vector<256x128xf32>
    %7 = arith.addf %4, %6 : vector<256x128xf32>
    %cst = arith.constant 0.000000e+00 : f32
    %8 = vector.broadcast %cst : f32 to vector<256x128xf32>
    %9 = arith.maximumf %7, %8 : vector<256x128xf32>
    %c0_6 = arith.constant 0 : index
    %c0_7 = arith.constant 0 : index
    %c0_8 = arith.constant 0 : index
    %10 = vector.load %arg5[%c0_6, %c0_7, %c0_8] : memref<1x256x128xf32, #tpu.memory_space<vmem>>, vector<1x256x128xf32>
    %11 = vector.shape_cast %10 : vector<1x256x128xf32> to vector<256x128xf32>
    %12 = vector.shape_cast %9 : vector<256x128xf32> to vector<1x256x128xf32>
    tpu.vector_store %arg5[%c0_6, %c0_7, %c0_8], %12 {strides = array<i32>} : memref<1x256x128xf32, #tpu.memory_space<vmem>>, vector<1x256x128xf32>,
    return
  }
  func.func @transform_0(%arg0: i32, %arg1: i32) -> (i32, i32, i32) {
    %c0_i32 = arith.constant 0 : i32
    %c0_i32_0 = arith.constant 0 : i32
    return %arg0, %arg1, %c0_i32 : i32, i32, i32
  }
  func.func @transform_1(%arg0: i32, %arg1: i32) -> (i32, i32) {
    %c0_i32 = arith.constant 0 : i32
    %c0_i32_0 = arith.constant 0 : i32
    %c0_i32_1 = arith.constant 0 : i32
    return %c0_i32, %c0_i32_0 : i32, i32
  }
  func.func @transform_2(%arg0: i32, %arg1: i32) -> (i32, i32) {
    %c0_i32 = arith.constant 0 : i32
    %c0_i32_0 = arith.constant 0 : i32
    %c0_i32_1 = arith.constant 0 : i32
    return %c0_i32, %c0_i32_0 : i32, i32
  }
  func.func @transform_3(%arg0: i32, %arg1: i32) -> (i32, i32, i32) {
    %c0_i32 = arith.constant 0 : i32
    %c0_i32_0 = arith.constant 0 : i32
    return %arg0, %arg1, %c0_i32 : i32, i32, i32
  }
}

</mosaic_0001>

<llo_original>
// kernel: basic_conv2d.3
$region0: #{basic_conv2d.3}
  #allocation0 [shape = 'u32[]', space=smem, size = 0x4, offset = 0x4, fixed_abs, tag = 'smem constant byte address 0x4 - core index']
  #allocation1 [shape = 'u32[144,128]{1,0:T(1,128)}', space=vmem, size = 0x12000, scoped, tag = 'internal scratch']
  %s0 = inlined_call_operand.hbm [shape: f32[2,256,128], index: 0, kind: input, shape index: {}]
  %s1 = inlined_call_operand.hbm [shape: f32[1,128], index: 1, kind: input, shape index: {}]
  %s2 = inlined_call_operand.hbm [shape: f32[1,128], index: 2, kind: input, shape index: {}]
  %s3 = inlined_call_operand.hbm [shape: f32[2,256,128], index: 3, kind: output, shape index: {}]
  %s4 = sld [smem:[#allocation0]]
  $region57: #{basic_conv2d.3} parent=0
    _
  %s6 = ssub.s32 1, %s4
  %s7 = scalar_select 0, %s6, %s4
  $region1: #{basic_conv2d.3} parent=0
    #allocation2 [shape = 'u8[262144]{0}', space=vmem, size = 0x40000, scoped, tag = 'input window, operand 0']
    #allocation3 [shape = 's32[2]{0}', space=sflag, size = 0x8, scoped, tag = 'scoped memory for basic_conv2d.3']
    #allocation4 [shape = 's32[2]{0}', space=sflag, size = 0x8, scoped, tag = 'scoped memory for basic_conv2d.3']
    #allocation5 [shape = 'u8[512]{0}', space=vmem, size = 0x400, scoped, tag = 'input window, operand 1, single buffered']
    #allocation6 [shape = 's32[1]{0}', space=sflag, size = 0x4, scoped, tag = 'scoped memory for basic_conv2d.3']
    #allocation7 [shape = 'u8[512]{0}', space=vmem, size = 0x400, scoped, tag = 'input window, operand 2, single buffered']
    #allocation8 [shape = 'u8[262144]{0}', space=vmem, size = 0x40000, scoped, tag = 'output window, operand 0']
    %8 = vsyncpa [#allocation3], 0
    %s9 = scalar_lea.sflag [#allocation3], 1
    %10 = vsyncpa %s9, 0
    %11 = vsyncpa [#allocation6], 0
    %12 = vsyncpa [#allocation4], 0
    %s13 = scalar_lea.sflag [#allocation4], 1
    %14 = vsyncpa %s13, 0
    loop: start=0, step=1, limit=4
    $region2: #{basic_conv2d.3} parent=1 // loop_pre_header
      _
    $region3: #{basic_conv2d.3} parent=1 // loop_header
      %s16 = sphi 0, %s20
      %p17 = scmp.ge.s32.totalorder %s16, 4
      %s23 = sphi 0, %s35
      %s24 = sphi 0, %s31
      %s25 = sphi 0, %s23
      %s26 = sphi 0, %s24
      %s27 = sphi 0, %s25
      %s28 = sphi 0, %s26
      %s40 = sphi 0, %s42
      %s43 = sphi 0, %s40
      %s44 = sphi 0, %s43
      %s60 = sphi 0, %s44
      %s64 = sphi 0, %s64
      %s66 = sphi 0, %s64
      %s67 = sphi 0, %s66
      %s81 = sphi 0, %s67
      %s85 = sphi 0, %s85
      %s87 = sphi 0, %s85
      %s88 = sphi 0, %s87
      %s102 = sphi 0, %s88
      %s110 = sphi 0, %s112
      %s113 = sphi 0, %s110
      %s114 = sphi 0, %s113
      %s130 = sphi 0, %s114
    $region4: #{basic_conv2d.3} parent=1 // loop_header_branch
      %19 = sbr.rel (%p17) target = $region8
    $region5: #{basic_conv2d.3} parent=1 // loop_body
      %s21 = ssub.s32 %s16, 1
      %s22 = ssub.s32 %s16, 2
      %s29 = sadd.s32 1, %s24
      %p30 = scmp.ge.s32.totalorder %s29, 1
      %s31 = scalar_select %p30, 0, %s29
      %s32 = sadd.s32 1, %s23
      %s33 = scalar_select %p30, %s32, %s23
      %p34 = scmp.ge.s32.totalorder %s33, 2
      %s35 = scalar_select %p34, 0, %s33
      %s36 = ssub.s32 %s23, %s35
      %s37 = ssub.s32 %s24, %s31
      %s38 = sor.u32 %s36, %s37
      %p39 = scmp.eq.s32.totalorder %s38, 0
      %s41 = sadd.s32 %s40, 1
      %s42 = scalar_select %p39, %s40, %s41
      %p45 = pneg %p39
      %p46 = scmp.eq.s32.totalorder %s16, 1
      %p47 = por %p45, %p46
      %p48 = scmp.ne.s32.totalorder %s40, %s43
      %p49 = scmp.eq.s32.totalorder %s16, 0
      %p50 = por %p48, %p49
      %p51 = scmp.ne.s32.totalorder %s40, %s43
      %p52 = scmp.eq.s32.totalorder %s21, 1
      %p53 = por %p51, %p52
      %p54 = scmp.ne.s32.totalorder %s43, %s44
      %p55 = scmp.eq.s32.totalorder %s21, 0
      %p56 = por %p54, %p55
      %p57 = scmp.ne.s32.totalorder %s43, %s44
      %p58 = scmp.eq.s32.totalorder %s22, 1
      %p59 = por %p57, %p58
      %p61 = scmp.ne.s32.totalorder %s44, %s60
      %p62 = scmp.eq.s32.totalorder %s22, 0
      %p63 = por %p61, %p62
      %s65 = sadd.s32 %s64, 1
      %p68 = scmp.eq.s32.totalorder %s16, 1
      %p69 = scmp.ne.s32.totalorder %s64, %s66
      %p70 = scmp.eq.s32.totalorder %s16, 0
      %p71 = por %p69, %p70
      %p72 = scmp.ne.s32.totalorder %s64, %s66
      %p73 = scmp.eq.s32.totalorder %s21, 1
      %p74 = por %p72, %p73
      %p75 = scmp.ne.s32.totalorder %s66, %s67
      %p76 = scmp.eq.s32.totalorder %s21, 0
      %p77 = por %p75, %p76
      %p78 = scmp.ne.s32.totalorder %s66, %s67
      %p79 = scmp.eq.s32.totalorder %s22, 1
      %p80 = por %p78, %p79
      %p82 = scmp.ne.s32.totalorder %s67, %s81
      %p83 = scmp.eq.s32.totalorder %s22, 0
      %p84 = por %p82, %p83
      %s86 = sadd.s32 %s85, 1
      %p89 = scmp.eq.s32.totalorder %s16, 1
      %p90 = scmp.ne.s32.totalorder %s85, %s87
      %p91 = scmp.eq.s32.totalorder %s16, 0
      %p92 = por %p90, %p91
      %p93 = scmp.ne.s32.totalorder %s85, %s87
      %p94 = scmp.eq.s32.totalorder %s21, 1
      %p95 = por %p93, %p94
      %p96 = scmp.ne.s32.totalorder %s87, %s88
      %p97 = scmp.eq.s32.totalorder %s21, 0
      %p98 = por %p96, %p97
      %p99 = scmp.ne.s32.totalorder %s87, %s88
      %p100 = scmp.eq.s32.totalorder %s22, 1
      %p101 = por %p99, %p100
      %p103 = scmp.ne.s32.totalorder %s88, %s102
      %p104 = scmp.eq.s32.totalorder %s22, 0
      %p105 = por %p103, %p104
      %s106 = ssub.s32 %s23, %s35
      %s107 = ssub.s32 %s24, %s31
      %s108 = sor.u32 %s106, %s107
      %p109 = scmp.eq.s32.totalorder %s108, 0
      %s111 = sadd.s32 %s110, 1
      %s112 = scalar_select %p109, %s110, %s111
      %p115 = pneg %p109
      %p116 = scmp.eq.s32.totalorder %s16, 1
      %p117 = por %p115, %p116
      %p118 = scmp.ne.s32.totalorder %s110, %s113
      %p119 = scmp.eq.s32.totalorder %s16, 0
      %p120 = por %p118, %p119
      %p121 = scmp.ne.s32.totalorder %s110, %s113
      %p122 = scmp.eq.s32.totalorder %s21, 1
      %p123 = por %p121, %p122
      %p124 = scmp.ne.s32.totalorder %s113, %s114
      %p125 = scmp.eq.s32.totalorder %s21, 0
      %p126 = por %p124, %p125
      %p127 = scmp.ne.s32.totalorder %s113, %s114
      %p128 = scmp.eq.s32.totalorder %s22, 1
      %p129 = por %p127, %p128
      %p131 = scmp.ne.s32.totalorder %s114, %s130
      %p132 = scmp.eq.s32.totalorder %s22, 0
      %p133 = por %p131, %p132
      %p134 = scmp.le.s32.totalorder 1, %s16
      %p135 = scmp.lt.s32.totalorder %s16, 3
      %p136 = pnand %p134, %p135
      %p137 = pneg %p136
      // Predicated region
      $region9: #{basic_conv2d.3} parent=5 // pred_check
        _
      $region10: #{basic_conv2d.3} parent=5 // pred_check_branch
        %139 = sbr.rel (%p136) target = $region12
      $region11: #{basic_conv2d.3} parent=5 // pred_region
        %s140 = ssub.s32 %s16, 1
        // Predicated region
        $region13: #{basic_conv2d.3} parent=11 // pred_check
          %p141 = pneg %p77
        $region14: #{basic_conv2d.3} parent=11 // pred_check_branch
          %143 = sbr.rel (%p141) target = $region16
        $region15: #{basic_conv2d.3} parent=11 // pred_region
          %s145 = ssub.s32 16, 16
          %146 = vsyncadd [#allocation6], %s145
          %s148 = sshll.u32 [#allocation5], 4
          %s149 = int_to_ptr.vmem [resolvable:$true] %s148
          %151 = dma.hbm_to_vmem [thread:$0]  %s1, 16, %s149, [#allocation6]
        $region16: #{basic_conv2d.3} parent=11 // pred_fallthru
          _
        // Predicated region
        $region17: #{basic_conv2d.3} parent=11 // pred_check
          %p152 = pneg %p98
        $region18: #{basic_conv2d.3} parent=11 // pred_check_branch
          %154 = sbr.rel (%p152) target = $region20
        $region19: #{basic_conv2d.3} parent=11 // pred_region
          %s156 = ssub.s32 16, 16
          %157 = vsyncadd [#allocation6], %s156
          %s159 = sshll.u32 [#allocation7], 4
          %s160 = int_to_ptr.vmem [resolvable:$true] %s159
          %162 = dma.hbm_to_vmem [thread:$0]  %s2, 16, %s160, [#allocation6]
        $region20: #{basic_conv2d.3} parent=11 // pred_fallthru
          _
      $region12: #{basic_conv2d.3} parent=5 // pred_fallthru
        _
      %p163 = scmp.lt.s32.totalorder %s16, 2
      // Predicated region
      $region21: #{basic_conv2d.3} parent=5 // pred_check
        %p164 = pneg %p163
      $region22: #{basic_conv2d.3} parent=5 // pred_check_branch
        %166 = sbr.rel (%p164) target = $region24
      $region23: #{basic_conv2d.3} parent=5 // pred_region
        // Predicated region
        $region25: #{basic_conv2d.3} parent=23 // pred_check
          %p167 = pneg %p50
        $region26: #{basic_conv2d.3} parent=23 // pred_check_branch
          %169 = sbr.rel (%p167) target = $region28
        $region27: #{basic_conv2d.3} parent=23 // pred_region
          %s170 = sand.u32 %s40, 1
          %s171 = scalar_lea.sflag [#allocation3], %s170
          %s172 = sand.u32 %s40, 1
          %s173 = smul.addr %s172, 256
          %s174 = scalar_lea.vmem [#allocation2], %s173
          %s175 = smul.u32 32, %s24
          %s177 = ssub.s32 4096, 4096
          %178 = vsyncadd %s171, %s177
          %s179 = smul.addr %s23, 32
          %s180 = sadd.s32 %s175, %s179
          %s181 = smul.addr %s180, 128
          %s182 = scalar_lea.hbm %s0, %s181
          %s183 = sshll.u32 %s174, 4
          %s184 = int_to_ptr.vmem [resolvable:$true] %s183
          %189 = dma.hbm_to_vmem [thread:$0]  %s182, 4096, %s184, %s171, 128, 128, 8
        $region28: #{basic_conv2d.3} parent=23 // pred_fallthru
          _
      $region24: #{basic_conv2d.3} parent=5 // pred_fallthru
        _
      %p190 = scmp.le.s32.totalorder 1, %s16
      %p191 = scmp.lt.s32.totalorder %s16, 3
      %p192 = pnand %p190, %p191
      %p193 = pneg %p192
      // Predicated region
      $region29: #{basic_conv2d.3} parent=5 // pred_check
        _
      $region30: #{basic_conv2d.3} parent=5 // pred_check_branch
        %195 = sbr.rel (%p192) target = $region32
      $region31: #{basic_conv2d.3} parent=5 // pred_region
        %s196 = ssub.s32 %s16, 1
        %s197 = sand.u32 %s43, 1
        %s198 = scalar_lea.sflag [#allocation3], %s197
        %s199 = sand.u32 %s43, 1
        %s200 = smul.addr %s199, 256
        %s201 = scalar_lea.vmem [#allocation2], %s200
        // Predicated region
        $region33: #{basic_conv2d.3} parent=31 // pred_check
          %p202 = pneg %p56
        $region34: #{basic_conv2d.3} parent=31 // pred_check_branch
          %204 = sbr.rel (%p202) target = $region36
        $region35: #{basic_conv2d.3} parent=31 // pred_region
          %205 = dma.done %s198, 4096
        $region36: #{basic_conv2d.3} parent=31 // pred_fallthru
          _
        // Predicated region
        $region37: #{basic_conv2d.3} parent=31 // pred_check
          %p206 = pneg %p77
        $region38: #{basic_conv2d.3} parent=31 // pred_check_branch
          %208 = sbr.rel (%p206) target = $region40
        $region39: #{basic_conv2d.3} parent=31 // pred_region
          %209 = dma.done [#allocation6], 16
        $region40: #{basic_conv2d.3} parent=31 // pred_fallthru
          _
        // Predicated region
        $region41: #{basic_conv2d.3} parent=31 // pred_check
          %p210 = pneg %p98
        $region42: #{basic_conv2d.3} parent=31 // pred_check_branch
          %212 = sbr.rel (%p210) target = $region44
        $region43: #{basic_conv2d.3} parent=31 // pred_region
          %213 = dma.done [#allocation6], 16
        $region44: #{basic_conv2d.3} parent=31 // pred_fallthru
          _
        %s214 = sand.u32 %s43, 1
        %s215 = scalar_lea.sflag [#allocation3], %s214
        %s216 = sand.u32 %s43, 1
        %s217 = smul.addr %s216, 256
        %s218 = scalar_lea.vmem [#allocation2], %s217
        %p219 = pneg %p56
        %p220 = pneg %p53
        %p221 = pneg %p77
        %p222 = pneg %p74
        %p223 = pneg %p98
        %p224 = pneg %p95
        %p225 = pneg %p126
        %p226 = pneg %p123
        %s227 = sand.u32 %s113, 1
        %s228 = scalar_lea.sflag [#allocation4], %s227
        %s229 = sand.u32 %s113, 1
        %s230 = smul.addr %s229, 256
        %s231 = scalar_lea.vmem [#allocation8], %s230
        %s232 = smul.u32 32, %s26
        %s233 = smul.u32 32, %s26
        %v234 = vld [vmem:[%s201] sm:$0xff]
        %v235 = vld [vmem:[%s201 + $0x8] sm:$0xff]
        %v236 = vld [vmem:[%s201 + $0x10] sm:$0xff]
        %v237 = vld [vmem:[%s201 + $0x18] sm:$0xff]
        %v238 = vld [vmem:[%s201 + $0x20] sm:$0xff]
        %v239 = vld [vmem:[%s201 + $0x28] sm:$0xff]
        %v240 = vld [vmem:[%s201 + $0x30] sm:$0xff]
        %v241 = vld [vmem:[%s201 + $0x38] sm:$0xff]
        %v242 = vld [vmem:[%s201 + $0x40] sm:$0xff]
        %v243 = vld [vmem:[%s201 + $0x48] sm:$0xff]
        %v244 = vld [vmem:[%s201 + $0x50] sm:$0xff]
        %v245 = vld [vmem:[%s201 + $0x58] sm:$0xff]
        %v246 = vld [vmem:[%s201 + $0x60] sm:$0xff]
        %v247 = vld [vmem:[%s201 + $0x68] sm:$0xff]
        %v248 = vld [vmem:[%s201 + $0x70] sm:$0xff]
        %v249 = vld [vmem:[%s201 + $0x78] sm:$0xff]
        %v250 = vld [vmem:[%s201 + $0x80] sm:$0xff]
        %v251 = vld [vmem:[%s201 + $0x88] sm:$0xff]
        %v252 = vld [vmem:[%s201 + $0x90] sm:$0xff]
        %v253 = vld [vmem:[%s201 + $0x98] sm:$0xff]
        %v254 = vld [vmem:[%s201 + $0xa0] sm:$0xff]
        %v255 = vld [vmem:[%s201 + $0xa8] sm:$0xff]
        %v256 = vld [vmem:[%s201 + $0xb0] sm:$0xff]
        %v257 = vld [vmem:[%s201 + $0xb8] sm:$0xff]
        %v258 = vld [vmem:[%s201 + $0xc0] sm:$0xff]
        %v259 = vld [vmem:[%s201 + $0xc8] sm:$0xff]
        %v260 = vld [vmem:[%s201 + $0xd0] sm:$0xff]
        %v261 = vld [vmem:[%s201 + $0xd8] sm:$0xff]
        %v262 = vld [vmem:[%s201 + $0xe0] sm:$0xff]
        %v263 = vld [vmem:[%s201 + $0xe8] sm:$0xff]
        %v264 = vld [vmem:[%s201 + $0xf0] sm:$0xff]
        %v265 = vld [vmem:[%s201 + $0xf8] sm:$0xff]
        %v266 = vld [vmem:[#allocation5] sm:$0x1]
        %v268 = vlaneseq
        %v269 = vshrl.u32 %v268, 7
        %v270 = vsub.s32 0, %v269
        %v271 = vrot.slane %v266, %v270
        %v273 = vmul.f32 %v234, %v271
        %v274 = vmul.f32 %v235, %v271
        %v275 = vmul.f32 %v236, %v271
        %v276 = vmul.f32 %v237, %v271
        %v277 = vmul.f32 %v238, %v271
        %v278 = vmul.f32 %v239, %v271
        %v279 = vmul.f32 %v240, %v271
        %v280 = vmul.f32 %v241, %v271
        %v281 = vmul.f32 %v242, %v271
        %v282 = vmul.f32 %v243, %v271
        %v283 = vmul.f32 %v244, %v271
        %v284 = vmul.f32 %v245, %v271
        %v285 = vmul.f32 %v246, %v271
        %v286 = vmul.f32 %v247, %v271
        %v287 = vmul.f32 %v248, %v271
        %v288 = vmul.f32 %v249, %v271
        %v289 = vmul.f32 %v250, %v271
        %v290 = vmul.f32 %v251, %v271
        %v291 = vmul.f32 %v252, %v271
        %v292 = vmul.f32 %v253, %v271
        %v293 = vmul.f32 %v254, %v271
        %v294 = vmul.f32 %v255, %v271
        %v295 = vmul.f32 %v256, %v271
        %v296 = vmul.f32 %v257, %v271
        %v297 = vmul.f32 %v258, %v271
        %v298 = vmul.f32 %v259, %v271
        %v299 = vmul.f32 %v260, %v271
        %v300 = vmul.f32 %v261, %v271
        %v301 = vmul.f32 %v262, %v271
        %v302 = vmul.f32 %v263, %v271
        %v303 = vmul.f32 %v264, %v271
        %v304 = vmul.f32 %v265, %v271
        %v305 = vld [vmem:[#allocation7] sm:$0x1]
        %v307 = vlaneseq
        %v308 = vshrl.u32 %v307, 7
        %v309 = vsub.s32 0, %v308
        %v310 = vrot.slane %v305, %v309
        %v312 = vadd.f32 %v273, %v310
        %v313 = vadd.f32 %v274, %v310
        %v314 = vadd.f32 %v275, %v310
        %v315 = vadd.f32 %v276, %v310
        %v316 = vadd.f32 %v277, %v310
        %v317 = vadd.f32 %v278, %v310
        %v318 = vadd.f32 %v279, %v310
        %v319 = vadd.f32 %v280, %v310
        %v320 = vadd.f32 %v281, %v310
        %v321 = vadd.f32 %v282, %v310
        %v322 = vadd.f32 %v283, %v310
        %v323 = vadd.f32 %v284, %v310
        %v324 = vadd.f32 %v285, %v310
        %v325 = vadd.f32 %v286, %v310
        %v326 = vadd.f32 %v287, %v310
        %v327 = vadd.f32 %v288, %v310
        %v328 = vadd.f32 %v289, %v310
        %v329 = vadd.f32 %v290, %v310
        %v330 = vadd.f32 %v291, %v310
        %v331 = vadd.f32 %v292, %v310
        %v332 = vadd.f32 %v293, %v310
        %v333 = vadd.f32 %v294, %v310
        %v334 = vadd.f32 %v295, %v310
        %v335 = vadd.f32 %v296, %v310
        %v336 = vadd.f32 %v297, %v310
        %v337 = vadd.f32 %v298, %v310
        %v338 = vadd.f32 %v299, %v310
        %v339 = vadd.f32 %v300, %v310
        %v340 = vadd.f32 %v301, %v310
        %v341 = vadd.f32 %v302, %v310
        %v342 = vadd.f32 %v303, %v310
        %v343 = vadd.f32 %v304, %v310
        %v344 = vmax.f32 %v312, 0.0
        %v345 = vmax.f32 %v313, 0.0
        %v346 = vmax.f32 %v314, 0.0
        %v347 = vmax.f32 %v315, 0.0
        %v348 = vmax.f32 %v316, 0.0
        %v349 = vmax.f32 %v317, 0.0
        %v350 = vmax.f32 %v318, 0.0
        %v351 = vmax.f32 %v319, 0.0
        %v352 = vmax.f32 %v320, 0.0
        %v353 = vmax.f32 %v321, 0.0
        %v354 = vmax.f32 %v322, 0.0
        %v355 = vmax.f32 %v323, 0.0
        %v356 = vmax.f32 %v324, 0.0
        %v357 = vmax.f32 %v325, 0.0
        %v358 = vmax.f32 %v326, 0.0
        %v359 = vmax.f32 %v327, 0.0
        %v360 = vmax.f32 %v328, 0.0
        %v361 = vmax.f32 %v329, 0.0
        %v362 = vmax.f32 %v330, 0.0
        %v363 = vmax.f32 %v331, 0.0
        %v364 = vmax.f32 %v332, 0.0
        %v365 = vmax.f32 %v333, 0.0
        %v366 = vmax.f32 %v334, 0.0
        %v367 = vmax.f32 %v335, 0.0
        %v368 = vmax.f32 %v336, 0.0
        %v369 = vmax.f32 %v337, 0.0
        %v370 = vmax.f32 %v338, 0.0
        %v371 = vmax.f32 %v339, 0.0
        %v372 = vmax.f32 %v340, 0.0
        %v373 = vmax.f32 %v341, 0.0
        %v374 = vmax.f32 %v342, 0.0
        %v375 = vmax.f32 %v343, 0.0
        %376 = vst [vmem:[%s231] sm:$0xff] %v344
        %377 = vst [vmem:[%s231 + $0x8] sm:$0xff] %v345
        %378 = vst [vmem:[%s231 + $0x10] sm:$0xff] %v346
        %379 = vst [vmem:[%s231 + $0x18] sm:$0xff] %v347
        %380 = vst [vmem:[%s231 + $0x20] sm:$0xff] %v348
        %381 = vst [vmem:[%s231 + $0x28] sm:$0xff] %v349
        %382 = vst [vmem:[%s231 + $0x30] sm:$0xff] %v350
        %383 = vst [vmem:[%s231 + $0x38] sm:$0xff] %v351
        %384 = vst [vmem:[%s231 + $0x40] sm:$0xff] %v352
        %385 = vst [vmem:[%s231 + $0x48] sm:$0xff] %v353
        %386 = vst [vmem:[%s231 + $0x50] sm:$0xff] %v354
        %387 = vst [vmem:[%s231 + $0x58] sm:$0xff] %v355
        %388 = vst [vmem:[%s231 + $0x60] sm:$0xff] %v356
        %389 = vst [vmem:[%s231 + $0x68] sm:$0xff] %v357
        %390 = vst [vmem:[%s231 + $0x70] sm:$0xff] %v358
        %391 = vst [vmem:[%s231 + $0x78] sm:$0xff] %v359
        %392 = vst [vmem:[%s231 + $0x80] sm:$0xff] %v360
        %393 = vst [vmem:[%s231 + $0x88] sm:$0xff] %v361
        %394 = vst [vmem:[%s231 + $0x90] sm:$0xff] %v362
        %395 = vst [vmem:[%s231 + $0x98] sm:$0xff] %v363
        %396 = vst [vmem:[%s231 + $0xa0] sm:$0xff] %v364
        %397 = vst [vmem:[%s231 + $0xa8] sm:$0xff] %v365
        %398 = vst [vmem:[%s231 + $0xb0] sm:$0xff] %v366
        %399 = vst [vmem:[%s231 + $0xb8] sm:$0xff] %v367
        %400 = vst [vmem:[%s231 + $0xc0] sm:$0xff] %v368
        %401 = vst [vmem:[%s231 + $0xc8] sm:$0xff] %v369
        %402 = vst [vmem:[%s231 + $0xd0] sm:$0xff] %v370
        %403 = vst [vmem:[%s231 + $0xd8] sm:$0xff] %v371
        %404 = vst [vmem:[%s231 + $0xe0] sm:$0xff] %v372
        %405 = vst [vmem:[%s231 + $0xe8] sm:$0xff] %v373
        %406 = vst [vmem:[%s231 + $0xf0] sm:$0xff] %v374
        %407 = vst [vmem:[%s231 + $0xf8] sm:$0xff] %v375
        %s408 = sand.u32 %s113, 1
        %s409 = scalar_lea.sflag [#allocation4], %s408
        %s410 = sand.u32 %s113, 1
        %s411 = smul.addr %s410, 256
        %s412 = scalar_lea.vmem [#allocation8], %s411
        // Predicated region
        $region45: #{basic_conv2d.3} parent=31 // pred_check
          %p413 = pneg %p123
        $region46: #{basic_conv2d.3} parent=31 // pred_check_branch
          %415 = sbr.rel (%p413) target = $region48
        $region47: #{basic_conv2d.3} parent=31 // pred_region
          %s416 = smul.u32 32, %s26
          %s418 = ssub.s32 4096, 4096
          %419 = vsyncadd %s409, %s418
          %s420 = smul.addr %s25, 32
          %s421 = sadd.s32 %s416, %s420
          %s422 = smul.addr %s421, 128
          %s423 = scalar_lea.hbm %s3, %s422
          %s424 = sshll.u32 %s412, 4
          %s425 = int_to_ptr.vmem [resolvable:$true] %s424
          %430 = dma.vmem_to_hbm [thread:$0]  %s425, 4096, %s423, %s409, 128, 128, 8
        $region48: #{basic_conv2d.3} parent=31 // pred_fallthru
          _
      $region32: #{basic_conv2d.3} parent=5 // pred_fallthru
        _
      %p431 = scmp.le.s32.totalorder 2, %s16
      // Predicated region
      $region49: #{basic_conv2d.3} parent=5 // pred_check
        %p432 = pneg %p431
      $region50: #{basic_conv2d.3} parent=5 // pred_check_branch
        %434 = sbr.rel (%p432) target = $region52
      $region51: #{basic_conv2d.3} parent=5 // pred_region
        %s435 = ssub.s32 %s16, 2
        // Predicated region
        $region53: #{basic_conv2d.3} parent=51 // pred_check
          %p436 = pneg %p129
        $region54: #{basic_conv2d.3} parent=51 // pred_check_branch
          %438 = sbr.rel (%p436) target = $region56
        $region55: #{basic_conv2d.3} parent=51 // pred_region
          %s439 = sand.u32 %s114, 1
          %s440 = scalar_lea.sflag [#allocation4], %s439
          %s441 = sand.u32 %s114, 1
          %s442 = smul.addr %s441, 256
          %s443 = scalar_lea.vmem [#allocation8], %s442
          %444 = dma.done %s440, 4096
        $region56: #{basic_conv2d.3} parent=51 // pred_fallthru
          _
      $region52: #{basic_conv2d.3} parent=5 // pred_fallthru
        _
    $region6: #{basic_conv2d.3} parent=1 // loop_footer
      %s20 = sadd.s32 1, %s16
    $region7: #{basic_conv2d.3} parent=1 // loop_footer_branch
      %15 = sbr.rel target = $region3
    $region8: #{basic_conv2d.3} parent=1 // loop_exit
      _
    %445 = vsyncpa [#allocation3], 1
    %s446 = scalar_lea.sflag [#allocation3], 1
    %447 = vsyncpa %s446, 1
    %448 = vsyncpa [#allocation6], 1
    %449 = vsyncpa [#allocation4], 1
    %s450 = scalar_lea.sflag [#allocation4], 1
    %451 = vsyncpa %s450, 1

// kernel: basic_conv2d.2
$region0: #{basic_conv2d.2}
  #allocation0 [shape = 'u32[]', space=smem, size = 0x4, offset = 0x4, fixed_abs, tag = 'smem constant byte address 0x4 - core index']
  #allocation1 [shape = 'u32[144,128]{1,0:T(1,128)}', space=vmem, size = 0x12000, scoped, tag = 'internal scratch']
  %s0 = inlined_call_operand.hbm [shape: bf16[2,18,18,8], index: 0, kind: input, shape index: {}]
  %s1 = inlined_call_operand.hbm [shape: bf16[9,8,128], index: 1, kind: input, shape index: {}]
  %s2 = inlined_call_operand.hbm [shape: f32[2,256,128], index: 2, kind: output, shape index: {0}]
  %s3 = inlined_call_operand.hbm [shape: f32[2,1,128], index: 3, kind: output, shape index: {1}]
  %s4 = inlined_call_operand.hbm [shape: f32[2,1,128], index: 4, kind: output, shape index: {2}]
  %5 = xla_tuple %s2, %s3, %s4
  %s6 = sld [smem:[#allocation0]]
  $region65: #{basic_conv2d.2} parent=0
    _
  %s8 = ssub.s32 1, %s6
  %s9 = scalar_select 0, %s8, %s6
  $region1: #{basic_conv2d.2} parent=0
    #allocation2 [shape = 'u8[221184]{0}', space=vmem, size = 0x36000, scoped, tag = 'input window, operand 0']
    #allocation3 [shape = 's32[2]{0}', space=sflag, size = 0x8, scoped, tag = 'scoped memory for basic_conv2d.2']
    #allocation4 [shape = 's32[2]{0}', space=sflag, size = 0x8, scoped, tag = 'scoped memory for basic_conv2d.2']
    #allocation5 [shape = 'u8[18432]{0}', space=vmem, size = 0x4800, scoped, tag = 'input window, operand 1, single buffered']
    #allocation6 [shape = 's32[1]{0}', space=sflag, size = 0x4, scoped, tag = 'scoped memory for basic_conv2d.2']
    #allocation7 [shape = 'u8[262144]{0}', space=vmem, size = 0x40000, scoped, tag = 'output window, operand 0']
    #allocation8 [shape = 'u8[1024]{0}', space=vmem, size = 0x400, scoped, tag = 'output window, operand 1']
    #allocation9 [shape = 's32[2]{0}', space=sflag, size = 0x8, scoped, tag = 'scoped memory for basic_conv2d.2']
    #allocation10 [shape = 'u8[1024]{0}', space=vmem, size = 0x400, scoped, tag = 'output window, operand 2']
    %10 = vsyncpa [#allocation3], 0
    %s11 = scalar_lea.sflag [#allocation3], 1
    %12 = vsyncpa %s11, 0
    %13 = vsyncpa [#allocation6], 0
    %14 = vsyncpa [#allocation4], 0
    %s15 = scalar_lea.sflag [#allocation4], 1
    %16 = vsyncpa %s15, 0
    %17 = vsyncpa [#allocation9], 0
    %s18 = scalar_lea.sflag [#allocation9], 1
    %19 = vsyncpa %s18, 0
    loop: start=0, step=1, limit=4
    $region2: #{basic_conv2d.2} parent=1 // loop_pre_header
      _
    $region3: #{basic_conv2d.2} parent=1 // loop_header
      %s21 = sphi 0, %s25
      %p22 = scmp.ge.s32.totalorder %s21, 4
      %s31 = sphi 0, %s33
      %s34 = sphi 0, %s31
      %s35 = sphi 0, %s34
      %s51 = sphi 0, %s35
      %s55 = sphi 0, %s55
      %s57 = sphi 0, %s55
      %s58 = sphi 0, %s57
      %s72 = sphi 0, %s58
      %s78 = sphi 0, %s80
      %s81 = sphi 0, %s78
      %s82 = sphi 0, %s81
      %s98 = sphi 0, %s82
      %s104 = sphi 0, %s106
      %s107 = sphi 0, %s104
      %s108 = sphi 0, %s107
      %s124 = sphi 0, %s108
      %s130 = sphi 0, %s132
      %s133 = sphi 0, %s130
      %s134 = sphi 0, %s133
      %s150 = sphi 0, %s134
    $region4: #{basic_conv2d.2} parent=1 // loop_header_branch
      %24 = sbr.rel (%p22) target = $region8
    $region5: #{basic_conv2d.2} parent=1 // loop_body
      %s26 = ssub.s32 %s21, 1
      %s27 = ssub.s32 %s21, 2
      %s28 = sadd.s32 %s21, 1
      %s29 = ssub.s32 %s21, %s28
      %p30 = scmp.eq.s32.totalorder %s29, 0
      %s32 = sadd.s32 %s31, 1
      %s33 = scalar_select %p30, %s31, %s32
      %p36 = pneg %p30
      %p37 = scmp.eq.s32.totalorder %s21, 1
      %p38 = por %p36, %p37
      %p39 = scmp.ne.s32.totalorder %s31, %s34
      %p40 = scmp.eq.s32.totalorder %s21, 0
      %p41 = por %p39, %p40
      %p42 = scmp.ne.s32.totalorder %s31, %s34
      %p43 = scmp.eq.s32.totalorder %s26, 1
      %p44 = por %p42, %p43
      %p45 = scmp.ne.s32.totalorder %s34, %s35
      %p46 = scmp.eq.s32.totalorder %s26, 0
      %p47 = por %p45, %p46
      %p48 = scmp.ne.s32.totalorder %s34, %s35
      %p49 = scmp.eq.s32.totalorder %s27, 1
      %p50 = por %p48, %p49
      %p52 = scmp.ne.s32.totalorder %s35, %s51
      %p53 = scmp.eq.s32.totalorder %s27, 0
      %p54 = por %p52, %p53
      %s56 = sadd.s32 %s55, 1
      %p59 = scmp.eq.s32.totalorder %s21, 1
      %p60 = scmp.ne.s32.totalorder %s55, %s57
      %p61 = scmp.eq.s32.totalorder %s21, 0
      %p62 = por %p60, %p61
      %p63 = scmp.ne.s32.totalorder %s55, %s57
      %p64 = scmp.eq.s32.totalorder %s26, 1
      %p65 = por %p63, %p64
      %p66 = scmp.ne.s32.totalorder %s57, %s58
      %p67 = scmp.eq.s32.totalorder %s26, 0
      %p68 = por %p66, %p67
      %p69 = scmp.ne.s32.totalorder %s57, %s58
      %p70 = scmp.eq.s32.totalorder %s27, 1
      %p71 = por %p69, %p70
      %p73 = scmp.ne.s32.totalorder %s58, %s72
      %p74 = scmp.eq.s32.totalorder %s27, 0
      %p75 = por %p73, %p74
      %s76 = ssub.s32 %s21, %s28
      %p77 = scmp.eq.s32.totalorder %s76, 0
      %s79 = sadd.s32 %s78, 1
      %s80 = scalar_select %p77, %s78, %s79
      %p83 = pneg %p77
      %p84 = scmp.eq.s32.totalorder %s21, 1
      %p85 = por %p83, %p84
      %p86 = scmp.ne.s32.totalorder %s78, %s81
      %p87 = scmp.eq.s32.totalorder %s21, 0
      %p88 = por %p86, %p87
      %p89 = scmp.ne.s32.totalorder %s78, %s81
      %p90 = scmp.eq.s32.totalorder %s26, 1
      %p91 = por %p89, %p90
      %p92 = scmp.ne.s32.totalorder %s81, %s82
      %p93 = scmp.eq.s32.totalorder %s26, 0
      %p94 = por %p92, %p93
      %p95 = scmp.ne.s32.totalorder %s81, %s82
      %p96 = scmp.eq.s32.totalorder %s27, 1
      %p97 = por %p95, %p96
      %p99 = scmp.ne.s32.totalorder %s82, %s98
      %p100 = scmp.eq.s32.totalorder %s27, 0
      %p101 = por %p99, %p100
      %s102 = ssub.s32 %s21, %s28
      %p103 = scmp.eq.s32.totalorder %s102, 0
      %s105 = sadd.s32 %s104, 1
      %s106 = scalar_select %p103, %s104, %s105
      %p109 = pneg %p103
      %p110 = scmp.eq.s32.totalorder %s21, 1
      %p111 = por %p109, %p110
      %p112 = scmp.ne.s32.totalorder %s104, %s107
      %p113 = scmp.eq.s32.totalorder %s21, 0
      %p114 = por %p112, %p113
      %p115 = scmp.ne.s32.totalorder %s104, %s107
      %p116 = scmp.eq.s32.totalorder %s26, 1
      %p117 = por %p115, %p116
      %p118 = scmp.ne.s32.totalorder %s107, %s108
      %p119 = scmp.eq.s32.totalorder %s26, 0
      %p120 = por %p118, %p119
      %p121 = scmp.ne.s32.totalorder %s107, %s108
      %p122 = scmp.eq.s32.totalorder %s27, 1
      %p123 = por %p121, %p122
      %p125 = scmp.ne.s32.totalorder %s108, %s124
      %p126 = scmp.eq.s32.totalorder %s27, 0
      %p127 = por %p125, %p126
      %s128 = ssub.s32 %s21, %s28
      %p129 = scmp.eq.s32.totalorder %s128, 0
      %s131 = sadd.s32 %s130, 1
      %s132 = scalar_select %p129, %s130, %s131
      %p135 = pneg %p129
      %p136 = scmp.eq.s32.totalorder %s21, 1
      %p137 = por %p135, %p136
      %p138 = scmp.ne.s32.totalorder %s130, %s133
      %p139 = scmp.eq.s32.totalorder %s21, 0
      %p140 = por %p138, %p139
      %p141 = scmp.ne.s32.totalorder %s130, %s133
      %p142 = scmp.eq.s32.totalorder %s26, 1
      %p143 = por %p141, %p142
      %p144 = scmp.ne.s32.totalorder %s133, %s134
      %p145 = scmp.eq.s32.totalorder %s26, 0
      %p146 = por %p144, %p145
      %p147 = scmp.ne.s32.totalorder %s133, %s134
      %p148 = scmp.eq.s32.totalorder %s27, 1
      %p149 = por %p147, %p148
      %p151 = scmp.ne.s32.totalorder %s134, %s150
      %p152 = scmp.eq.s32.totalorder %s27, 0
      %p153 = por %p151, %p152
      %p154 = scmp.le.s32.totalorder 1, %s21
      %p155 = scmp.lt.s32.totalorder %s21, 3
      %p156 = pnand %p154, %p155
      %p157 = pneg %p156
      // Predicated region
      $region9: #{basic_conv2d.2} parent=5 // pred_check
        _
      $region10: #{basic_conv2d.2} parent=5 // pred_check_branch
        %159 = sbr.rel (%p156) target = $region12
      $region11: #{basic_conv2d.2} parent=5 // pred_region
        %s160 = ssub.s32 %s21, 1
        // Predicated region
        $region13: #{basic_conv2d.2} parent=11 // pred_check
          %p161 = pneg %p68
        $region14: #{basic_conv2d.2} parent=11 // pred_check_branch
          %163 = sbr.rel (%p161) target = $region16
        $region15: #{basic_conv2d.2} parent=11 // pred_region
          %s165 = ssub.s32 576, 576
          %166 = vsyncadd [#allocation6], %s165
          %s167 = sshll.u32 [#allocation5], 4
          %s168 = int_to_ptr.vmem [resolvable:$true] %s167
          %173 = dma.hbm_to_vmem [thread:$0]  %s1, 576, %s168, [#allocation6], 64, 64, 4
        $region16: #{basic_conv2d.2} parent=11 // pred_fallthru
          _
      $region12: #{basic_conv2d.2} parent=5 // pred_fallthru
        _
      %p174 = scmp.lt.s32.totalorder %s21, 2
      // Predicated region
      $region17: #{basic_conv2d.2} parent=5 // pred_check
        %p175 = pneg %p174
      $region18: #{basic_conv2d.2} parent=5 // pred_check_branch
        %177 = sbr.rel (%p175) target = $region20
      $region19: #{basic_conv2d.2} parent=5 // pred_region
        // Predicated region
        $region21: #{basic_conv2d.2} parent=19 // pred_check
          %p178 = pneg %p41
        $region22: #{basic_conv2d.2} parent=19 // pred_check_branch
          %180 = sbr.rel (%p178) target = $region24
        $region23: #{basic_conv2d.2} parent=19 // pred_region
          %s181 = sand.u32 %s31, 1
          %s182 = scalar_lea.sflag [#allocation3], %s181
          %s183 = sand.u32 %s31, 1
          %s184 = smul.addr %s183, 216
          %s185 = scalar_lea.vmem [#allocation2], %s184
          %s187 = ssub.s32 3456, 3456
          %188 = vsyncadd %s182, %s187
          %s189 = smul.addr %s21, 54
          %s190 = smul.addr %s189, 64
          %s191 = scalar_lea.hbm %s0, %s190
          %s192 = sshll.u32 %s185, 4
          %s193 = int_to_ptr.vmem [resolvable:$true] %s192
          %198 = dma.hbm_to_vmem [thread:$0]  %s191, 3456, %s193, %s182, 64, 64, 4
        $region24: #{basic_conv2d.2} parent=19 // pred_fallthru
          _
      $region20: #{basic_conv2d.2} parent=5 // pred_fallthru
        _
      %p199 = scmp.le.s32.totalorder 1, %s21
      %p200 = scmp.lt.s32.totalorder %s21, 3
      %p201 = pnand %p199, %p200
      %p202 = pneg %p201
      // Predicated region
      $region25: #{basic_conv2d.2} parent=5 // pred_check
        _
      $region26: #{basic_conv2d.2} parent=5 // pred_check_branch
        %204 = sbr.rel (%p201) target = $region28
      $region27: #{basic_conv2d.2} parent=5 // pred_region
        %s205 = ssub.s32 %s21, 1
        %s206 = sand.u32 %s34, 1
        %s207 = scalar_lea.sflag [#allocation3], %s206
        %s208 = sand.u32 %s34, 1
        %s209 = smul.addr %s208, 216
        %s210 = scalar_lea.vmem [#allocation2], %s209
        // Predicated region
        $region29: #{basic_conv2d.2} parent=27 // pred_check
          %p211 = pneg %p47
        $region30: #{basic_conv2d.2} parent=27 // pred_check_branch
          %213 = sbr.rel (%p211) target = $region32
        $region31: #{basic_conv2d.2} parent=27 // pred_region
          %214 = dma.done %s207, 3456
        $region32: #{basic_conv2d.2} parent=27 // pred_fallthru
          _
        // Predicated region
        $region33: #{basic_conv2d.2} parent=27 // pred_check
          %p215 = pneg %p68
        $region34: #{basic_conv2d.2} parent=27 // pred_check_branch
          %217 = sbr.rel (%p215) target = $region36
        $region35: #{basic_conv2d.2} parent=27 // pred_region
          %218 = dma.done [#allocation6], 576
        $region36: #{basic_conv2d.2} parent=27 // pred_fallthru
          _
        %s219 = sand.u32 %s34, 1
        %s220 = scalar_lea.sflag [#allocation3], %s219
        %s221 = sand.u32 %s34, 1
        %s222 = smul.addr %s221, 216
        %s223 = scalar_lea.vmem [#allocation2], %s222
        %p224 = pneg %p47
        %p225 = pneg %p44
        %p226 = pneg %p68
        %p227 = pneg %p65
        %p228 = pneg %p94
        %p229 = pneg %p91
        %s230 = sand.u32 %s81, 1
        %s231 = scalar_lea.sflag [#allocation4], %s230
        %s232 = sand.u32 %s81, 1
        %s233 = smul.addr %s232, 256
        %s234 = scalar_lea.vmem [#allocation7], %s233
        %p235 = pneg %p120
        %p236 = pneg %p117
        %s237 = sand.u32 %s26, 1
        %s238 = scalar_lea.sflag [#allocation9], %s237
        %s239 = sand.u32 %s107, 1
        %s240 = scalar_lea.vmem [#allocation8], %s239
        %p241 = pneg %p146
        %p242 = pneg %p143
        %s243 = sand.u32 %s26, 1
        %s244 = scalar_lea.sflag [#allocation9], %s243
        %s245 = sand.u32 %s133, 1
        %s246 = scalar_lea.vmem [#allocation10], %s245
        %v248 = vld [vmem:[%s210] sm:$0xf]
        %v249 = vld [vmem:[%s210 + $0x4] sm:$0xf]
        %v250 = vld [vmem:[%s210 + $0x8] sm:$0x1]
        %v251 = vld [vmem:[%s210 + $0xc] sm:$0xf]
        %v252 = vld [vmem:[%s210 + $0x10] sm:$0xf]
        %v253 = vld [vmem:[%s210 + $0x14] sm:$0x1]
        %v254 = vld [vmem:[%s210 + $0x18] sm:$0xf]
        %v255 = vld [vmem:[%s210 + $0x1c] sm:$0xf]
        %v256 = vld [vmem:[%s210 + $0x20] sm:$0x1]
        %v257 = vld [vmem:[%s210 + $0x24] sm:$0xf]
        %v258 = vld [vmem:[%s210 + $0x28] sm:$0xf]
        %v259 = vld [vmem:[%s210 + $0x2c] sm:$0x1]
        %v260 = vld [vmem:[%s210 + $0x30] sm:$0xf]
        %v261 = vld [vmem:[%s210 + $0x34] sm:$0xf]
        %v262 = vld [vmem:[%s210 + $0x38] sm:$0x1]
        %v263 = vld [vmem:[%s210 + $0x3c] sm:$0xf]
        %v264 = vld [vmem:[%s210 + $0x40] sm:$0xf]
        %v265 = vld [vmem:[%s210 + $0x44] sm:$0x1]
        %v266 = vld [vmem:[%s210 + $0x48] sm:$0xf]
        %v267 = vld [vmem:[%s210 + $0x4c] sm:$0xf]
        %v268 = vld [vmem:[%s210 + $0x50] sm:$0x1]
        %v269 = vld [vmem:[%s210 + $0x54] sm:$0xf]
        %v270 = vld [vmem:[%s210 + $0x58] sm:$0xf]
        %v271 = vld [vmem:[%s210 + $0x5c] sm:$0x1]
        %v272 = vld [vmem:[%s210 + $0x60] sm:$0xf]
        %v273 = vld [vmem:[%s210 + $0x64] sm:$0xf]
        %v274 = vld [vmem:[%s210 + $0x68] sm:$0x1]
        %v275 = vld [vmem:[%s210 + $0x6c] sm:$0xf]
        %v276 = vld [vmem:[%s210 + $0x70] sm:$0xf]
        %v277 = vld [vmem:[%s210 + $0x74] sm:$0x1]
        %v278 = vld [vmem:[%s210 + $0x78] sm:$0xf]
        %v279 = vld [vmem:[%s210 + $0x7c] sm:$0xf]
        %v280 = vld [vmem:[%s210 + $0x80] sm:$0x1]
        %v281 = vld [vmem:[%s210 + $0x84] sm:$0xf]
        %v282 = vld [vmem:[%s210 + $0x88] sm:$0xf]
        %v283 = vld [vmem:[%s210 + $0x8c] sm:$0x1]
        %v284 = vld [vmem:[%s210 + $0x90] sm:$0xf]
        %v285 = vld [vmem:[%s210 + $0x94] sm:$0xf]
        %v286 = vld [vmem:[%s210 + $0x98] sm:$0x1]
        %v287 = vld [vmem:[%s210 + $0x9c] sm:$0xf]
        %v288 = vld [vmem:[%s210 + $0xa0] sm:$0xf]
        %v289 = vld [vmem:[%s210 + $0xa4] sm:$0x1]
        %v290 = vld [vmem:[%s210 + $0xa8] sm:$0xf]
        %v291 = vld [vmem:[%s210 + $0xac] sm:$0xf]
        %v292 = vld [vmem:[%s210 + $0xb0] sm:$0x1]
        %v293 = vld [vmem:[%s210 + $0xb4] sm:$0xf]
        %v294 = vld [vmem:[%s210 + $0xb8] sm:$0xf]
        %v295 = vld [vmem:[%s210 + $0xbc] sm:$0x1]
        %v296 = vld [vmem:[%s210 + $0xc0] sm:$0xf]
        %v297 = vld [vmem:[%s210 + $0xc4] sm:$0xf]
        %v298 = vld [vmem:[%s210 + $0xc8] sm:$0x1]
        %v299 = vld [vmem:[%s210 + $0xcc] sm:$0xf]
        %v300 = vld [vmem:[%s210 + $0xd0] sm:$0xf]
        %v301 = vld [vmem:[%s210 + $0xd4] sm:$0x1]
        %v302 = vld [vmem:[#allocation5] sm:$0xf]
        %vm303 = vsmask.f32 3328
        %vm304 = vsmask.f32 7440
        %vm305 = vmor %vm303, %vm304
        %v307 = vshrl.u32 %v248, 16
        %v309 = vrot.slane %v307, 4
        %v310 = vshll.u32 %v248, 16
        %v312 = vrot.slane %v310, 5
        %v313 = vor.u32 %v309, %v312
        %v314 = vrot.slane %v313, 4
        %v316 = vshll.u32 %v249, 16
        %v318 = vrot.slane %v316, 5
        %v319 = vsel %vm305, %v314, %v318
        %v320 = vshrl.u32 %v249, 16
        %v322 = vrot.slane %v320, 4
        %v323 = vor.u32 %v322, %v318
        %v324 = vrot.slane %v323, 4
        %v326 = vshll.u32 %v250, 16
        %v328 = vrot.slane %v326, 5
        %v329 = vsel %vm305, %v324, %v328
        %v331 = vshrl.u32 %v251, 16
        %v333 = vrot.slane %v331, 4
        %v334 = vshll.u32 %v251, 16
        %v336 = vrot.slane %v334, 5
        %v337 = vor.u32 %v333, %v336
        %v338 = vrot.slane %v337, 4
        %v340 = vshll.u32 %v252, 16
        %v342 = vrot.slane %v340, 5
        %v343 = vsel %vm305, %v338, %v342
        %v344 = vshrl.u32 %v252, 16
        %v346 = vrot.slane %v344, 4
        %v347 = vor.u32 %v346, %v342
        %v348 = vrot.slane %v347, 4
        %v350 = vshll.u32 %v253, 16
        %v352 = vrot.slane %v350, 5
        %v353 = vsel %vm305, %v348, %v352
        %v355 = vshrl.u32 %v254, 16
        %v357 = vrot.slane %v355, 4
        %v358 = vshll.u32 %v254, 16
        %v360 = vrot.slane %v358, 5
        %v361 = vor.u32 %v357, %v360
        %v362 = vrot.slane %v361, 4
        %v364 = vshll.u32 %v255, 16
        %v366 = vrot.slane %v364, 5
        %v367 = vsel %vm305, %v362, %v366
        %v368 = vshrl.u32 %v255, 16
        %v370 = vrot.slane %v368, 4
        %v371 = vor.u32 %v370, %v366
        %v372 = vrot.slane %v371, 4
        %v374 = vshll.u32 %v256, 16
        %v376 = vrot.slane %v374, 5
        %v377 = vsel %vm305, %v372, %v376
        %v379 = vshrl.u32 %v257, 16
        %v381 = vrot.slane %v379, 4
        %v382 = vshll.u32 %v257, 16
        %v384 = vrot.slane %v382, 5
        %v385 = vor.u32 %v381, %v384
        %v386 = vrot.slane %v385, 4
        %v388 = vshll.u32 %v258, 16
        %v390 = vrot.slane %v388, 5
        %v391 = vsel %vm305, %v386, %v390
        %v392 = vshrl.u32 %v258, 16
        %v394 = vrot.slane %v392, 4
        %v395 = vor.u32 %v394, %v390
        %v396 = vrot.slane %v395, 4
        %v398 = vshll.u32 %v259, 16
        %v400 = vrot.slane %v398, 5
        %v401 = vsel %vm305, %v396, %v400
        %v403 = vshrl.u32 %v260, 16
        %v405 = vrot.slane %v403, 4
        %v406 = vshll.u32 %v260, 16
        %v408 = vrot.slane %v406, 5
        %v409 = vor.u32 %v405, %v408
        %v410 = vrot.slane %v409, 4
        %v412 = vshll.u32 %v261, 16
        %v414 = vrot.slane %v412, 5
        %v415 = vsel %vm305, %v410, %v414
        %v416 = vshrl.u32 %v261, 16
        %v418 = vrot.slane %v416, 4
        %v419 = vor.u32 %v418, %v414
        %v420 = vrot.slane %v419, 4
        %v422 = vshll.u32 %v262, 16
        %v424 = vrot.slane %v422, 5
        %v425 = vsel %vm305, %v420, %v424
        %v427 = vshrl.u32 %v263, 16
        %v429 = vrot.slane %v427, 4
        %v430 = vshll.u32 %v263, 16
        %v432 = vrot.slane %v430, 5
        %v433 = vor.u32 %v429, %v432
        %v434 = vrot.slane %v433, 4
        %v436 = vshll.u32 %v264, 16
        %v438 = vrot.slane %v436, 5
        %v439 = vsel %vm305, %v434, %v438
        %v440 = vshrl.u32 %v264, 16
        %v442 = vrot.slane %v440, 4
        %v443 = vor.u32 %v442, %v438
        %v444 = vrot.slane %v443, 4
        %v446 = vshll.u32 %v265, 16
        %v448 = vrot.slane %v446, 5
        %v449 = vsel %vm305, %v444, %v448
        %v451 = vshrl.u32 %v266, 16
        %v453 = vrot.slane %v451, 4
        %v454 = vshll.u32 %v266, 16
        %v456 = vrot.slane %v454, 5
        %v457 = vor.u32 %v453, %v456
        %v458 = vrot.slane %v457, 4
        %v460 = vshll.u32 %v267, 16
        %v462 = vrot.slane %v460, 5
        %v463 = vsel %vm305, %v458, %v462
        %v464 = vshrl.u32 %v267, 16
        %v466 = vrot.slane %v464, 4
        %v467 = vor.u32 %v466, %v462
        %v468 = vrot.slane %v467, 4
        %v470 = vshll.u32 %v268, 16
        %v472 = vrot.slane %v470, 5
        %v473 = vsel %vm305, %v468, %v472
        %v475 = vshrl.u32 %v269, 16
        %v477 = vrot.slane %v475, 4
        %v478 = vshll.u32 %v269, 16
        %v480 = vrot.slane %v478, 5
        %v481 = vor.u32 %v477, %v480
        %v482 = vrot.slane %v481, 4
        %v484 = vshll.u32 %v270, 16
        %v486 = vrot.slane %v484, 5
        %v487 = vsel %vm305, %v482, %v486
        %v488 = vshrl.u32 %v270, 16
        %v490 = vrot.slane %v488, 4
        %v491 = vor.u32 %v490, %v486
        %v492 = vrot.slane %v491, 4
        %v494 = vshll.u32 %v271, 16
        %v496 = vrot.slane %v494, 5
        %v497 = vsel %vm305, %v492, %v496
        %v499 = vshrl.u32 %v272, 16
        %v501 = vrot.slane %v499, 4
        %v502 = vshll.u32 %v272, 16
        %v504 = vrot.slane %v502, 5
        %v505 = vor.u32 %v501, %v504
        %v506 = vrot.slane %v505, 4
        %v508 = vshll.u32 %v273, 16
        %v510 = vrot.slane %v508, 5
        %v511 = vsel %vm305, %v506, %v510
        %v512 = vshrl.u32 %v273, 16
        %v514 = vrot.slane %v512, 4
        %v515 = vor.u32 %v514, %v510
        %v516 = vrot.slane %v515, 4
        %v518 = vshll.u32 %v274, 16
        %v520 = vrot.slane %v518, 5
        %v521 = vsel %vm305, %v516, %v520
        %v523 = vshrl.u32 %v275, 16
        %v525 = vrot.slane %v523, 4
        %v526 = vshll.u32 %v275, 16
        %v528 = vrot.slane %v526, 5
        %v529 = vor.u32 %v525, %v528
        %v530 = vrot.slane %v529, 4
        %v532 = vshll.u32 %v276, 16
        %v534 = vrot.slane %v532, 5
        %v535 = vsel %vm305, %v530, %v534
        %v536 = vshrl.u32 %v276, 16
        %v538 = vrot.slane %v536, 4
        %v539 = vor.u32 %v538, %v534
        %v540 = vrot.slane %v539, 4
        %v542 = vshll.u32 %v277, 16
        %v544 = vrot.slane %v542, 5
        %v545 = vsel %vm305, %v540, %v544
        %v547 = vshrl.u32 %v278, 16
        %v549 = vrot.slane %v547, 4
        %v550 = vshll.u32 %v278, 16
        %v552 = vrot.slane %v550, 5
        %v553 = vor.u32 %v549, %v552
        %v554 = vrot.slane %v553, 4
        %v556 = vshll.u32 %v279, 16
        %v558 = vrot.slane %v556, 5
        %v559 = vsel %vm305, %v554, %v558
        %v560 = vshrl.u32 %v279, 16
        %v562 = vrot.slane %v560, 4
        %v563 = vor.u32 %v562, %v558
        %v564 = vrot.slane %v563, 4
        %v566 = vshll.u32 %v280, 16
        %v568 = vrot.slane %v566, 5
        %v569 = vsel %vm305, %v564, %v568
        %v571 = vshrl.u32 %v281, 16
        %v573 = vrot.slane %v571, 4
        %v574 = vshll.u32 %v281, 16
        %v576 = vrot.slane %v574, 5
        %v577 = vor.u32 %v573, %v576
        %v578 = vrot.slane %v577, 4
        %v580 = vshll.u32 %v282, 16
        %v582 = vrot.slane %v580, 5
        %v583 = vsel %vm305, %v578, %v582
        %v584 = vshrl.u32 %v282, 16
        %v586 = vrot.slane %v584, 4
        %v587 = vor.u32 %v586, %v582
        %v588 = vrot.slane %v587, 4
        %v590 = vshll.u32 %v283, 16
        %v592 = vrot.slane %v590, 5
        %v593 = vsel %vm305, %v588, %v592
        %v595 = vshrl.u32 %v284, 16
        %v597 = vrot.slane %v595, 4
        %v598 = vshll.u32 %v284, 16
        %v600 = vrot.slane %v598, 5
        %v601 = vor.u32 %v597, %v600
        %v602 = vrot.slane %v601, 4
        %v604 = vshll.u32 %v285, 16
        %v606 = vrot.slane %v604, 5
        %v607 = vsel %vm305, %v602, %v606
        %v608 = vshrl.u32 %v285, 16
        %v610 = vrot.slane %v608, 4
        %v611 = vor.u32 %v610, %v606
        %v612 = vrot.slane %v611, 4
        %v614 = vshll.u32 %v286, 16
        %v616 = vrot.slane %v614, 5
        %v617 = vsel %vm305, %v612, %v616
        %v619 = vshrl.u32 %v287, 16
        %v621 = vrot.slane %v619, 4
        %v622 = vshll.u32 %v287, 16
        %v624 = vrot.slane %v622, 5
        %v625 = vor.u32 %v621, %v624
        %v626 = vrot.slane %v625, 4
        %v628 = vshll.u32 %v288, 16
        %v630 = vrot.slane %v628, 5
        %v631 = vsel %vm305, %v626, %v630
        %v632 = vshrl.u32 %v288, 16
        %v634 = vrot.slane %v632, 4
        %v635 = vor.u32 %v634, %v630
        %v636 = vrot.slane %v635, 4
        %v638 = vshll.u32 %v289, 16
        %v640 = vrot.slane %v638, 5
        %v641 = vsel %vm305, %v636, %v640
        %v643 = vshrl.u32 %v290, 16
        %v645 = vrot.slane %v643, 4
        %v646 = vshll.u32 %v290, 16
        %v648 = vrot.slane %v646, 5
        %v649 = vor.u32 %v645, %v648
        %v650 = vrot.slane %v649, 4
        %v652 = vshll.u32 %v291, 16
        %v654 = vrot.slane %v652, 5
        %v655 = vsel %vm305, %v650, %v654
        %v656 = vshrl.u32 %v291, 16
        %v658 = vrot.slane %v656, 4
        %v659 = vor.u32 %v658, %v654
        %v660 = vrot.slane %v659, 4
        %v662 = vshll.u32 %v292, 16
        %v664 = vrot.slane %v662, 5
        %v665 = vsel %vm305, %v660, %v664
        %v667 = vshrl.u32 %v293, 16
        %v669 = vrot.slane %v667, 4
        %v670 = vshll.u32 %v293, 16
        %v672 = vrot.slane %v670, 5
        %v673 = vor.u32 %v669, %v672
        %v674 = vrot.slane %v673, 4
        %v676 = vshll.u32 %v294, 16
        %v678 = vrot.slane %v676, 5
        %v679 = vsel %vm305, %v674, %v678
        %v680 = vshrl.u32 %v294, 16
        %v682 = vrot.slane %v680, 4
        %v683 = vor.u32 %v682, %v678
        %v684 = vrot.slane %v683, 4
        %v686 = vshll.u32 %v295, 16
        %v688 = vrot.slane %v686, 5
        %v689 = vsel %vm305, %v684, %v688
        %s690 = scalar_lea.vmem [#allocation5], 4
        %v691 = vld [vmem:[%s690] sm:$0xf]
        %v692 = vunpack.c.l.b16 %v319
        %v693 = vunpack.c.l.b16 %v329
        %v694 = vunpack.c.l.b16 %v343
        %v695 = vunpack.c.l.b16 %v353
        %v696 = vunpack.c.l.b16 %v367
        %v697 = vunpack.c.l.b16 %v377
        %v698 = vunpack.c.l.b16 %v391
        %v699 = vunpack.c.l.b16 %v401
        %v700 = vunpack.c.l.b16 %v415
        %v701 = vunpack.c.l.b16 %v425
        %v702 = vunpack.c.l.b16 %v439
        %v703 = vunpack.c.l.b16 %v449
        %v704 = vunpack.c.l.b16 %v463
        %v705 = vunpack.c.l.b16 %v473
        %v706 = vunpack.c.l.b16 %v487
        %v707 = vunpack.c.l.b16 %v497
        %v708 = vunpack.c.l.b16 %v511
        %v709 = vunpack.c.l.b16 %v521
        %v710 = vunpack.c.l.b16 %v535
        %v711 = vunpack.c.l.b16 %v545
        %v712 = vunpack.c.l.b16 %v559
        %v713 = vunpack.c.l.b16 %v569
        %v714 = vunpack.c.l.b16 %v583
        %v715 = vunpack.c.l.b16 %v593
        %v716 = vunpack.c.l.b16 %v607
        %v717 = vunpack.c.l.b16 %v617
        %v718 = vunpack.c.l.b16 %v631
        %v719 = vunpack.c.l.b16 %v641
        %v720 = vunpack.c.l.b16 %v655
        %v721 = vunpack.c.l.b16 %v665
        %v722 = vunpack.c.l.b16 %v679
        %v723 = vunpack.c.l.b16 %v689
        %v724 = vpack.c.b16 %v693, %v692
        %v725 = vpack.c.b16 %v695, %v694
        %v726 = vpack.c.b16 %v697, %v696
        %v727 = vpack.c.b16 %v699, %v698
        %v728 = vpack.c.b16 %v701, %v700
        %v729 = vpack.c.b16 %v703, %v702
        %v730 = vpack.c.b16 %v705, %v704
        %v731 = vpack.c.b16 %v707, %v706
        %v732 = vpack.c.b16 %v709, %v708
        %v733 = vpack.c.b16 %v711, %v710
        %v734 = vpack.c.b16 %v713, %v712
        %v735 = vpack.c.b16 %v715, %v714
        %v736 = vpack.c.b16 %v717, %v716
        %v737 = vpack.c.b16 %v719, %v718
        %v738 = vpack.c.b16 %v721, %v720
        %v739 = vpack.c.b16 %v723, %v722
        %vm740 = vcmask 64512
        %v742 = vsel %vm740, %v724, 0
        %v745 = vsel %vm740, %v725, 0
        %v748 = vsel %vm740, %v726, 0
        %v751 = vsel %vm740, %v727, 0
        %v754 = vsel %vm740, %v728, 0
        %v757 = vsel %vm740, %v729, 0
        %v760 = vsel %vm740, %v730, 0
        %v763 = vsel %vm740, %v731, 0
        %v766 = vsel %vm740, %v732, 0
        %v769 = vsel %vm740, %v733, 0
        %v772 = vsel %vm740, %v734, 0
        %v775 = vsel %vm740, %v735, 0
        %v778 = vsel %vm740, %v736, 0
        %v781 = vsel %vm740, %v737, 0
        %v784 = vsel %vm740, %v738, 0
        %v787 = vsel %vm740, %v739, 0
        %vm789 = vcmask 1043456
        %v791 = vsel %vm789, %v691, 0
        %793 = vmatprep.subr.bf16.mxu0 0
        %794 = vmatpush1.bf16.msra.mxu0 %v791
        %795 = vmatprep.subr.bf16.mxu0 0
        %796 = vmatpush1.bf16.msra.mxu0 0
        %797 = vmatprep.subr.bf16.mxu0 0
        %798 = vmatpush1.bf16.msra.mxu0 0
        %799 = vmatprep.subr.bf16.mxu0 0
        %800 = vmatpush1.bf16.msra.mxu0 0
        %801 = vmatprep.subr.bf16.mxu0 0
        %802 = vmatpush1.bf16.msra.mxu0 0
        %803 = vmatprep.subr.bf16.mxu0 0
        %804 = vmatpush1.bf16.msra.mxu0 0
        %805 = vmatprep.subr.bf16.mxu0 0
        %806 = vmatpush1.bf16.msra.mxu0 0
        %807 = vmatprep.subr.bf16.mxu0 0
        %808 = vmatpush1.bf16.msra.mxu0 0
        %809 = vmatprep.subr.bf16.mxu0 0
        %810 = vmatpush1.bf16.msra.mxu0 0
        %811 = vmatprep.subr.bf16.mxu0 0
        %812 = vmatpush1.bf16.msra.mxu0 0
        %813 = vmatprep.subr.bf16.mxu0 0
        %814 = vmatpush1.bf16.msra.mxu0 0
        %815 = vmatprep.subr.bf16.mxu0 0
        %816 = vmatpush1.bf16.msra.mxu0 0
        %817 = vmatprep.subr.bf16.mxu0 0
        %818 = vmatpush1.bf16.msra.mxu0 0
        %819 = vmatprep.subr.bf16.mxu0 0
        %820 = vmatpush1.bf16.msra.mxu0 0
        %821 = vmatprep.subr.bf16.mxu0 0
        %822 = vmatpush1.bf16.msra.mxu0 0
        %823 = vmatprep.subr.bf16.mxu0 0
        %824 = vmatpush1.bf16.msra.mxu0 0
        %825 = vmatprep.mubr.bf16.mxu0 0
        %826 = vmatmul.mubr.bf16.gmra.mrb[0].mxu0 %v742
        %v827 = vpop.f32.mrb[0].mxu0
        %v828 = vadd.f32 0.0, %v827
        %v829 = vpop.f32.mrb[0].mxu0
        %v830 = vpop.f32.mrb[0].mxu0
        %v831 = vadd.f32 0.0, %v830
        %v832 = vpop.f32.mrb[0].mxu0
        %833 = vmatprep.mubr.bf16.mxu0 0
        %834 = vmatmul.mubr.bf16.gmra.mrb[0].mxu0 %v745
        %v835 = vpop.f32.mrb[0].mxu0
        %v836 = vadd.f32 0.0, %v835
        %v837 = vpop.f32.mrb[0].mxu0
        %v838 = vpop.f32.mrb[0].mxu0
        %v839 = vadd.f32 0.0, %v838
        %v840 = vpop.f32.mrb[0].mxu0
        %841 = vmatprep.mubr.bf16.mxu0 0
        %842 = vmatmul.mubr.bf16.gmra.mrb[0].mxu0 %v748
        %v843 = vpop.f32.mrb[0].mxu0
        %v844 = vadd.f32 0.0, %v843
        %v845 = vpop.f32.mrb[0].mxu0
        %v846 = vpop.f32.mrb[0].mxu0
        %v847 = vadd.f32 0.0, %v846
        %v848 = vpop.f32.mrb[0].mxu0
        %849 = vmatprep.mubr.bf16.mxu0 0
        %850 = vmatmul.mubr.bf16.gmra.mrb[0].mxu0 %v751
        %v851 = vpop.f32.mrb[0].mxu0
        %v852 = vadd.f32 0.0, %v851
        %v853 = vpop.f32.mrb[0].mxu0
        %v854 = vpop.f32.mrb[0].mxu0
        %v855 = vadd.f32 0.0, %v854
        %v856 = vpop.f32.mrb[0].mxu0
        %857 = vmatprep.mubr.bf16.mxu0 0
        %858 = vmatmul.mubr.bf16.gmra.mrb[0].mxu0 %v754
        %v859 = vpop.f32.mrb[0].mxu0
        %v860 = vadd.f32 0.0, %v859
        %v861 = vpop.f32.mrb[0].mxu0
        %v862 = vpop.f32.mrb[0].mxu0
        %v863 = vadd.f32 0.0, %v862
        %v864 = vpop.f32.mrb[0].mxu0
        %865 = vmatprep.mubr.bf16.mxu0 0
        %866 = vmatmul.mubr.bf16.gmra.mrb[0].mxu0 %v757
        %v867 = vpop.f32.mrb[0].mxu0
        %v868 = vadd.f32 0.0, %v867
        %v869 = vpop.f32.mrb[0].mxu0
        %v870 = vpop.f32.mrb[0].mxu0
        %v871 = vadd.f32 0.0, %v870
        %v872 = vpop.f32.mrb[0].mxu0
        %873 = vmatprep.mubr.bf16.mxu0 0
        %874 = vmatmul.mubr.bf16.gmra.mrb[0].mxu0 %v760
        %v875 = vpop.f32.mrb[0].mxu0
        %v876 = vadd.f32 0.0, %v875
        %v877 = vpop.f32.mrb[0].mxu0
        %v878 = vpop.f32.mrb[0].mxu0
        %v879 = vadd.f32 0.0, %v878
        %v880 = vpop.f32.mrb[0].mxu0
        %881 = vmatprep.mubr.bf16.mxu0 0
        %882 = vmatmul.mubr.bf16.gmra.mrb[0].mxu0 %v763
        %v883 = vpop.f32.mrb[0].mxu0
        %v884 = vadd.f32 0.0, %v883
        %v885 = vpop.f32.mrb[0].mxu0
        %v886 = vpop.f32.mrb[0].mxu0
        %v887 = vadd.f32 0.0, %v886
        %v888 = vpop.f32.mrb[0].mxu0
        %889 = vmatprep.mubr.bf16.mxu0 0
        %890 = vmatmul.mubr.bf16.gmra.mrb[0].mxu0 %v766
        %v891 = vpop.f32.mrb[0].mxu0
        %v892 = vadd.f32 0.0, %v891
        %v893 = vpop.f32.mrb[0].mxu0
        %v894 = vpop.f32.mrb[0].mxu0
        %v895 = vadd.f32 0.0, %v894
        %v896 = vpop.f32.mrb[0].mxu0
        %897 = vmatprep.mubr.bf16.mxu0 0
        %898 = vmatmul.mubr.bf16.gmra.mrb[0].mxu0 %v769
        %v899 = vpop.f32.mrb[0].mxu0
        %v900 = vadd.f32 0.0, %v899
        %v901 = vpop.f32.mrb[0].mxu0
        %v902 = vpop.f32.mrb[0].mxu0
        %v903 = vadd.f32 0.0, %v902
        %v904 = vpop.f32.mrb[0].mxu0
        %905 = vmatprep.mubr.bf16.mxu0 0
        %906 = vmatmul.mubr.bf16.gmra.mrb[0].mxu0 %v772
        %v907 = vpop.f32.mrb[0].mxu0
        %v908 = vadd.f32 0.0, %v907
        %v909 = vpop.f32.mrb[0].mxu0
        %v910 = vpop.f32.mrb[0].mxu0
        %v911 = vadd.f32 0.0, %v910
        %v912 = vpop.f32.mrb[0].mxu0
        %913 = vmatprep.mubr.bf16.mxu0 0
        %914 = vmatmul.mubr.bf16.gmra.mrb[0].mxu0 %v775
        %v915 = vpop.f32.mrb[0].mxu0
        %v916 = vadd.f32 0.0, %v915
        %v917 = vpop.f32.mrb[0].mxu0
        %v918 = vpop.f32.mrb[0].mxu0
        %v919 = vadd.f32 0.0, %v918
        %v920 = vpop.f32.mrb[0].mxu0
        %921 = vmatprep.mubr.bf16.mxu0 0
        %922 = vmatmul.mubr.bf16.gmra.mrb[0].mxu0 %v778
        %v923 = vpop.f32.mrb[0].mxu0
        %v924 = vadd.f32 0.0, %v923
        %v925 = vpop.f32.mrb[0].mxu0
        %v926 = vpop.f32.mrb[0].mxu0
        %v927 = vadd.f32 0.0, %v926
        %v928 = vpop.f32.mrb[0].mxu0
        %929 = vmatprep.mubr.bf16.mxu0 0
        %930 = vmatmul.mubr.bf16.gmra.mrb[0].mxu0 %v781
        %v931 = vpop.f32.mrb[0].mxu0
        %v932 = vadd.f32 0.0, %v931
        %v933 = vpop.f32.mrb[0].mxu0
        %v934 = vpop.f32.mrb[0].mxu0
        %v935 = vadd.f32 0.0, %v934
        %v936 = vpop.f32.mrb[0].mxu0
        %937 = vmatprep.mubr.bf16.mxu0 0
        %938 = vmatmul.mubr.bf16.gmra.mrb[0].mxu0 %v784
        %v939 = vpop.f32.mrb[0].mxu0
        %v940 = vadd.f32 0.0, %v939
        %v941 = vpop.f32.mrb[0].mxu0
        %v942 = vpop.f32.mrb[0].mxu0
        %v943 = vadd.f32 0.0, %v942
        %v944 = vpop.f32.mrb[0].mxu0
        %945 = vmatprep.mubr.bf16.mxu0 0
        %946 = vmatmul.mubr.bf16.gmra.mrb[0].mxu0 %v787
        %v947 = vpop.f32.mrb[0].mxu0
        %v948 = vadd.f32 0.0, %v947
        %v949 = vpop.f32.mrb[0].mxu0
        %v950 = vpop.f32.mrb[0].mxu0
        %v951 = vadd.f32 0.0, %v950
        %v952 = vpop.f32.mrb[0].mxu0
        %953 = vdwg.mxu0
        %v986 = vunpack.c.l.b16 %v248
        %v987 = vunpack.c.l.b16 %v249
        %v988 = vunpack.c.l.b16 %v251
        %v989 = vunpack.c.l.b16 %v252
        %v990 = vunpack.c.l.b16 %v254
        %v991 = vunpack.c.l.b16 %v255
        %v992 = vunpack.c.l.b16 %v257
        %v993 = vunpack.c.l.b16 %v258
        %v994 = vunpack.c.l.b16 %v260
        %v995 = vunpack.c.l.b16 %v261
        %v996 = vunpack.c.l.b16 %v263
        %v997 = vunpack.c.l.b16 %v264
        %v998 = vunpack.c.l.b16 %v266
        %v999 = vunpack.c.l.b16 %v267
        %v1000 = vunpack.c.l.b16 %v269
        %v1001 = vunpack.c.l.b16 %v270
        %v1002 = vunpack.c.l.b16 %v272
        %v1003 = vunpack.c.l.b16 %v273
        %v1004 = vunpack.c.l.b16 %v275
        %v1005 = vunpack.c.l.b16 %v276
        %v1006 = vunpack.c.l.b16 %v278
        %v1007 = vunpack.c.l.b16 %v279
        %v1008 = vunpack.c.l.b16 %v281
        %v1009 = vunpack.c.l.b16 %v282
        %v1010 = vunpack.c.l.b16 %v284
        %v1011 = vunpack.c.l.b16 %v285
        %v1012 = vunpack.c.l.b16 %v287
        %v1013 = vunpack.c.l.b16 %v288
        %v1014 = vunpack.c.l.b16 %v290
        %v1015 = vunpack.c.l.b16 %v291
        %v1016 = vunpack.c.l.b16 %v293
        %v1017 = vunpack.c.l.b16 %v294
        %v1018 = vpack.c.b16 %v987, %v986
        %v1019 = vpack.c.b16 %v989, %v988
        %v1020 = vpack.c.b16 %v991, %v990
        %v1021 = vpack.c.b16 %v993, %v992
        %v1022 = vpack.c.b16 %v995, %v994
        %v1023 = vpack.c.b16 %v997, %v996
        %v1024 = vpack.c.b16 %v999, %v998
        %v1025 = vpack.c.b16 %v1001, %v1000
        %v1026 = vpack.c.b16 %v1003, %v1002
        %v1027 = vpack.c.b16 %v1005, %v1004
        %v1028 = vpack.c.b16 %v1007, %v1006
        %v1029 = vpack.c.b16 %v1009, %v1008
        %v1030 = vpack.c.b16 %v1011, %v1010
        %v1031 = vpack.c.b16 %v1013, %v1012
        %v1032 = vpack.c.b16 %v1015, %v1014
        %v1033 = vpack.c.b16 %v1017, %v1016
        %v1035 = vsel %vm740, %v1018, 0
        %v1038 = vsel %vm740, %v1019, 0
        %v1041 = vsel %vm740, %v1020, 0
        %v1044 = vsel %vm740, %v1021, 0
        %v1047 = vsel %vm740, %v1022, 0
        %v1050 = vsel %vm740, %v1023, 0
        %v1053 = vsel %vm740, %v1024, 0
        %v1056 = vsel %vm740, %v1025, 0
        %v1059 = vsel %vm740, %v1026, 0
        %v1062 = vsel %vm740, %v1027, 0
        %v1065 = vsel %vm740, %v1028, 0
        %v1068 = vsel %vm740, %v1029, 0
        %v1071 = vsel %vm740, %v1030, 0
        %v1074 = vsel %vm740, %v1031, 0
        %v1077 = vsel %vm740, %v1032, 0
        %v1080 = vsel %vm740, %v1033, 0
        %v1083 = vsel %vm789, %v302, 0
        %1085 = vmatprep.subr.bf16.mxu0 0
        %1086 = vmatpush1.bf16.msra.mxu0 %v1083
        %1087 = vmatprep.subr.bf16.mxu0 0
        %1088 = vmatpush1.bf16.msra.mxu0 0
        %1089 = vmatprep.subr.bf16.mxu0 0
        %1090 = vmatpush1.bf16.msra.mxu0 0
        %1091 = vmatprep.subr.bf16.mxu0 0
        %1092 = vmatpush1.bf16.msra.mxu0 0
        %1093 = vmatprep.subr.bf16.mxu0 0
        %1094 = vmatpush1.bf16.msra.mxu0 0
        %1095 = vmatprep.subr.bf16.mxu0 0
        %1096 = vmatpush1.bf16.msra.mxu0 0
        %1097 = vmatprep.subr.bf16.mxu0 0
        %1098 = vmatpush1.bf16.msra.mxu0 0
        %1099 = vmatprep.subr.bf16.mxu0 0
        %1100 = vmatpush1.bf16.msra.mxu0 0
        %1101 = vmatprep.subr.bf16.mxu0 0
        %1102 = vmatpush1.bf16.msra.mxu0 0
        %1103 = vmatprep.subr.bf16.mxu0 0
        %1104 = vmatpush1.bf16.msra.mxu0 0
        %1105 = vmatprep.subr.bf16.mxu0 0
        %1106 = vmatpush1.bf16.msra.mxu0 0
        %1107 = vmatprep.subr.bf16.mxu0 0
        %1108 = vmatpush1.bf16.msra.mxu0 0
        %1109 = vmatprep.subr.bf16.mxu0 0
        %1110 = vmatpush1.bf16.msra.mxu0 0
        %1111 = vmatprep.subr.bf16.mxu0 0
        %1112 = vmatpush1.bf16.msra.mxu0 0
        %1113 = vmatprep.subr.bf16.mxu0 0
        %1114 = vmatpush1.bf16.msra.mxu0 0
        %1115 = vmatprep.subr.bf16.mxu0 0
        %1116 = vmatpush1.bf16.msra.mxu0 0
        %1117 = vmatprep.mubr.bf16.mxu0 0
        %1118 = vmatmul.mubr.bf16.gmra.mrb[0].mxu0 %v1035
        %v1119 = vpop.f32.mrb[0].mxu0
        %v1120 = vadd.f32 %v828, %v1119
        %v1121 = vpop.f32.mrb[0].mxu0
        %v1122 = vpop.f32.mrb[0].mxu0
        %v1123 = vadd.f32 %v831, %v1122
        %v1124 = vpop.f32.mrb[0].mxu0
        %1125 = vmatprep.mubr.bf16.mxu0 0
        %1126 = vmatmul.mubr.bf16.gmra.mrb[0].mxu0 %v1038
        %v1127 = vpop.f32.mrb[0].mxu0
        %v1128 = vadd.f32 %v836, %v1127
        %v1129 = vpop.f32.mrb[0].mxu0
        %v1130 = vpop.f32.mrb[0].mxu0
        %v1131 = vadd.f32 %v839, %v1130
        %v1132 = vpop.f32.mrb[0].mxu0
        %1133 = vmatprep.mubr.bf16.mxu0 0
        %1134 = vmatmul.mubr.bf16.gmra.mrb[0].mxu0 %v1041
        %v1135 = vpop.f32.mrb[0].mxu0
        %v1136 = vadd.f32 %v844, %v1135
        %v1137 = vpop.f32.mrb[0].mxu0
        %v1138 = vpop.f32.mrb[0].mxu0
        %v1139 = vadd.f32 %v847, %v1138
        %v1140 = vpop.f32.mrb[0].mxu0
        %1141 = vmatprep.mubr.bf16.mxu0 0
        %1142 = vmatmul.mubr.bf16.gmra.mrb[0].mxu0 %v1044
        %v1143 = vpop.f32.mrb[0].mxu0
        %v1144 = vadd.f32 %v852, %v1143
        %v1145 = vpop.f32.mrb[0].mxu0
        %v1146 = vpop.f32.mrb[0].mxu0
        %v1147 = vadd.f32 %v855, %v1146
        %v1148 = vpop.f32.mrb[0].mxu0
        %1149 = vmatprep.mubr.bf16.mxu0 0
        %1150 = vmatmul.mubr.bf16.gmra.mrb[0].mxu0 %v1047
        %v1151 = vpop.f32.mrb[0].mxu0
        %v1152 = vadd.f32 %v860, %v1151
        %v1153 = vpop.f32.mrb[0].mxu0
        %v1154 = vpop.f32.mrb[0].mxu0
        %v1155 = vadd.f32 %v863, %v1154
        %v1156 = vpop.f32.mrb[0].mxu0
        %1157 = vmatprep.mubr.bf16.mxu0 0
        %1158 = vmatmul.mubr.bf16.gmra.mrb[0].mxu0 %v1050
        %v1159 = vpop.f32.mrb[0].mxu0
        %v1160 = vadd.f32 %v868, %v1159
        %v1161 = vpop.f32.mrb[0].mxu0
        %v1162 = vpop.f32.mrb[0].mxu0
        %v1163 = vadd.f32 %v871, %v1162
        %v1164 = vpop.f32.mrb[0].mxu0
        %1165 = vmatprep.mubr.bf16.mxu0 0
        %1166 = vmatmul.mubr.bf16.gmra.mrb[0].mxu0 %v1053
        %v1167 = vpop.f32.mrb[0].mxu0
        %v1168 = vadd.f32 %v876, %v1167
        %v1169 = vpop.f32.mrb[0].mxu0
        %v1170 = vpop.f32.mrb[0].mxu0
        %v1171 = vadd.f32 %v879, %v1170
        %v1172 = vpop.f32.mrb[0].mxu0
        %1173 = vmatprep.mubr.bf16.mxu0 0
        %1174 = vmatmul.mubr.bf16.gmra.mrb[0].mxu0 %v1056
        %v1175 = vpop.f32.mrb[0].mxu0
        %v1176 = vadd.f32 %v884, %v1175
        %v1177 = vpop.f32.mrb[0].mxu0
        %v1178 = vpop.f32.mrb[0].mxu0
        %v1179 = vadd.f32 %v887, %v1178
        %v1180 = vpop.f32.mrb[0].mxu0
        %1181 = vmatprep.mubr.bf16.mxu0 0
        %1182 = vmatmul.mubr.bf16.gmra.mrb[0].mxu0 %v1059
        %v1183 = vpop.f32.mrb[0].mxu0
        %v1184 = vadd.f32 %v892, %v1183
        %v1185 = vpop.f32.mrb[0].mxu0
        %v1186 = vpop.f32.mrb[0].mxu0
        %v1187 = vadd.f32 %v895, %v1186
        %v1188 = vpop.f32.mrb[0].mxu0
        %1189 = vmatprep.mubr.bf16.mxu0 0
        %1190 = vmatmul.mubr.bf16.gmra.mrb[0].mxu0 %v1062
        %v1191 = vpop.f32.mrb[0].mxu0
        %v1192 = vadd.f32 %v900, %v1191
        %v1193 = vpop.f32.mrb[0].mxu0
        %v1194 = vpop.f32.mrb[0].mxu0
        %v1195 = vadd.f32 %v903, %v1194
        %v1196 = vpop.f32.mrb[0].mxu0
        %1197 = vmatprep.mubr.bf16.mxu0 0
        %1198 = vmatmul.mubr.bf16.gmra.mrb[0].mxu0 %v1065
        %v1199 = vpop.f32.mrb[0].mxu0
        %v1200 = vadd.f32 %v908, %v1199
        %v1201 = vpop.f32.mrb[0].mxu0
        %v1202 = vpop.f32.mrb[0].mxu0
        %v1203 = vadd.f32 %v911, %v1202
        %v1204 = vpop.f32.mrb[0].mxu0
        %1205 = vmatprep.mubr.bf16.mxu0 0
        %1206 = vmatmul.mubr.bf16.gmra.mrb[0].mxu0 %v1068
        %v1207 = vpop.f32.mrb[0].mxu0
        %v1208 = vadd.f32 %v916, %v1207
        %v1209 = vpop.f32.mrb[0].mxu0
        %v1210 = vpop.f32.mrb[0].mxu0
        %v1211 = vadd.f32 %v919, %v1210
        %v1212 = vpop.f32.mrb[0].mxu0
        %1213 = vmatprep.mubr.bf16.mxu0 0
        %1214 = vmatmul.mubr.bf16.gmra.mrb[0].mxu0 %v1071
        %v1215 = vpop.f32.mrb[0].mxu0
        %v1216 = vadd.f32 %v924, %v1215
        %v1217 = vpop.f32.mrb[0].mxu0
        %v1218 = vpop.f32.mrb[0].mxu0
        %v1219 = vadd.f32 %v927, %v1218
        %v1220 = vpop.f32.mrb[0].mxu0
        %1221 = vmatprep.mubr.bf16.mxu0 0
        %1222 = vmatmul.mubr.bf16.gmra.mrb[0].mxu0 %v1074
        %v1223 = vpop.f32.mrb[0].mxu0
        %v1224 = vadd.f32 %v932, %v1223
        %v1225 = vpop.f32.mrb[0].mxu0
        %v1226 = vpop.f32.mrb[0].mxu0
        %v1227 = vadd.f32 %v935, %v1226
        %v1228 = vpop.f32.mrb[0].mxu0
        %1229 = vmatprep.mubr.bf16.mxu0 0
        %1230 = vmatmul.mubr.bf16.gmra.mrb[0].mxu0 %v1077
        %v1231 = vpop.f32.mrb[0].mxu0
        %v1232 = vadd.f32 %v940, %v1231
        %v1233 = vpop.f32.mrb[0].mxu0
        %v1234 = vpop.f32.mrb[0].mxu0
        %v1235 = vadd.f32 %v943, %v1234
        %v1236 = vpop.f32.mrb[0].mxu0
        %1237 = vmatprep.mubr.bf16.mxu0 0
        %1238 = vmatmul.mubr.bf16.gmra.mrb[0].mxu0 %v1080
        %v1239 = vpop.f32.mrb[0].mxu0
        %v1240 = vadd.f32 %v948, %v1239
        %v1241 = vpop.f32.mrb[0].mxu0
        %v1242 = vpop.f32.mrb[0].mxu0
        %v1243 = vadd.f32 %v951, %v1242
        %v1244 = vpop.f32.mrb[0].mxu0
        %1245 = vdwg.mxu0
        %vm1262 = vcmask 1042432
        %vm1263 = vcmask 1046532
        %vm1264 = vmor %vm1262, %vm1263
        %v1265 = vrot.slane %v248, 5
        %v1266 = vrot.slane %v1265, 4
        %v1267 = vrot.slane %v249, 5
        %v1268 = vsel %vm1264, %v1266, %v1267
        %v1269 = vrot.slane %v1267, 4
        %v1270 = vrot.slane %v250, 5
        %v1271 = vsel %vm1264, %v1269, %v1270
        %v1272 = vrot.slane %v251, 5
        %v1273 = vrot.slane %v1272, 4
        %v1274 = vrot.slane %v252, 5
        %v1275 = vsel %vm1264, %v1273, %v1274
        %v1276 = vrot.slane %v1274, 4
        %v1277 = vrot.slane %v253, 5
        %v1278 = vsel %vm1264, %v1276, %v1277
        %v1279 = vrot.slane %v254, 5
        %v1280 = vrot.slane %v1279, 4
        %v1281 = vrot.slane %v255, 5
        %v1282 = vsel %vm1264, %v1280, %v1281
        %v1283 = vrot.slane %v1281, 4
        %v1284 = vrot.slane %v256, 5
        %v1285 = vsel %vm1264, %v1283, %v1284
        %v1286 = vrot.slane %v257, 5
        %v1287 = vrot.slane %v1286, 4
        %v1288 = vrot.slane %v258, 5
        %v1289 = vsel %vm1264, %v1287, %v1288
        %v1290 = vrot.slane %v1288, 4
        %v1291 = vrot.slane %v259, 5
        %v1292 = vsel %vm1264, %v1290, %v1291
        %v1293 = vrot.slane %v260, 5
        %v1294 = vrot.slane %v1293, 4
        %v1295 = vrot.slane %v261, 5
        %v1296 = vsel %vm1264, %v1294, %v1295
        %v1297 = vrot.slane %v1295, 4
        %v1298 = vrot.slane %v262, 5
        %v1299 = vsel %vm1264, %v1297, %v1298
        %v1300 = vrot.slane %v263, 5
        %v1301 = vrot.slane %v1300, 4
        %v1302 = vrot.slane %v264, 5
        %v1303 = vsel %vm1264, %v1301, %v1302
        %v1304 = vrot.slane %v1302, 4
        %v1305 = vrot.slane %v265, 5
        %v1306 = vsel %vm1264, %v1304, %v1305
        %v1307 = vrot.slane %v266, 5
        %v1308 = vrot.slane %v1307, 4
        %v1309 = vrot.slane %v267, 5
        %v1310 = vsel %vm1264, %v1308, %v1309
        %v1311 = vrot.slane %v1309, 4
        %v1312 = vrot.slane %v268, 5
        %v1313 = vsel %vm1264, %v1311, %v1312
        %v1314 = vrot.slane %v269, 5
        %v1315 = vrot.slane %v1314, 4
        %v1316 = vrot.slane %v270, 5
        %v1317 = vsel %vm1264, %v1315, %v1316
        %v1318 = vrot.slane %v1316, 4
        %v1319 = vrot.slane %v271, 5
        %v1320 = vsel %vm1264, %v1318, %v1319
        %v1321 = vrot.slane %v272, 5
        %v1322 = vrot.slane %v1321, 4
        %v1323 = vrot.slane %v273, 5
        %v1324 = vsel %vm1264, %v1322, %v1323
        %v1325 = vrot.slane %v1323, 4
        %v1326 = vrot.slane %v274, 5
        %v1327 = vsel %vm1264, %v1325, %v1326
        %v1328 = vrot.slane %v275, 5
        %v1329 = vrot.slane %v1328, 4
        %v1330 = vrot.slane %v276, 5
        %v1331 = vsel %vm1264, %v1329, %v1330
        %v1332 = vrot.slane %v1330, 4
        %v1333 = vrot.slane %v277, 5
        %v1334 = vsel %vm1264, %v1332, %v1333
        %v1335 = vrot.slane %v278, 5
        %v1336 = vrot.slane %v1335, 4
        %v1337 = vrot.slane %v279, 5
        %v1338 = vsel %vm1264, %v1336, %v1337
        %v1339 = vrot.slane %v1337, 4
        %v1340 = vrot.slane %v280, 5
        %v1341 = vsel %vm1264, %v1339, %v1340
        %v1342 = vrot.slane %v281, 5
        %v1343 = vrot.slane %v1342, 4
        %v1344 = vrot.slane %v282, 5
        %v1345 = vsel %vm1264, %v1343, %v1344
        %v1346 = vrot.slane %v1344, 4
        %v1347 = vrot.slane %v283, 5
        %v1348 = vsel %vm1264, %v1346, %v1347
        %v1349 = vrot.slane %v284, 5
        %v1350 = vrot.slane %v1349, 4
        %v1351 = vrot.slane %v285, 5
        %v1352 = vsel %vm1264, %v1350, %v1351
        %v1353 = vrot.slane %v1351, 4
        %v1354 = vrot.slane %v286, 5
        %v1355 = vsel %vm1264, %v1353, %v1354
        %v1356 = vrot.slane %v287, 5
        %v1357 = vrot.slane %v1356, 4
        %v1358 = vrot.slane %v288, 5
        %v1359 = vsel %vm1264, %v1357, %v1358
        %v1360 = vrot.slane %v1358, 4
        %v1361 = vrot.slane %v289, 5
        %v1362 = vsel %vm1264, %v1360, %v1361
        %v1363 = vrot.slane %v290, 5
        %v1364 = vrot.slane %v1363, 4
        %v1365 = vrot.slane %v291, 5
        %v1366 = vsel %vm1264, %v1364, %v1365
        %v1367 = vrot.slane %v1365, 4
        %v1368 = vrot.slane %v292, 5
        %v1369 = vsel %vm1264, %v1367, %v1368
        %v1370 = vrot.slane %v293, 5
        %v1371 = vrot.slane %v1370, 4
        %v1372 = vrot.slane %v294, 5
        %v1373 = vsel %vm1264, %v1371, %v1372
        %v1374 = vrot.slane %v1372, 4
        %v1375 = vrot.slane %v295, 5
        %v1376 = vsel %vm1264, %v1374, %v1375
        %s1377 = scalar_lea.vmem [#allocation5], 8
        %v1378 = vld [vmem:[%s1377] sm:$0xf]
        %v1379 = vunpack.c.l.b16 %v1268
        %v1380 = vunpack.c.l.b16 %v1271
        %v1381 = vunpack.c.l.b16 %v1275
        %v1382 = vunpack.c.l.b16 %v1278
        %v1383 = vunpack.c.l.b16 %v1282
        %v1384 = vunpack.c.l.b16 %v1285
        %v1385 = vunpack.c.l.b16 %v1289
        %v1386 = vunpack.c.l.b16 %v1292
        %v1387 = vunpack.c.l.b16 %v1296
        %v1388 = vunpack.c.l.b16 %v1299
        %v1389 = vunpack.c.l.b16 %v1303
        %v1390 = vunpack.c.l.b16 %v1306
        %v1391 = vunpack.c.l.b16 %v1310
        %v1392 = vunpack.c.l.b16 %v1313
        %v1393 = vunpack.c.l.b16 %v1317
        %v1394 = vunpack.c.l.b16 %v1320
        %v1395 = vunpack.c.l.b16 %v1324
        %v1396 = vunpack.c.l.b16 %v1327
        %v1397 = vunpack.c.l.b16 %v1331
        %v1398 = vunpack.c.l.b16 %v1334
        %v1399 = vunpack.c.l.b16 %v1338
        %v1400 = vunpack.c.l.b16 %v1341
        %v1401 = vunpack.c.l.b16 %v1345
        %v1402 = vunpack.c.l.b16 %v1348
        %v1403 = vunpack.c.l.b16 %v1352
        %v1404 = vunpack.c.l.b16 %v1355
        %v1405 = vunpack.c.l.b16 %v1359
        %v1406 = vunpack.c.l.b16 %v1362
        %v1407 = vunpack.c.l.b16 %v1366
        %v1408 = vunpack.c.l.b16 %v1369
        %v1409 = vunpack.c.l.b16 %v1373
        %v1410 = vunpack.c.l.b16 %v1376
        %v1411 = vpack.c.b16 %v1380, %v1379
        %v1412 = vpack.c.b16 %v1382, %v1381
        %v1413 = vpack.c.b16 %v1384, %v1383
        %v1414 = vpack.c.b16 %v1386, %v1385
        %v1415 = vpack.c.b16 %v1388, %v1387
        %v1416 = vpack.c.b16 %v1390, %v1389
        %v1417 = vpack.c.b16 %v1392, %v1391
        %v1418 = vpack.c.b16 %v1394, %v1393
        %v1419 = vpack.c.b16 %v1396, %v1395
        %v1420 = vpack.c.b16 %v1398, %v1397
        %v1421 = vpack.c.b16 %v1400, %v1399
        %v1422 = vpack.c.b16 %v1402, %v1401
        %v1423 = vpack.c.b16 %v1404, %v1403
        %v1424 = vpack.c.b16 %v1406, %v1405
        %v1425 = vpack.c.b16 %v1408, %v1407
        %v1426 = vpack.c.b16 %v1410, %v1409
        %v1428 = vsel %vm740, %v1411, 0
        %v1431 = vsel %vm740, %v1412, 0
        %v1434 = vsel %vm740, %v1413, 0
        %v1437 = vsel %vm740, %v1414, 0
        %v1440 = vsel %vm740, %v1415, 0
        %v1443 = vsel %vm740, %v1416, 0
        %v1446 = vsel %vm740, %v1417, 0
        %v1449 = vsel %vm740, %v1418, 0
        %v1452 = vsel %vm740, %v1419, 0
        %v1455 = vsel %vm740, %v1420, 0
        %v1458 = vsel %vm740, %v1421, 0
        %v1461 = vsel %vm740, %v1422, 0
        %v1464 = vsel %vm740, %v1423, 0
        %v1467 = vsel %vm740, %v1424, 0
        %v1470 = vsel %vm740, %v1425, 0
        %v1473 = vsel %vm740, %v1426, 0
        %v1476 = vsel %vm789, %v1378, 0
        %1478 = vmatprep.subr.bf16.mxu0 0
        %1479 = vmatpush1.bf16.msra.mxu0 %v1476
        %1480 = vmatprep.subr.bf16.mxu0 0
        %1481 = vmatpush1.bf16.msra.mxu0 0
        %1482 = vmatprep.subr.bf16.mxu0 0
        %1483 = vmatpush1.bf16.msra.mxu0 0
        %1484 = vmatprep.subr.bf16.mxu0 0
        %1485 = vmatpush1.bf16.msra.mxu0 0
        %1486 = vmatprep.subr.bf16.mxu0 0
        %1487 = vmatpush1.bf16.msra.mxu0 0
        %1488 = vmatprep.subr.bf16.mxu0 0
        %1489 = vmatpush1.bf16.msra.mxu0 0
        %1490 = vmatprep.subr.bf16.mxu0 0
        %1491 = vmatpush1.bf16.msra.mxu0 0
        %1492 = vmatprep.subr.bf16.mxu0 0
        %1493 = vmatpush1.bf16.msra.mxu0 0
        %1494 = vmatprep.subr.bf16.mxu0 0
        %1495 = vmatpush1.bf16.msra.mxu0 0
        %1496 = vmatprep.subr.bf16.mxu0 0
        %1497 = vmatpush1.bf16.msra.mxu0 0
        %1498 = vmatprep.subr.bf16.mxu0 0
        %1499 = vmatpush1.bf16.msra.mxu0 0
        %1500 = vmatprep.subr.bf16.mxu0 0
        %1501 = vmatpush1.bf16.msra.mxu0 0
        %1502 = vmatprep.subr.bf16.mxu0 0
        %1503 = vmatpush1.bf16.msra.mxu0 0
        %1504 = vmatprep.subr.bf16.mxu0 0
        %1505 = vmatpush1.bf16.msra.mxu0 0
        %1506 = vmatprep.subr.bf16.mxu0 0
        %1507 = vmatpush1.bf16.msra.mxu0 0
        %1508 = vmatprep.subr.bf16.mxu0 0
        %1509 = vmatpush1.bf16.msra.mxu0 0
        %1510 = vmatprep.mubr.bf16.mxu0 0
        %1511 = vmatmul.mubr.bf16.gmra.mrb[0].mxu0 %v1428
        %v1512 = vpop.f32.mrb[0].mxu0
        %v1513 = vadd.f32 0.0, %v1512
        %v1514 = vpop.f32.mrb[0].mxu0
        %v1515 = vpop.f32.mrb[0].mxu0
        %v1516 = vadd.f32 0.0, %v1515
        %v1517 = vpop.f32.mrb[0].mxu0
        %1518 = vmatprep.mubr.bf16.mxu0 0
        %1519 = vmatmul.mubr.bf16.gmra.mrb[0].mxu0 %v1431
        %v1520 = vpop.f32.mrb[0].mxu0
        %v1521 = vadd.f32 0.0, %v1520
        %v1522 = vpop.f32.mrb[0].mxu0
        %v1523 = vpop.f32.mrb[0].mxu0
        %v1524 = vadd.f32 0.0, %v1523
        %v1525 = vpop.f32.mrb[0].mxu0
        %1526 = vmatprep.mubr.bf16.mxu0 0
        %1527 = vmatmul.mubr.bf16.gmra.mrb[0].mxu0 %v1434
        %v1528 = vpop.f32.mrb[0].mxu0
        %v1529 = vadd.f32 0.0, %v1528
        %v1530 = vpop.f32.mrb[0].mxu0
        %v1531 = vpop.f32.mrb[0].mxu0
        %v1532 = vadd.f32 0.0, %v1531
        %v1533 = vpop.f32.mrb[0].mxu0
        %1534 = vmatprep.mubr.bf16.mxu0 0
        %1535 = vmatmul.mubr.bf16.gmra.mrb[0].mxu0 %v1437
        %v1536 = vpop.f32.mrb[0].mxu0
        %v1537 = vadd.f32 0.0, %v1536
        %v1538 = vpop.f32.mrb[0].mxu0
        %v1539 = vpop.f32.mrb[0].mxu0
        %v1540 = vadd.f32 0.0, %v1539
        %v1541 = vpop.f32.mrb[0].mxu0
        %1542 = vmatprep.mubr.bf16.mxu0 0
        %1543 = vmatmul.mubr.bf16.gmra.mrb[0].mxu0 %v1440
        %v1544 = vpop.f32.mrb[0].mxu0
        %v1545 = vadd.f32 0.0, %v1544
        %v1546 = vpop.f32.mrb[0].mxu0
        %v1547 = vpop.f32.mrb[0].mxu0
        %v1548 = vadd.f32 0.0, %v1547
        %v1549 = vpop.f32.mrb[0].mxu0
        %1550 = vmatprep.mubr.bf16.mxu0 0
        %1551 = vmatmul.mubr.bf16.gmra.mrb[0].mxu0 %v1443
        %v1552 = vpop.f32.mrb[0].mxu0
        %v1553 = vadd.f32 0.0, %v1552
        %v1554 = vpop.f32.mrb[0].mxu0
        %v1555 = vpop.f32.mrb[0].mxu0
        %v1556 = vadd.f32 0.0, %v1555
        %v1557 = vpop.f32.mrb[0].mxu0
        %1558 = vmatprep.mubr.bf16.mxu0 0
        %1559 = vmatmul.mubr.bf16.gmra.mrb[0].mxu0 %v1446
        %v1560 = vpop.f32.mrb[0].mxu0
        %v1561 = vadd.f32 0.0, %v1560
        %v1562 = vpop.f32.mrb[0].mxu0
        %v1563 = vpop.f32.mrb[0].mxu0
        %v1564 = vadd.f32 0.0, %v1563
        %v1565 = vpop.f32.mrb[0].mxu0
        %1566 = vmatprep.mubr.bf16.mxu0 0
        %1567 = vmatmul.mubr.bf16.gmra.mrb[0].mxu0 %v1449
        %v1568 = vpop.f32.mrb[0].mxu0
        %v1569 = vadd.f32 0.0, %v1568
        %v1570 = vpop.f32.mrb[0].mxu0
        %v1571 = vpop.f32.mrb[0].mxu0
        %v1572 = vadd.f32 0.0, %v1571
        %v1573 = vpop.f32.mrb[0].mxu0
        %1574 = vmatprep.mubr.bf16.mxu0 0
        %1575 = vmatmul.mubr.bf16.gmra.mrb[0].mxu0 %v1452
        %v1576 = vpop.f32.mrb[0].mxu0
        %v1577 = vadd.f32 0.0, %v1576
        %v1578 = vpop.f32.mrb[0].mxu0
        %v1579 = vpop.f32.mrb[0].mxu0
        %v1580 = vadd.f32 0.0, %v1579
        %v1581 = vpop.f32.mrb[0].mxu0
        %1582 = vmatprep.mubr.bf16.mxu0 0
        %1583 = vmatmul.mubr.bf16.gmra.mrb[0].mxu0 %v1455
        %v1584 = vpop.f32.mrb[0].mxu0
        %v1585 = vadd.f32 0.0, %v1584
        %v1586 = vpop.f32.mrb[0].mxu0
        %v1587 = vpop.f32.mrb[0].mxu0
        %v1588 = vadd.f32 0.0, %v1587
        %v1589 = vpop.f32.mrb[0].mxu0
        %1590 = vmatprep.mubr.bf16.mxu0 0
        %1591 = vmatmul.mubr.bf16.gmra.mrb[0].mxu0 %v1458
        %v1592 = vpop.f32.mrb[0].mxu0
        %v1593 = vadd.f32 0.0, %v1592
        %v1594 = vpop.f32.mrb[0].mxu0
        %v1595 = vpop.f32.mrb[0].mxu0
        %v1596 = vadd.f32 0.0, %v1595
        %v1597 = vpop.f32.mrb[0].mxu0
        %1598 = vmatprep.mubr.bf16.mxu0 0
        %1599 = vmatmul.mubr.bf16.gmra.mrb[0].mxu0 %v1461
        %v1600 = vpop.f32.mrb[0].mxu0
        %v1601 = vadd.f32 0.0, %v1600
        %v1602 = vpop.f32.mrb[0].mxu0
        %v1603 = vpop.f32.mrb[0].mxu0
        %v1604 = vadd.f32 0.0, %v1603
        %v1605 = vpop.f32.mrb[0].mxu0
        %1606 = vmatprep.mubr.bf16.mxu0 0
        %1607 = vmatmul.mubr.bf16.gmra.mrb[0].mxu0 %v1464
        %v1608 = vpop.f32.mrb[0].mxu0
        %v1609 = vadd.f32 0.0, %v1608
        %v1610 = vpop.f32.mrb[0].mxu0
        %v1611 = vpop.f32.mrb[0].mxu0
        %v1612 = vadd.f32 0.0, %v1611
        %v1613 = vpop.f32.mrb[0].mxu0
        %1614 = vmatprep.mubr.bf16.mxu0 0
        %1615 = vmatmul.mubr.bf16.gmra.mrb[0].mxu0 %v1467
        %v1616 = vpop.f32.mrb[0].mxu0
        %v1617 = vadd.f32 0.0, %v1616
        %v1618 = vpop.f32.mrb[0].mxu0
        %v1619 = vpop.f32.mrb[0].mxu0
        %v1620 = vadd.f32 0.0, %v1619
        %v1621 = vpop.f32.mrb[0].mxu0
        %1622 = vmatprep.mubr.bf16.mxu0 0
        %1623 = vmatmul.mubr.bf16.gmra.mrb[0].mxu0 %v1470
        %v1624 = vpop.f32.mrb[0].mxu0
        %v1625 = vadd.f32 0.0, %v1624
        %v1626 = vpop.f32.mrb[0].mxu0
        %v1627 = vpop.f32.mrb[0].mxu0
        %v1628 = vadd.f32 0.0, %v1627
        %v1629 = vpop.f32.mrb[0].mxu0
        %1630 = vmatprep.mubr.bf16.mxu0 0
        %1631 = vmatmul.mubr.bf16.gmra.mrb[0].mxu0 %v1473
        %v1632 = vpop.f32.mrb[0].mxu0
        %v1633 = vadd.f32 0.0, %v1632
        %v1634 = vpop.f32.mrb[0].mxu0
        %v1635 = vpop.f32.mrb[0].mxu0
        %v1636 = vadd.f32 0.0, %v1635
        %v1637 = vpop.f32.mrb[0].mxu0
        %1638 = vdwg.mxu0
        %v1639 = vadd.f32 %v1120, %v1513
        %v1640 = vadd.f32 %v1123, %v1516
        %v1641 = vadd.f32 %v1128, %v1521
        %v1642 = vadd.f32 %v1131, %v1524
        %v1643 = vadd.f32 %v1136, %v1529
        %v1644 = vadd.f32 %v1139, %v1532
        %v1645 = vadd.f32 %v1144, %v1537
        %v1646 = vadd.f32 %v1147, %v1540
        %v1647 = vadd.f32 %v1152, %v1545
        %v1648 = vadd.f32 %v1155, %v1548
        %v1649 = vadd.f32 %v1160, %v1553
        %v1650 = vadd.f32 %v1163, %v1556
        %v1651 = vadd.f32 %v1168, %v1561
        %v1652 = vadd.f32 %v1171, %v1564
        %v1653 = vadd.f32 %v1176, %v1569
        %v1654 = vadd.f32 %v1179, %v1572
        %v1655 = vadd.f32 %v1184, %v1577
        %v1656 = vadd.f32 %v1187, %v1580
        %v1657 = vadd.f32 %v1192, %v1585
        %v1658 = vadd.f32 %v1195, %v1588
        %v1659 = vadd.f32 %v1200, %v1593
        %v1660 = vadd.f32 %v1203, %v1596
        %v1661 = vadd.f32 %v1208, %v1601
        %v1662 = vadd.f32 %v1211, %v1604
        %v1663 = vadd.f32 %v1216, %v1609
        %v1664 = vadd.f32 %v1219, %v1612
        %v1665 = vadd.f32 %v1224, %v1617
        %v1666 = vadd.f32 %v1227, %v1620
        %v1667 = vadd.f32 %v1232, %v1625
        %v1668 = vadd.f32 %v1235, %v1628
        %v1669 = vadd.f32 %v1240, %v1633
        %v1670 = vadd.f32 %v1243, %v1636
        %s1671 = scalar_lea.vmem [#allocation5], 12
        %v1672 = vld [vmem:[%s1671] sm:$0xf]
        %v1675 = vunpack.c.l.b16 %v296
        %v1676 = vunpack.c.l.b16 %v297
        %v1677 = vpack.c.b16 %v1676, %v1675
        %v1679 = vsel %vm740, %v1677, 0
        %v1682 = vsel %vm789, %v1672, 0
        %1684 = vmatprep.subr.bf16.mxu0 0
        %1685 = vmatpush1.bf16.msra.mxu0 %v1682
        %1686 = vmatprep.subr.bf16.mxu0 0
        %1687 = vmatpush1.bf16.msra.mxu0 0
        %1688 = vmatprep.subr.bf16.mxu0 0
        %1689 = vmatpush1.bf16.msra.mxu0 0
        %1690 = vmatprep.subr.bf16.mxu0 0
        %1691 = vmatpush1.bf16.msra.mxu0 0
        %1692 = vmatprep.subr.bf16.mxu0 0
        %1693 = vmatpush1.bf16.msra.mxu0 0
        %1694 = vmatprep.subr.bf16.mxu0 0
        %1695 = vmatpush1.bf16.msra.mxu0 0
        %1696 = vmatprep.subr.bf16.mxu0 0
        %1697 = vmatpush1.bf16.msra.mxu0 0
        %1698 = vmatprep.subr.bf16.mxu0 0
        %1699 = vmatpush1.bf16.msra.mxu0 0
        %1700 = vmatprep.subr.bf16.mxu0 0
        %1701 = vmatpush1.bf16.msra.mxu0 0
        %1702 = vmatprep.subr.bf16.mxu0 0
        %1703 = vmatpush1.bf16.msra.mxu0 0
        %1704 = vmatprep.subr.bf16.mxu0 0
        %1705 = vmatpush1.bf16.msra.mxu0 0
        %1706 = vmatprep.subr.bf16.mxu0 0
        %1707 = vmatpush1.bf16.msra.mxu0 0
        %1708 = vmatprep.subr.bf16.mxu0 0
        %1709 = vmatpush1.bf16.msra.mxu0 0
        %1710 = vmatprep.subr.bf16.mxu0 0
        %1711 = vmatpush1.bf16.msra.mxu0 0
        %1712 = vmatprep.subr.bf16.mxu0 0
        %1713 = vmatpush1.bf16.msra.mxu0 0
        %1714 = vmatprep.subr.bf16.mxu0 0
        %1715 = vmatpush1.bf16.msra.mxu0 0
        %1716 = vmatprep.mubr.bf16.mxu0 0
        %1717 = vmatmul.mubr.bf16.gmra.mrb[0].mxu0 %v1038
        %v1718 = vpop.f32.mrb[0].mxu0
        %v1719 = vadd.f32 0.0, %v1718
        %v1720 = vpop.f32.mrb[0].mxu0
        %v1721 = vpop.f32.mrb[0].mxu0
        %v1722 = vadd.f32 0.0, %v1721
        %v1723 = vpop.f32.mrb[0].mxu0
        %1724 = vmatprep.mubr.bf16.mxu0 0
        %1725 = vmatmul.mubr.bf16.gmra.mrb[0].mxu0 %v1041
        %v1726 = vpop.f32.mrb[0].mxu0
        %v1727 = vadd.f32 0.0, %v1726
        %v1728 = vpop.f32.mrb[0].mxu0
        %v1729 = vpop.f32.mrb[0].mxu0
        %v1730 = vadd.f32 0.0, %v1729
        %v1731 = vpop.f32.mrb[0].mxu0
        %1732 = vmatprep.mubr.bf16.mxu0 0
        %1733 = vmatmul.mubr.bf16.gmra.mrb[0].mxu0 %v1044
        %v1734 = vpop.f32.mrb[0].mxu0
        %v1735 = vadd.f32 0.0, %v1734
        %v1736 = vpop.f32.mrb[0].mxu0
        %v1737 = vpop.f32.mrb[0].mxu0
        %v1738 = vadd.f32 0.0, %v1737
        %v1739 = vpop.f32.mrb[0].mxu0
        %1740 = vmatprep.mubr.bf16.mxu0 0
        %1741 = vmatmul.mubr.bf16.gmra.mrb[0].mxu0 %v1047
        %v1742 = vpop.f32.mrb[0].mxu0
        %v1743 = vadd.f32 0.0, %v1742
        %v1744 = vpop.f32.mrb[0].mxu0
        %v1745 = vpop.f32.mrb[0].mxu0
        %v1746 = vadd.f32 0.0, %v1745
        %v1747 = vpop.f32.mrb[0].mxu0
        %1748 = vmatprep.mubr.bf16.mxu0 0
        %1749 = vmatmul.mubr.bf16.gmra.mrb[0].mxu0 %v1050
        %v1750 = vpop.f32.mrb[0].mxu0
        %v1751 = vadd.f32 0.0, %v1750
        %v1752 = vpop.f32.mrb[0].mxu0
        %v1753 = vpop.f32.mrb[0].mxu0
        %v1754 = vadd.f32 0.0, %v1753
        %v1755 = vpop.f32.mrb[0].mxu0
        %1756 = vmatprep.mubr.bf16.mxu0 0
        %1757 = vmatmul.mubr.bf16.gmra.mrb[0].mxu0 %v1053
        %v1758 = vpop.f32.mrb[0].mxu0
        %v1759 = vadd.f32 0.0, %v1758
        %v1760 = vpop.f32.mrb[0].mxu0
        %v1761 = vpop.f32.mrb[0].mxu0
        %v1762 = vadd.f32 0.0, %v1761
        %v1763 = vpop.f32.mrb[0].mxu0
        %1764 = vmatprep.mubr.bf16.mxu0 0
        %1765 = vmatmul.mubr.bf16.gmra.mrb[0].mxu0 %v1056
        %v1766 = vpop.f32.mrb[0].mxu0
        %v1767 = vadd.f32 0.0, %v1766
        %v1768 = vpop.f32.mrb[0].mxu0
        %v1769 = vpop.f32.mrb[0].mxu0
        %v1770 = vadd.f32 0.0, %v1769
        %v1771 = vpop.f32.mrb[0].mxu0
        %1772 = vmatprep.mubr.bf16.mxu0 0
        %1773 = vmatmul.mubr.bf16.gmra.mrb[0].mxu0 %v1059
        %v1774 = vpop.f32.mrb[0].mxu0
        %v1775 = vadd.f32 0.0, %v1774
        %v1776 = vpop.f32.mrb[0].mxu0
        %v1777 = vpop.f32.mrb[0].mxu0
        %v1778 = vadd.f32 0.0, %v1777
        %v1779 = vpop.f32.mrb[0].mxu0
        %1780 = vmatprep.mubr.bf16.mxu0 0
        %1781 = vmatmul.mubr.bf16.gmra.mrb[0].mxu0 %v1062
        %v1782 = vpop.f32.mrb[0].mxu0
        %v1783 = vadd.f32 0.0, %v1782
        %v1784 = vpop.f32.mrb[0].mxu0
        %v1785 = vpop.f32.mrb[0].mxu0
        %v1786 = vadd.f32 0.0, %v1785
        %v1787 = vpop.f32.mrb[0].mxu0
        %1788 = vmatprep.mubr.bf16.mxu0 0
        %1789 = vmatmul.mubr.bf16.gmra.mrb[0].mxu0 %v1065
        %v1790 = vpop.f32.mrb[0].mxu0
        %v1791 = vadd.f32 0.0, %v1790
        %v1792 = vpop.f32.mrb[0].mxu0
        %v1793 = vpop.f32.mrb[0].mxu0
        %v1794 = vadd.f32 0.0, %v1793
        %v1795 = vpop.f32.mrb[0].mxu0
        %1796 = vmatprep.mubr.bf16.mxu0 0
        %1797 = vmatmul.mubr.bf16.gmra.mrb[0].mxu0 %v1068
        %v1798 = vpop.f32.mrb[0].mxu0
        %v1799 = vadd.f32 0.0, %v1798
        %v1800 = vpop.f32.mrb[0].mxu0
        %v1801 = vpop.f32.mrb[0].mxu0
        %v1802 = vadd.f32 0.0, %v1801
        %v1803 = vpop.f32.mrb[0].mxu0
        %1804 = vmatprep.mubr.bf16.mxu0 0
        %1805 = vmatmul.mubr.bf16.gmra.mrb[0].mxu0 %v1071
        %v1806 = vpop.f32.mrb[0].mxu0
        %v1807 = vadd.f32 0.0, %v1806
        %v1808 = vpop.f32.mrb[0].mxu0
        %v1809 = vpop.f32.mrb[0].mxu0
        %v1810 = vadd.f32 0.0, %v1809
        %v1811 = vpop.f32.mrb[0].mxu0
        %1812 = vmatprep.mubr.bf16.mxu0 0
        %1813 = vmatmul.mubr.bf16.gmra.mrb[0].mxu0 %v1074
        %v1814 = vpop.f32.mrb[0].mxu0
        %v1815 = vadd.f32 0.0, %v1814
        %v1816 = vpop.f32.mrb[0].mxu0
        %v1817 = vpop.f32.mrb[0].mxu0
        %v1818 = vadd.f32 0.0, %v1817
        %v1819 = vpop.f32.mrb[0].mxu0
        %1820 = vmatprep.mubr.bf16.mxu0 0
        %1821 = vmatmul.mubr.bf16.gmra.mrb[0].mxu0 %v1077
        %v1822 = vpop.f32.mrb[0].mxu0
        %v1823 = vadd.f32 0.0, %v1822
        %v1824 = vpop.f32.mrb[0].mxu0
        %v1825 = vpop.f32.mrb[0].mxu0
        %v1826 = vadd.f32 0.0, %v1825
        %v1827 = vpop.f32.mrb[0].mxu0
        %1828 = vmatprep.mubr.bf16.mxu0 0
        %1829 = vmatmul.mubr.bf16.gmra.mrb[0].mxu0 %v1080
        %v1830 = vpop.f32.mrb[0].mxu0
        %v1831 = vadd.f32 0.0, %v1830
        %v1832 = vpop.f32.mrb[0].mxu0
        %v1833 = vpop.f32.mrb[0].mxu0
        %v1834 = vadd.f32 0.0, %v1833
        %v1835 = vpop.f32.mrb[0].mxu0
        %1836 = vmatprep.mubr.bf16.mxu0 0
        %1837 = vmatmul.mubr.bf16.gmra.mrb[0].mxu0 %v1679
        %v1838 = vpop.f32.mrb[0].mxu0
        %v1839 = vadd.f32 0.0, %v1838
        %v1840 = vpop.f32.mrb[0].mxu0
        %v1841 = vpop.f32.mrb[0].mxu0
        %v1842 = vadd.f32 0.0, %v1841
        %v1843 = vpop.f32.mrb[0].mxu0
        %1844 = vdwg.mxu0
        %v1845 = vadd.f32 %v1639, %v1719
        %v1846 = vadd.f32 %v1640, %v1722
        %v1847 = vadd.f32 %v1641, %v1727
        %v1848 = vadd.f32 %v1642, %v1730
        %v1849 = vadd.f32 %v1643, %v1735
        %v1850 = vadd.f32 %v1644, %v1738
        %v1851 = vadd.f32 %v1645, %v1743
        %v1852 = vadd.f32 %v1646, %v1746
        %v1853 = vadd.f32 %v1647, %v1751
        %v1854 = vadd.f32 %v1648, %v1754
        %v1855 = vadd.f32 %v1649, %v1759
        %v1856 = vadd.f32 %v1650, %v1762
        %v1857 = vadd.f32 %v1651, %v1767
        %v1858 = vadd.f32 %v1652, %v1770
        %v1859 = vadd.f32 %v1653, %v1775
        %v1860 = vadd.f32 %v1654, %v1778
        %v1861 = vadd.f32 %v1655, %v1783
        %v1862 = vadd.f32 %v1656, %v1786
        %v1863 = vadd.f32 %v1657, %v1791
        %v1864 = vadd.f32 %v1658, %v1794
        %v1865 = vadd.f32 %v1659, %v1799
        %v1866 = vadd.f32 %v1660, %v1802
        %v1867 = vadd.f32 %v1661, %v1807
        %v1868 = vadd.f32 %v1662, %v1810
        %v1869 = vadd.f32 %v1663, %v1815
        %v1870 = vadd.f32 %v1664, %v1818
        %v1871 = vadd.f32 %v1665, %v1823
        %v1872 = vadd.f32 %v1666, %v1826
        %v1873 = vadd.f32 %v1667, %v1831
        %v1874 = vadd.f32 %v1668, %v1834
        %v1875 = vadd.f32 %v1669, %v1839
        %v1876 = vadd.f32 %v1670, %v1842
        %v1878 = vshrl.u32 %v296, 16
        %v1880 = vrot.slane %v1878, 4
        %v1881 = vshll.u32 %v296, 16
        %v1883 = vrot.slane %v1881, 5
        %v1884 = vor.u32 %v1880, %v1883
        %v1885 = vrot.slane %v1884, 4
        %v1887 = vshll.u32 %v297, 16
        %v1889 = vrot.slane %v1887, 5
        %v1890 = vsel %vm305, %v1885, %v1889
        %v1891 = vshrl.u32 %v297, 16
        %v1893 = vrot.slane %v1891, 4
        %v1894 = vor.u32 %v1893, %v1889
        %v1895 = vrot.slane %v1894, 4
        %v1897 = vshll.u32 %v298, 16
        %v1899 = vrot.slane %v1897, 5
        %v1900 = vsel %vm305, %v1895, %v1899
        %s1901 = scalar_lea.vmem [#allocation5], 16
        %v1902 = vld [vmem:[%s1901] sm:$0xf]
        %v1903 = vunpack.c.l.b16 %v1890
        %v1904 = vunpack.c.l.b16 %v1900
        %v1905 = vpack.c.b16 %v1904, %v1903
        %v1907 = vsel %vm740, %v1905, 0
        %v1910 = vsel %vm789, %v1902, 0
        %1912 = vmatprep.subr.bf16.mxu0 0
        %1913 = vmatpush1.bf16.msra.mxu0 %v1910
        %1914 = vmatprep.subr.bf16.mxu0 0
        %1915 = vmatpush1.bf16.msra.mxu0 0
        %1916 = vmatprep.subr.bf16.mxu0 0
        %1917 = vmatpush1.bf16.msra.mxu0 0
        %1918 = vmatprep.subr.bf16.mxu0 0
        %1919 = vmatpush1.bf16.msra.mxu0 0
        %1920 = vmatprep.subr.bf16.mxu0 0
        %1921 = vmatpush1.bf16.msra.mxu0 0
        %1922 = vmatprep.subr.bf16.mxu0 0
        %1923 = vmatpush1.bf16.msra.mxu0 0
        %1924 = vmatprep.subr.bf16.mxu0 0
        %1925 = vmatpush1.bf16.msra.mxu0 0
        %1926 = vmatprep.subr.bf16.mxu0 0
        %1927 = vmatpush1.bf16.msra.mxu0 0
        %1928 = vmatprep.subr.bf16.mxu0 0
        %1929 = vmatpush1.bf16.msra.mxu0 0
        %1930 = vmatprep.subr.bf16.mxu0 0
        %1931 = vmatpush1.bf16.msra.mxu0 0
        %1932 = vmatprep.subr.bf16.mxu0 0
        %1933 = vmatpush1.bf16.msra.mxu0 0
        %1934 = vmatprep.subr.bf16.mxu0 0
        %1935 = vmatpush1.bf16.msra.mxu0 0
        %1936 = vmatprep.subr.bf16.mxu0 0
        %1937 = vmatpush1.bf16.msra.mxu0 0
        %1938 = vmatprep.subr.bf16.mxu0 0
        %1939 = vmatpush1.bf16.msra.mxu0 0
        %1940 = vmatprep.subr.bf16.mxu0 0
        %1941 = vmatpush1.bf16.msra.mxu0 0
        %1942 = vmatprep.subr.bf16.mxu0 0
        %1943 = vmatpush1.bf16.msra.mxu0 0
        %1944 = vmatprep.mubr.bf16.mxu0 0
        %1945 = vmatmul.mubr.bf16.gmra.mrb[0].mxu0 %v745
        %v1946 = vpop.f32.mrb[0].mxu0
        %v1947 = vadd.f32 0.0, %v1946
        %v1948 = vpop.f32.mrb[0].mxu0
        %v1949 = vpop.f32.mrb[0].mxu0
        %v1950 = vadd.f32 0.0, %v1949
        %v1951 = vpop.f32.mrb[0].mxu0
        %1952 = vmatprep.mubr.bf16.mxu0 0
        %1953 = vmatmul.mubr.bf16.gmra.mrb[0].mxu0 %v748
        %v1954 = vpop.f32.mrb[0].mxu0
        %v1955 = vadd.f32 0.0, %v1954
        %v1956 = vpop.f32.mrb[0].mxu0
        %v1957 = vpop.f32.mrb[0].mxu0
        %v1958 = vadd.f32 0.0, %v1957
        %v1959 = vpop.f32.mrb[0].mxu0
        %1960 = vmatprep.mubr.bf16.mxu0 0
        %1961 = vmatmul.mubr.bf16.gmra.mrb[0].mxu0 %v751
        %v1962 = vpop.f32.mrb[0].mxu0
        %v1963 = vadd.f32 0.0, %v1962
        %v1964 = vpop.f32.mrb[0].mxu0
        %v1965 = vpop.f32.mrb[0].mxu0
        %v1966 = vadd.f32 0.0, %v1965
        %v1967 = vpop.f32.mrb[0].mxu0
        %1968 = vmatprep.mubr.bf16.mxu0 0
        %1969 = vmatmul.mubr.bf16.gmra.mrb[0].mxu0 %v754
        %v1970 = vpop.f32.mrb[0].mxu0
        %v1971 = vadd.f32 0.0, %v1970
        %v1972 = vpop.f32.mrb[0].mxu0
        %v1973 = vpop.f32.mrb[0].mxu0
        %v1974 = vadd.f32 0.0, %v1973
        %v1975 = vpop.f32.mrb[0].mxu0
        %1976 = vmatprep.mubr.bf16.mxu0 0
        %1977 = vmatmul.mubr.bf16.gmra.mrb[0].mxu0 %v757
        %v1978 = vpop.f32.mrb[0].mxu0
        %v1979 = vadd.f32 0.0, %v1978
        %v1980 = vpop.f32.mrb[0].mxu0
        %v1981 = vpop.f32.mrb[0].mxu0
        %v1982 = vadd.f32 0.0, %v1981
        %v1983 = vpop.f32.mrb[0].mxu0
        %1984 = vmatprep.mubr.bf16.mxu0 0
        %1985 = vmatmul.mubr.bf16.gmra.mrb[0].mxu0 %v760
        %v1986 = vpop.f32.mrb[0].mxu0
        %v1987 = vadd.f32 0.0, %v1986
        %v1988 = vpop.f32.mrb[0].mxu0
        %v1989 = vpop.f32.mrb[0].mxu0
        %v1990 = vadd.f32 0.0, %v1989
        %v1991 = vpop.f32.mrb[0].mxu0
        %1992 = vmatprep.mubr.bf16.mxu0 0
        %1993 = vmatmul.mubr.bf16.gmra.mrb[0].mxu0 %v763
        %v1994 = vpop.f32.mrb[0].mxu0
        %v1995 = vadd.f32 0.0, %v1994
        %v1996 = vpop.f32.mrb[0].mxu0
        %v1997 = vpop.f32.mrb[0].mxu0
        %v1998 = vadd.f32 0.0, %v1997
        %v1999 = vpop.f32.mrb[0].mxu0
        %2000 = vmatprep.mubr.bf16.mxu0 0
        %2001 = vmatmul.mubr.bf16.gmra.mrb[0].mxu0 %v766
        %v2002 = vpop.f32.mrb[0].mxu0
        %v2003 = vadd.f32 0.0, %v2002
        %v2004 = vpop.f32.mrb[0].mxu0
        %v2005 = vpop.f32.mrb[0].mxu0
        %v2006 = vadd.f32 0.0, %v2005
        %v2007 = vpop.f32.mrb[0].mxu0
        %2008 = vmatprep.mubr.bf16.mxu0 0
        %2009 = vmatmul.mubr.bf16.gmra.mrb[0].mxu0 %v769
        %v2010 = vpop.f32.mrb[0].mxu0
        %v2011 = vadd.f32 0.0, %v2010
        %v2012 = vpop.f32.mrb[0].mxu0
        %v2013 = vpop.f32.mrb[0].mxu0
        %v2014 = vadd.f32 0.0, %v2013
        %v2015 = vpop.f32.mrb[0].mxu0
        %2016 = vmatprep.mubr.bf16.mxu0 0
        %2017 = vmatmul.mubr.bf16.gmra.mrb[0].mxu0 %v772
        %v2018 = vpop.f32.mrb[0].mxu0
        %v2019 = vadd.f32 0.0, %v2018
        %v2020 = vpop.f32.mrb[0].mxu0
        %v2021 = vpop.f32.mrb[0].mxu0
        %v2022 = vadd.f32 0.0, %v2021
        %v2023 = vpop.f32.mrb[0].mxu0
        %2024 = vmatprep.mubr.bf16.mxu0 0
        %2025 = vmatmul.mubr.bf16.gmra.mrb[0].mxu0 %v775
        %v2026 = vpop.f32.mrb[0].mxu0
        %v2027 = vadd.f32 0.0, %v2026
        %v2028 = vpop.f32.mrb[0].mxu0
        %v2029 = vpop.f32.mrb[0].mxu0
        %v2030 = vadd.f32 0.0, %v2029
        %v2031 = vpop.f32.mrb[0].mxu0
        %2032 = vmatprep.mubr.bf16.mxu0 0
        %2033 = vmatmul.mubr.bf16.gmra.mrb[0].mxu0 %v778
        %v2034 = vpop.f32.mrb[0].mxu0
        %v2035 = vadd.f32 0.0, %v2034
        %v2036 = vpop.f32.mrb[0].mxu0
        %v2037 = vpop.f32.mrb[0].mxu0
        %v2038 = vadd.f32 0.0, %v2037
        %v2039 = vpop.f32.mrb[0].mxu0
        %2040 = vmatprep.mubr.bf16.mxu0 0
        %2041 = vmatmul.mubr.bf16.gmra.mrb[0].mxu0 %v781
        %v2042 = vpop.f32.mrb[0].mxu0
        %v2043 = vadd.f32 0.0, %v2042
        %v2044 = vpop.f32.mrb[0].mxu0
        %v2045 = vpop.f32.mrb[0].mxu0
        %v2046 = vadd.f32 0.0, %v2045
        %v2047 = vpop.f32.mrb[0].mxu0
        %2048 = vmatprep.mubr.bf16.mxu0 0
        %2049 = vmatmul.mubr.bf16.gmra.mrb[0].mxu0 %v784
        %v2050 = vpop.f32.mrb[0].mxu0
        %v2051 = vadd.f32 0.0, %v2050
        %v2052 = vpop.f32.mrb[0].mxu0
        %v2053 = vpop.f32.mrb[0].mxu0
        %v2054 = vadd.f32 0.0, %v2053
        %v2055 = vpop.f32.mrb[0].mxu0
        %2056 = vmatprep.mubr.bf16.mxu0 0
        %2057 = vmatmul.mubr.bf16.gmra.mrb[0].mxu0 %v787
        %v2058 = vpop.f32.mrb[0].mxu0
        %v2059 = vadd.f32 0.0, %v2058
        %v2060 = vpop.f32.mrb[0].mxu0
        %v2061 = vpop.f32.mrb[0].mxu0
        %v2062 = vadd.f32 0.0, %v2061
        %v2063 = vpop.f32.mrb[0].mxu0
        %2064 = vmatprep.mubr.bf16.mxu0 0
        %2065 = vmatmul.mubr.bf16.gmra.mrb[0].mxu0 %v1907
        %v2066 = vpop.f32.mrb[0].mxu0
        %v2067 = vadd.f32 0.0, %v2066
        %v2068 = vpop.f32.mrb[0].mxu0
        %v2069 = vpop.f32.mrb[0].mxu0
        %v2070 = vadd.f32 0.0, %v2069
        %v2071 = vpop.f32.mrb[0].mxu0
        %2072 = vdwg.mxu0
        %v2073 = vadd.f32 %v1845, %v1947
        %v2074 = vadd.f32 %v1846, %v1950
        %v2075 = vadd.f32 %v1847, %v1955
        %v2076 = vadd.f32 %v1848, %v1958
        %v2077 = vadd.f32 %v1849, %v1963
        %v2078 = vadd.f32 %v1850, %v1966
        %v2079 = vadd.f32 %v1851, %v1971
        %v2080 = vadd.f32 %v1852, %v1974
        %v2081 = vadd.f32 %v1853, %v1979
        %v2082 = vadd.f32 %v1854, %v1982
        %v2083 = vadd.f32 %v1855, %v1987
        %v2084 = vadd.f32 %v1856, %v1990
        %v2085 = vadd.f32 %v1857, %v1995
        %v2086 = vadd.f32 %v1858, %v1998
        %v2087 = vadd.f32 %v1859, %v2003
        %v2088 = vadd.f32 %v1860, %v2006
        %v2089 = vadd.f32 %v1861, %v2011
        %v2090 = vadd.f32 %v1862, %v2014
        %v2091 = vadd.f32 %v1863, %v2019
        %v2092 = vadd.f32 %v1864, %v2022
        %v2093 = vadd.f32 %v1865, %v2027
        %v2094 = vadd.f32 %v1866, %v2030
        %v2095 = vadd.f32 %v1867, %v2035
        %v2096 = vadd.f32 %v1868, %v2038
        %v2097 = vadd.f32 %v1869, %v2043
        %v2098 = vadd.f32 %v1870, %v2046
        %v2099 = vadd.f32 %v1871, %v2051
        %v2100 = vadd.f32 %v1872, %v2054
        %v2101 = vadd.f32 %v1873, %v2059
        %v2102 = vadd.f32 %v1874, %v2062
        %v2103 = vadd.f32 %v1875, %v2067
        %v2104 = vadd.f32 %v1876, %v2070
        %v2106 = vrot.slane %v296, 5
        %v2107 = vrot.slane %v2106, 4
        %v2108 = vrot.slane %v297, 5
        %v2109 = vsel %vm1264, %v2107, %v2108
        %v2110 = vrot.slane %v2108, 4
        %v2111 = vrot.slane %v298, 5
        %v2112 = vsel %vm1264, %v2110, %v2111
        %s2113 = scalar_lea.vmem [#allocation5], 20
        %v2114 = vld [vmem:[%s2113] sm:$0xf]
        %v2115 = vunpack.c.l.b16 %v2109
        %v2116 = vunpack.c.l.b16 %v2112
        %v2117 = vpack.c.b16 %v2116, %v2115
        %v2119 = vsel %vm740, %v2117, 0
        %v2122 = vsel %vm789, %v2114, 0
        %2124 = vmatprep.subr.bf16.mxu0 0
        %2125 = vmatpush1.bf16.msra.mxu0 %v2122
        %2126 = vmatprep.subr.bf16.mxu0 0
        %2127 = vmatpush1.bf16.msra.mxu0 0
        %2128 = vmatprep.subr.bf16.mxu0 0
        %2129 = vmatpush1.bf16.msra.mxu0 0
        %2130 = vmatprep.subr.bf16.mxu0 0
        %2131 = vmatpush1.bf16.msra.mxu0 0
        %2132 = vmatprep.subr.bf16.mxu0 0
        %2133 = vmatpush1.bf16.msra.mxu0 0
        %2134 = vmatprep.subr.bf16.mxu0 0
        %2135 = vmatpush1.bf16.msra.mxu0 0
        %2136 = vmatprep.subr.bf16.mxu0 0
        %2137 = vmatpush1.bf16.msra.mxu0 0
        %2138 = vmatprep.subr.bf16.mxu0 0
        %2139 = vmatpush1.bf16.msra.mxu0 0
        %2140 = vmatprep.subr.bf16.mxu0 0
        %2141 = vmatpush1.bf16.msra.mxu0 0
        %2142 = vmatprep.subr.bf16.mxu0 0
        %2143 = vmatpush1.bf16.msra.mxu0 0
        %2144 = vmatprep.subr.bf16.mxu0 0
        %2145 = vmatpush1.bf16.msra.mxu0 0
        %2146 = vmatprep.subr.bf16.mxu0 0
        %2147 = vmatpush1.bf16.msra.mxu0 0
        %2148 = vmatprep.subr.bf16.mxu0 0
        %2149 = vmatpush1.bf16.msra.mxu0 0
        %2150 = vmatprep.subr.bf16.mxu0 0
        %2151 = vmatpush1.bf16.msra.mxu0 0
        %2152 = vmatprep.subr.bf16.mxu0 0
        %2153 = vmatpush1.bf16.msra.mxu0 0
        %2154 = vmatprep.subr.bf16.mxu0 0
        %2155 = vmatpush1.bf16.msra.mxu0 0
        %2156 = vmatprep.mubr.bf16.mxu0 0
        %2157 = vmatmul.mubr.bf16.gmra.mrb[0].mxu0 %v1431
        %v2158 = vpop.f32.mrb[0].mxu0
        %v2159 = vadd.f32 0.0, %v2158
        %v2160 = vpop.f32.mrb[0].mxu0
        %v2161 = vpop.f32.mrb[0].mxu0
        %v2162 = vadd.f32 0.0, %v2161
        %v2163 = vpop.f32.mrb[0].mxu0
        %2164 = vmatprep.mubr.bf16.mxu0 0
        %2165 = vmatmul.mubr.bf16.gmra.mrb[0].mxu0 %v1434
        %v2166 = vpop.f32.mrb[0].mxu0
        %v2167 = vadd.f32 0.0, %v2166
        %v2168 = vpop.f32.mrb[0].mxu0
        %v2169 = vpop.f32.mrb[0].mxu0
        %v2170 = vadd.f32 0.0, %v2169
        %v2171 = vpop.f32.mrb[0].mxu0
        %2172 = vmatprep.mubr.bf16.mxu0 0
        %2173 = vmatmul.mubr.bf16.gmra.mrb[0].mxu0 %v1437
        %v2174 = vpop.f32.mrb[0].mxu0
        %v2175 = vadd.f32 0.0, %v2174
        %v2176 = vpop.f32.mrb[0].mxu0
        %v2177 = vpop.f32.mrb[0].mxu0
        %v2178 = vadd.f32 0.0, %v2177
        %v2179 = vpop.f32.mrb[0].mxu0
        %2180 = vmatprep.mubr.bf16.mxu0 0
        %2181 = vmatmul.mubr.bf16.gmra.mrb[0].mxu0 %v1440
        %v2182 = vpop.f32.mrb[0].mxu0
        %v2183 = vadd.f32 0.0, %v2182
        %v2184 = vpop.f32.mrb[0].mxu0
        %v2185 = vpop.f32.mrb[0].mxu0
        %v2186 = vadd.f32 0.0, %v2185
        %v2187 = vpop.f32.mrb[0].mxu0
        %2188 = vmatprep.mubr.bf16.mxu0 0
        %2189 = vmatmul.mubr.bf16.gmra.mrb[0].mxu0 %v1443
        %v2190 = vpop.f32.mrb[0].mxu0
        %v2191 = vadd.f32 0.0, %v2190
        %v2192 = vpop.f32.mrb[0].mxu0
        %v2193 = vpop.f32.mrb[0].mxu0
        %v2194 = vadd.f32 0.0, %v2193
        %v2195 = vpop.f32.mrb[0].mxu0
        %2196 = vmatprep.mubr.bf16.mxu0 0
        %2197 = vmatmul.mubr.bf16.gmra.mrb[0].mxu0 %v1446
        %v2198 = vpop.f32.mrb[0].mxu0
        %v2199 = vadd.f32 0.0, %v2198
        %v2200 = vpop.f32.mrb[0].mxu0
        %v2201 = vpop.f32.mrb[0].mxu0
        %v2202 = vadd.f32 0.0, %v2201
        %v2203 = vpop.f32.mrb[0].mxu0
        %2204 = vmatprep.mubr.bf16.mxu0 0
        %2205 = vmatmul.mubr.bf16.gmra.mrb[0].mxu0 %v1449
        %v2206 = vpop.f32.mrb[0].mxu0
        %v2207 = vadd.f32 0.0, %v2206
        %v2208 = vpop.f32.mrb[0].mxu0
        %v2209 = vpop.f32.mrb[0].mxu0
        %v2210 = vadd.f32 0.0, %v2209
        %v2211 = vpop.f32.mrb[0].mxu0
        %2212 = vmatprep.mubr.bf16.mxu0 0
        %2213 = vmatmul.mubr.bf16.gmra.mrb[0].mxu0 %v1452
        %v2214 = vpop.f32.mrb[0].mxu0
        %v2215 = vadd.f32 0.0, %v2214
        %v2216 = vpop.f32.mrb[0].mxu0
        %v2217 = vpop.f32.mrb[0].mxu0
        %v2218 = vadd.f32 0.0, %v2217
        %v2219 = vpop.f32.mrb[0].mxu0
        %2220 = vmatprep.mubr.bf16.mxu0 0
        %2221 = vmatmul.mubr.bf16.gmra.mrb[0].mxu0 %v1455
        %v2222 = vpop.f32.mrb[0].mxu0
        %v2223 = vadd.f32 0.0, %v2222
        %v2224 = vpop.f32.mrb[0].mxu0
        %v2225 = vpop.f32.mrb[0].mxu0
        %v2226 = vadd.f32 0.0, %v2225
        %v2227 = vpop.f32.mrb[0].mxu0
        %2228 = vmatprep.mubr.bf16.mxu0 0
        %2229 = vmatmul.mubr.bf16.gmra.mrb[0].mxu0 %v1458
        %v2230 = vpop.f32.mrb[0].mxu0
        %v2231 = vadd.f32 0.0, %v2230
        %v2232 = vpop.f32.mrb[0].mxu0
        %v2233 = vpop.f32.mrb[0].mxu0
        %v2234 = vadd.f32 0.0, %v2233
        %v2235 = vpop.f32.mrb[0].mxu0
        %2236 = vmatprep.mubr.bf16.mxu0 0
        %2237 = vmatmul.mubr.bf16.gmra.mrb[0].mxu0 %v1461
        %v2238 = vpop.f32.mrb[0].mxu0
        %v2239 = vadd.f32 0.0, %v2238
        %v2240 = vpop.f32.mrb[0].mxu0
        %v2241 = vpop.f32.mrb[0].mxu0
        %v2242 = vadd.f32 0.0, %v2241
        %v2243 = vpop.f32.mrb[0].mxu0
        %2244 = vmatprep.mubr.bf16.mxu0 0
        %2245 = vmatmul.mubr.bf16.gmra.mrb[0].mxu0 %v1464
        %v2246 = vpop.f32.mrb[0].mxu0
        %v2247 = vadd.f32 0.0, %v2246
        %v2248 = vpop.f32.mrb[0].mxu0
        %v2249 = vpop.f32.mrb[0].mxu0
        %v2250 = vadd.f32 0.0, %v2249
        %v2251 = vpop.f32.mrb[0].mxu0
        %2252 = vmatprep.mubr.bf16.mxu0 0
        %2253 = vmatmul.mubr.bf16.gmra.mrb[0].mxu0 %v1467
        %v2254 = vpop.f32.mrb[0].mxu0
        %v2255 = vadd.f32 0.0, %v2254
        %v2256 = vpop.f32.mrb[0].mxu0
        %v2257 = vpop.f32.mrb[0].mxu0
        %v2258 = vadd.f32 0.0, %v2257
        %v2259 = vpop.f32.mrb[0].mxu0
        %2260 = vmatprep.mubr.bf16.mxu0 0
        %2261 = vmatmul.mubr.bf16.gmra.mrb[0].mxu0 %v1470
        %v2262 = vpop.f32.mrb[0].mxu0
        %v2263 = vadd.f32 0.0, %v2262
        %v2264 = vpop.f32.mrb[0].mxu0
        %v2265 = vpop.f32.mrb[0].mxu0
        %v2266 = vadd.f32 0.0, %v2265
        %v2267 = vpop.f32.mrb[0].mxu0
        %2268 = vmatprep.mubr.bf16.mxu0 0
        %2269 = vmatmul.mubr.bf16.gmra.mrb[0].mxu0 %v1473
        %v2270 = vpop.f32.mrb[0].mxu0
        %v2271 = vadd.f32 0.0, %v2270
        %v2272 = vpop.f32.mrb[0].mxu0
        %v2273 = vpop.f32.mrb[0].mxu0
        %v2274 = vadd.f32 0.0, %v2273
        %v2275 = vpop.f32.mrb[0].mxu0
        %2276 = vmatprep.mubr.bf16.mxu0 0
        %2277 = vmatmul.mubr.bf16.gmra.mrb[0].mxu0 %v2119
        %v2278 = vpop.f32.mrb[0].mxu0
        %v2279 = vadd.f32 0.0, %v2278
        %v2280 = vpop.f32.mrb[0].mxu0
        %v2281 = vpop.f32.mrb[0].mxu0
        %v2282 = vadd.f32 0.0, %v2281
        %v2283 = vpop.f32.mrb[0].mxu0
        %2284 = vdwg.mxu0
        %v2285 = vadd.f32 %v2073, %v2159
        %v2286 = vadd.f32 %v2074, %v2162
        %v2287 = vadd.f32 %v2075, %v2167
        %v2288 = vadd.f32 %v2076, %v2170
        %v2289 = vadd.f32 %v2077, %v2175
        %v2290 = vadd.f32 %v2078, %v2178
        %v2291 = vadd.f32 %v2079, %v2183
        %v2292 = vadd.f32 %v2080, %v2186
        %v2293 = vadd.f32 %v2081, %v2191
        %v2294 = vadd.f32 %v2082, %v2194
        %v2295 = vadd.f32 %v2083, %v2199
        %v2296 = vadd.f32 %v2084, %v2202
        %v2297 = vadd.f32 %v2085, %v2207
        %v2298 = vadd.f32 %v2086, %v2210
        %v2299 = vadd.f32 %v2087, %v2215
        %v2300 = vadd.f32 %v2088, %v2218
        %v2301 = vadd.f32 %v2089, %v2223
        %v2302 = vadd.f32 %v2090, %v2226
        %v2303 = vadd.f32 %v2091, %v2231
        %v2304 = vadd.f32 %v2092, %v2234
        %v2305 = vadd.f32 %v2093, %v2239
        %v2306 = vadd.f32 %v2094, %v2242
        %v2307 = vadd.f32 %v2095, %v2247
        %v2308 = vadd.f32 %v2096, %v2250
        %v2309 = vadd.f32 %v2097, %v2255
        %v2310 = vadd.f32 %v2098, %v2258
        %v2311 = vadd.f32 %v2099, %v2263
        %v2312 = vadd.f32 %v2100, %v2266
        %v2313 = vadd.f32 %v2101, %v2271
        %v2314 = vadd.f32 %v2102, %v2274
        %v2315 = vadd.f32 %v2103, %v2279
        %v2316 = vadd.f32 %v2104, %v2282
        %s2317 = scalar_lea.vmem [#allocation5], 24
        %v2318 = vld [vmem:[%s2317] sm:$0xf]
        %v2321 = vunpack.c.l.b16 %v299
        %v2322 = vunpack.c.l.b16 %v300
        %v2323 = vpack.c.b16 %v2322, %v2321
        %v2325 = vsel %vm740, %v2323, 0
        %v2328 = vsel %vm789, %v2318, 0
        %2330 = vmatprep.subr.bf16.mxu0 0
        %2331 = vmatpush1.bf16.msra.mxu0 %v2328
        %2332 = vmatprep.subr.bf16.mxu0 0
        %2333 = vmatpush1.bf16.msra.mxu0 0
        %2334 = vmatprep.subr.bf16.mxu0 0
        %2335 = vmatpush1.bf16.msra.mxu0 0
        %2336 = vmatprep.subr.bf16.mxu0 0
        %2337 = vmatpush1.bf16.msra.mxu0 0
        %2338 = vmatprep.subr.bf16.mxu0 0
        %2339 = vmatpush1.bf16.msra.mxu0 0
        %2340 = vmatprep.subr.bf16.mxu0 0
        %2341 = vmatpush1.bf16.msra.mxu0 0
        %2342 = vmatprep.subr.bf16.mxu0 0
        %2343 = vmatpush1.bf16.msra.mxu0 0
        %2344 = vmatprep.subr.bf16.mxu0 0
        %2345 = vmatpush1.bf16.msra.mxu0 0
        %2346 = vmatprep.subr.bf16.mxu0 0
        %2347 = vmatpush1.bf16.msra.mxu0 0
        %2348 = vmatprep.subr.bf16.mxu0 0
        %2349 = vmatpush1.bf16.msra.mxu0 0
        %2350 = vmatprep.subr.bf16.mxu0 0
        %2351 = vmatpush1.bf16.msra.mxu0 0
        %2352 = vmatprep.subr.bf16.mxu0 0
        %2353 = vmatpush1.bf16.msra.mxu0 0
        %2354 = vmatprep.subr.bf16.mxu0 0
        %2355 = vmatpush1.bf16.msra.mxu0 0
        %2356 = vmatprep.subr.bf16.mxu0 0
        %2357 = vmatpush1.bf16.msra.mxu0 0
        %2358 = vmatprep.subr.bf16.mxu0 0
        %2359 = vmatpush1.bf16.msra.mxu0 0
        %2360 = vmatprep.subr.bf16.mxu0 0
        %2361 = vmatpush1.bf16.msra.mxu0 0
        %2362 = vmatprep.mubr.bf16.mxu0 0
        %2363 = vmatmul.mubr.bf16.gmra.mrb[0].mxu0 %v1041
        %v2364 = vpop.f32.mrb[0].mxu0
        %v2365 = vadd.f32 0.0, %v2364
        %v2366 = vpop.f32.mrb[0].mxu0
        %v2367 = vpop.f32.mrb[0].mxu0
        %v2368 = vadd.f32 0.0, %v2367
        %v2369 = vpop.f32.mrb[0].mxu0
        %2370 = vmatprep.mubr.bf16.mxu0 0
        %2371 = vmatmul.mubr.bf16.gmra.mrb[0].mxu0 %v1044
        %v2372 = vpop.f32.mrb[0].mxu0
        %v2373 = vadd.f32 0.0, %v2372
        %v2374 = vpop.f32.mrb[0].mxu0
        %v2375 = vpop.f32.mrb[0].mxu0
        %v2376 = vadd.f32 0.0, %v2375
        %v2377 = vpop.f32.mrb[0].mxu0
        %2378 = vmatprep.mubr.bf16.mxu0 0
        %2379 = vmatmul.mubr.bf16.gmra.mrb[0].mxu0 %v1047
        %v2380 = vpop.f32.mrb[0].mxu0
        %v2381 = vadd.f32 0.0, %v2380
        %v2382 = vpop.f32.mrb[0].mxu0
        %v2383 = vpop.f32.mrb[0].mxu0
        %v2384 = vadd.f32 0.0, %v2383
        %v2385 = vpop.f32.mrb[0].mxu0
        %2386 = vmatprep.mubr.bf16.mxu0 0
        %2387 = vmatmul.mubr.bf16.gmra.mrb[0].mxu0 %v1050
        %v2388 = vpop.f32.mrb[0].mxu0
        %v2389 = vadd.f32 0.0, %v2388
        %v2390 = vpop.f32.mrb[0].mxu0
        %v2391 = vpop.f32.mrb[0].mxu0
        %v2392 = vadd.f32 0.0, %v2391
        %v2393 = vpop.f32.mrb[0].mxu0
        %2394 = vmatprep.mubr.bf16.mxu0 0
        %2395 = vmatmul.mubr.bf16.gmra.mrb[0].mxu0 %v1053
        %v2396 = vpop.f32.mrb[0].mxu0
        %v2397 = vadd.f32 0.0, %v2396
        %v2398 = vpop.f32.mrb[0].mxu0
        %v2399 = vpop.f32.mrb[0].mxu0
        %v2400 = vadd.f32 0.0, %v2399
        %v2401 = vpop.f32.mrb[0].mxu0
        %2402 = vmatprep.mubr.bf16.mxu0 0
        %2403 = vmatmul.mubr.bf16.gmra.mrb[0].mxu0 %v1056
        %v2404 = vpop.f32.mrb[0].mxu0
        %v2405 = vadd.f32 0.0, %v2404
        %v2406 = vpop.f32.mrb[0].mxu0
        %v2407 = vpop.f32.mrb[0].mxu0
        %v2408 = vadd.f32 0.0, %v2407
        %v2409 = vpop.f32.mrb[0].mxu0
        %2410 = vmatprep.mubr.bf16.mxu0 0
        %2411 = vmatmul.mubr.bf16.gmra.mrb[0].mxu0 %v1059
        %v2412 = vpop.f32.mrb[0].mxu0
        %v2413 = vadd.f32 0.0, %v2412
        %v2414 = vpop.f32.mrb[0].mxu0
        %v2415 = vpop.f32.mrb[0].mxu0
        %v2416 = vadd.f32 0.0, %v2415
        %v2417 = vpop.f32.mrb[0].mxu0
        %2418 = vmatprep.mubr.bf16.mxu0 0
        %2419 = vmatmul.mubr.bf16.gmra.mrb[0].mxu0 %v1062
        %v2420 = vpop.f32.mrb[0].mxu0
        %v2421 = vadd.f32 0.0, %v2420
        %v2422 = vpop.f32.mrb[0].mxu0
        %v2423 = vpop.f32.mrb[0].mxu0
        %v2424 = vadd.f32 0.0, %v2423
        %v2425 = vpop.f32.mrb[0].mxu0
        %2426 = vmatprep.mubr.bf16.mxu0 0
        %2427 = vmatmul.mubr.bf16.gmra.mrb[0].mxu0 %v1065
        %v2428 = vpop.f32.mrb[0].mxu0
        %v2429 = vadd.f32 0.0, %v2428
        %v2430 = vpop.f32.mrb[0].mxu0
        %v2431 = vpop.f32.mrb[0].mxu0
        %v2432 = vadd.f32 0.0, %v2431
        %v2433 = vpop.f32.mrb[0].mxu0
        %2434 = vmatprep.mubr.bf16.mxu0 0
        %2435 = vmatmul.mubr.bf16.gmra.mrb[0].mxu0 %v1068
        %v2436 = vpop.f32.mrb[0].mxu0
        %v2437 = vadd.f32 0.0, %v2436
        %v2438 = vpop.f32.mrb[0].mxu0
        %v2439 = vpop.f32.mrb[0].mxu0
        %v2440 = vadd.f32 0.0, %v2439
        %v2441 = vpop.f32.mrb[0].mxu0
        %2442 = vmatprep.mubr.bf16.mxu0 0
        %2443 = vmatmul.mubr.bf16.gmra.mrb[0].mxu0 %v1071
        %v2444 = vpop.f32.mrb[0].mxu0
        %v2445 = vadd.f32 0.0, %v2444
        %v2446 = vpop.f32.mrb[0].mxu0
        %v2447 = vpop.f32.mrb[0].mxu0
        %v2448 = vadd.f32 0.0, %v2447
        %v2449 = vpop.f32.mrb[0].mxu0
        %2450 = vmatprep.mubr.bf16.mxu0 0
        %2451 = vmatmul.mubr.bf16.gmra.mrb[0].mxu0 %v1074
        %v2452 = vpop.f32.mrb[0].mxu0
        %v2453 = vadd.f32 0.0, %v2452
        %v2454 = vpop.f32.mrb[0].mxu0
        %v2455 = vpop.f32.mrb[0].mxu0
        %v2456 = vadd.f32 0.0, %v2455
        %v2457 = vpop.f32.mrb[0].mxu0
        %2458 = vmatprep.mubr.bf16.mxu0 0
        %2459 = vmatmul.mubr.bf16.gmra.mrb[0].mxu0 %v1077
        %v2460 = vpop.f32.mrb[0].mxu0
        %v2461 = vadd.f32 0.0, %v2460
        %v2462 = vpop.f32.mrb[0].mxu0
        %v2463 = vpop.f32.mrb[0].mxu0
        %v2464 = vadd.f32 0.0, %v2463
        %v2465 = vpop.f32.mrb[0].mxu0
        %2466 = vmatprep.mubr.bf16.mxu0 0
        %2467 = vmatmul.mubr.bf16.gmra.mrb[0].mxu0 %v1080
        %v2468 = vpop.f32.mrb[0].mxu0
        %v2469 = vadd.f32 0.0, %v2468
        %v2470 = vpop.f32.mrb[0].mxu0
        %v2471 = vpop.f32.mrb[0].mxu0
        %v2472 = vadd.f32 0.0, %v2471
        %v2473 = vpop.f32.mrb[0].mxu0
        %2474 = vmatprep.mubr.bf16.mxu0 0
        %2475 = vmatmul.mubr.bf16.gmra.mrb[0].mxu0 %v1679
        %v2476 = vpop.f32.mrb[0].mxu0
        %v2477 = vadd.f32 0.0, %v2476
        %v2478 = vpop.f32.mrb[0].mxu0
        %v2479 = vpop.f32.mrb[0].mxu0
        %v2480 = vadd.f32 0.0, %v2479
        %v2481 = vpop.f32.mrb[0].mxu0
        %2482 = vmatprep.mubr.bf16.mxu0 0
        %2483 = vmatmul.mubr.bf16.gmra.mrb[0].mxu0 %v2325
        %v2484 = vpop.f32.mrb[0].mxu0
        %v2485 = vadd.f32 0.0, %v2484
        %v2486 = vpop.f32.mrb[0].mxu0
        %v2487 = vpop.f32.mrb[0].mxu0
        %v2488 = vadd.f32 0.0, %v2487
        %v2489 = vpop.f32.mrb[0].mxu0
        %2490 = vdwg.mxu0
        %v2491 = vadd.f32 %v2285, %v2365
        %v2492 = vadd.f32 %v2286, %v2368
        %v2493 = vadd.f32 %v2287, %v2373
        %v2494 = vadd.f32 %v2288, %v2376
        %v2495 = vadd.f32 %v2289, %v2381
        %v2496 = vadd.f32 %v2290, %v2384
        %v2497 = vadd.f32 %v2291, %v2389
        %v2498 = vadd.f32 %v2292, %v2392
        %v2499 = vadd.f32 %v2293, %v2397
        %v2500 = vadd.f32 %v2294, %v2400
        %v2501 = vadd.f32 %v2295, %v2405
        %v2502 = vadd.f32 %v2296, %v2408
        %v2503 = vadd.f32 %v2297, %v2413
        %v2504 = vadd.f32 %v2298, %v2416
        %v2505 = vadd.f32 %v2299, %v2421
        %v2506 = vadd.f32 %v2300, %v2424
        %v2507 = vadd.f32 %v2301, %v2429
        %v2508 = vadd.f32 %v2302, %v2432
        %v2509 = vadd.f32 %v2303, %v2437
        %v2510 = vadd.f32 %v2304, %v2440
        %v2511 = vadd.f32 %v2305, %v2445
        %v2512 = vadd.f32 %v2306, %v2448
        %v2513 = vadd.f32 %v2307, %v2453
        %v2514 = vadd.f32 %v2308, %v2456
        %v2515 = vadd.f32 %v2309, %v2461
        %v2516 = vadd.f32 %v2310, %v2464
        %v2517 = vadd.f32 %v2311, %v2469
        %v2518 = vadd.f32 %v2312, %v2472
        %v2519 = vadd.f32 %v2313, %v2477
        %v2520 = vadd.f32 %v2314, %v2480
        %v2521 = vadd.f32 %v2315, %v2485
        %v2522 = vadd.f32 %v2316, %v2488
        %v2524 = vshrl.u32 %v299, 16
        %v2526 = vrot.slane %v2524, 4
        %v2527 = vshll.u32 %v299, 16
        %v2529 = vrot.slane %v2527, 5
        %v2530 = vor.u32 %v2526, %v2529
        %v2531 = vrot.slane %v2530, 4
        %v2533 = vshll.u32 %v300, 16
        %v2535 = vrot.slane %v2533, 5
        %v2536 = vsel %vm305, %v2531, %v2535
        %v2537 = vshrl.u32 %v300, 16
        %v2539 = vrot.slane %v2537, 4
        %v2540 = vor.u32 %v2539, %v2535
        %v2541 = vrot.slane %v2540, 4
        %v2543 = vshll.u32 %v301, 16
        %v2545 = vrot.slane %v2543, 5
        %v2546 = vsel %vm305, %v2541, %v2545
        %s2547 = scalar_lea.vmem [#allocation5], 28
        %v2548 = vld [vmem:[%s2547] sm:$0xf]
        %v2549 = vunpack.c.l.b16 %v2536
        %v2550 = vunpack.c.l.b16 %v2546
        %v2551 = vpack.c.b16 %v2550, %v2549
        %v2553 = vsel %vm740, %v2551, 0
        %v2556 = vsel %vm789, %v2548, 0
        %2558 = vmatprep.subr.bf16.mxu0 0
        %2559 = vmatpush1.bf16.msra.mxu0 %v2556
        %2560 = vmatprep.subr.bf16.mxu0 0
        %2561 = vmatpush1.bf16.msra.mxu0 0
        %2562 = vmatprep.subr.bf16.mxu0 0
        %2563 = vmatpush1.bf16.msra.mxu0 0
        %2564 = vmatprep.subr.bf16.mxu0 0
        %2565 = vmatpush1.bf16.msra.mxu0 0
        %2566 = vmatprep.subr.bf16.mxu0 0
        %2567 = vmatpush1.bf16.msra.mxu0 0
        %2568 = vmatprep.subr.bf16.mxu0 0
        %2569 = vmatpush1.bf16.msra.mxu0 0
        %2570 = vmatprep.subr.bf16.mxu0 0
        %2571 = vmatpush1.bf16.msra.mxu0 0
        %2572 = vmatprep.subr.bf16.mxu0 0
        %2573 = vmatpush1.bf16.msra.mxu0 0
        %2574 = vmatprep.subr.bf16.mxu0 0
        %2575 = vmatpush1.bf16.msra.mxu0 0
        %2576 = vmatprep.subr.bf16.mxu0 0
        %2577 = vmatpush1.bf16.msra.mxu0 0
        %2578 = vmatprep.subr.bf16.mxu0 0
        %2579 = vmatpush1.bf16.msra.mxu0 0
        %2580 = vmatprep.subr.bf16.mxu0 0
        %2581 = vmatpush1.bf16.msra.mxu0 0
        %2582 = vmatprep.subr.bf16.mxu0 0
        %2583 = vmatpush1.bf16.msra.mxu0 0
        %2584 = vmatprep.subr.bf16.mxu0 0
        %2585 = vmatpush1.bf16.msra.mxu0 0
        %2586 = vmatprep.subr.bf16.mxu0 0
        %2587 = vmatpush1.bf16.msra.mxu0 0
        %2588 = vmatprep.subr.bf16.mxu0 0
        %2589 = vmatpush1.bf16.msra.mxu0 0
        %2590 = vmatprep.mubr.bf16.mxu0 0
        %2591 = vmatmul.mubr.bf16.gmra.mrb[0].mxu0 %v748
        %v2592 = vpop.f32.mrb[0].mxu0
        %v2593 = vadd.f32 0.0, %v2592
        %v2594 = vpop.f32.mrb[0].mxu0
        %v2595 = vpop.f32.mrb[0].mxu0
        %v2596 = vadd.f32 0.0, %v2595
        %v2597 = vpop.f32.mrb[0].mxu0
        %2598 = vmatprep.mubr.bf16.mxu0 0
        %2599 = vmatmul.mubr.bf16.gmra.mrb[0].mxu0 %v751
        %v2600 = vpop.f32.mrb[0].mxu0
        %v2601 = vadd.f32 0.0, %v2600
        %v2602 = vpop.f32.mrb[0].mxu0
        %v2603 = vpop.f32.mrb[0].mxu0
        %v2604 = vadd.f32 0.0, %v2603
        %v2605 = vpop.f32.mrb[0].mxu0
        %2606 = vmatprep.mubr.bf16.mxu0 0
        %2607 = vmatmul.mubr.bf16.gmra.mrb[0].mxu0 %v754
        %v2608 = vpop.f32.mrb[0].mxu0
        %v2609 = vadd.f32 0.0, %v2608
        %v2610 = vpop.f32.mrb[0].mxu0
        %v2611 = vpop.f32.mrb[0].mxu0
        %v2612 = vadd.f32 0.0, %v2611
        %v2613 = vpop.f32.mrb[0].mxu0
        %2614 = vmatprep.mubr.bf16.mxu0 0
        %2615 = vmatmul.mubr.bf16.gmra.mrb[0].mxu0 %v757
        %v2616 = vpop.f32.mrb[0].mxu0
        %v2617 = vadd.f32 0.0, %v2616
        %v2618 = vpop.f32.mrb[0].mxu0
        %v2619 = vpop.f32.mrb[0].mxu0
        %v2620 = vadd.f32 0.0, %v2619
        %v2621 = vpop.f32.mrb[0].mxu0
        %2622 = vmatprep.mubr.bf16.mxu0 0
        %2623 = vmatmul.mubr.bf16.gmra.mrb[0].mxu0 %v760
        %v2624 = vpop.f32.mrb[0].mxu0
        %v2625 = vadd.f32 0.0, %v2624
        %v2626 = vpop.f32.mrb[0].mxu0
        %v2627 = vpop.f32.mrb[0].mxu0
        %v2628 = vadd.f32 0.0, %v2627
        %v2629 = vpop.f32.mrb[0].mxu0
        %2630 = vmatprep.mubr.bf16.mxu0 0
        %2631 = vmatmul.mubr.bf16.gmra.mrb[0].mxu0 %v763
        %v2632 = vpop.f32.mrb[0].mxu0
        %v2633 = vadd.f32 0.0, %v2632
        %v2634 = vpop.f32.mrb[0].mxu0
        %v2635 = vpop.f32.mrb[0].mxu0
        %v2636 = vadd.f32 0.0, %v2635
        %v2637 = vpop.f32.mrb[0].mxu0
        %2638 = vmatprep.mubr.bf16.mxu0 0
        %2639 = vmatmul.mubr.bf16.gmra.mrb[0].mxu0 %v766
        %v2640 = vpop.f32.mrb[0].mxu0
        %v2641 = vadd.f32 0.0, %v2640
        %v2642 = vpop.f32.mrb[0].mxu0
        %v2643 = vpop.f32.mrb[0].mxu0
        %v2644 = vadd.f32 0.0, %v2643
        %v2645 = vpop.f32.mrb[0].mxu0
        %2646 = vmatprep.mubr.bf16.mxu0 0
        %2647 = vmatmul.mubr.bf16.gmra.mrb[0].mxu0 %v769
        %v2648 = vpop.f32.mrb[0].mxu0
        %v2649 = vadd.f32 0.0, %v2648
        %v2650 = vpop.f32.mrb[0].mxu0
        %v2651 = vpop.f32.mrb[0].mxu0
        %v2652 = vadd.f32 0.0, %v2651
        %v2653 = vpop.f32.mrb[0].mxu0
        %2654 = vmatprep.mubr.bf16.mxu0 0
        %2655 = vmatmul.mubr.bf16.gmra.mrb[0].mxu0 %v772
        %v2656 = vpop.f32.mrb[0].mxu0
        %v2657 = vadd.f32 0.0, %v2656
        %v2658 = vpop.f32.mrb[0].mxu0
        %v2659 = vpop.f32.mrb[0].mxu0
        %v2660 = vadd.f32 0.0, %v2659
        %v2661 = vpop.f32.mrb[0].mxu0
        %2662 = vmatprep.mubr.bf16.mxu0 0
        %2663 = vmatmul.mubr.bf16.gmra.mrb[0].mxu0 %v775
        %v2664 = vpop.f32.mrb[0].mxu0
        %v2665 = vadd.f32 0.0, %v2664
        %v2666 = vpop.f32.mrb[0].mxu0
        %v2667 = vpop.f32.mrb[0].mxu0
        %v2668 = vadd.f32 0.0, %v2667
        %v2669 = vpop.f32.mrb[0].mxu0
        %2670 = vmatprep.mubr.bf16.mxu0 0
        %2671 = vmatmul.mubr.bf16.gmra.mrb[0].mxu0 %v778
        %v2672 = vpop.f32.mrb[0].mxu0
        %v2673 = vadd.f32 0.0, %v2672
        %v2674 = vpop.f32.mrb[0].mxu0
        %v2675 = vpop.f32.mrb[0].mxu0
        %v2676 = vadd.f32 0.0, %v2675
        %v2677 = vpop.f32.mrb[0].mxu0
        %2678 = vmatprep.mubr.bf16.mxu0 0
        %2679 = vmatmul.mubr.bf16.gmra.mrb[0].mxu0 %v781
        %v2680 = vpop.f32.mrb[0].mxu0
        %v2681 = vadd.f32 0.0, %v2680
        %v2682 = vpop.f32.mrb[0].mxu0
        %v2683 = vpop.f32.mrb[0].mxu0
        %v2684 = vadd.f32 0.0, %v2683
        %v2685 = vpop.f32.mrb[0].mxu0
        %2686 = vmatprep.mubr.bf16.mxu0 0
        %2687 = vmatmul.mubr.bf16.gmra.mrb[0].mxu0 %v784
        %v2688 = vpop.f32.mrb[0].mxu0
        %v2689 = vadd.f32 0.0, %v2688
        %v2690 = vpop.f32.mrb[0].mxu0
        %v2691 = vpop.f32.mrb[0].mxu0
        %v2692 = vadd.f32 0.0, %v2691
        %v2693 = vpop.f32.mrb[0].mxu0
        %2694 = vmatprep.mubr.bf16.mxu0 0
        %2695 = vmatmul.mubr.bf16.gmra.mrb[0].mxu0 %v787
        %v2696 = vpop.f32.mrb[0].mxu0
        %v2697 = vadd.f32 0.0, %v2696
        %v2698 = vpop.f32.mrb[0].mxu0
        %v2699 = vpop.f32.mrb[0].mxu0
        %v2700 = vadd.f32 0.0, %v2699
        %v2701 = vpop.f32.mrb[0].mxu0
        %2702 = vmatprep.mubr.bf16.mxu0 0
        %2703 = vmatmul.mubr.bf16.gmra.mrb[0].mxu0 %v1907
        %v2704 = vpop.f32.mrb[0].mxu0
        %v2705 = vadd.f32 0.0, %v2704
        %v2706 = vpop.f32.mrb[0].mxu0
        %v2707 = vpop.f32.mrb[0].mxu0
        %v2708 = vadd.f32 0.0, %v2707
        %v2709 = vpop.f32.mrb[0].mxu0
        %2710 = vmatprep.mubr.bf16.mxu0 0
        %2711 = vmatmul.mubr.bf16.gmra.mrb[0].mxu0 %v2553
        %v2712 = vpop.f32.mrb[0].mxu0
        %v2713 = vadd.f32 0.0, %v2712
        %v2714 = vpop.f32.mrb[0].mxu0
        %v2715 = vpop.f32.mrb[0].mxu0
        %v2716 = vadd.f32 0.0, %v2715
        %v2717 = vpop.f32.mrb[0].mxu0
        %2718 = vdwg.mxu0
        %v2719 = vadd.f32 %v2491, %v2593
        %v2720 = vadd.f32 %v2492, %v2596
        %v2721 = vadd.f32 %v2493, %v2601
        %v2722 = vadd.f32 %v2494, %v2604
        %v2723 = vadd.f32 %v2495, %v2609
        %v2724 = vadd.f32 %v2496, %v2612
        %v2725 = vadd.f32 %v2497, %v2617
        %v2726 = vadd.f32 %v2498, %v2620
        %v2727 = vadd.f32 %v2499, %v2625
        %v2728 = vadd.f32 %v2500, %v2628
        %v2729 = vadd.f32 %v2501, %v2633
        %v2730 = vadd.f32 %v2502, %v2636
        %v2731 = vadd.f32 %v2503, %v2641
        %v2732 = vadd.f32 %v2504, %v2644
        %v2733 = vadd.f32 %v2505, %v2649
        %v2734 = vadd.f32 %v2506, %v2652
        %v2735 = vadd.f32 %v2507, %v2657
        %v2736 = vadd.f32 %v2508, %v2660
        %v2737 = vadd.f32 %v2509, %v2665
        %v2738 = vadd.f32 %v2510, %v2668
        %v2739 = vadd.f32 %v2511, %v2673
        %v2740 = vadd.f32 %v2512, %v2676
        %v2741 = vadd.f32 %v2513, %v2681
        %v2742 = vadd.f32 %v2514, %v2684
        %v2743 = vadd.f32 %v2515, %v2689
        %v2744 = vadd.f32 %v2516, %v2692
        %v2745 = vadd.f32 %v2517, %v2697
        %v2746 = vadd.f32 %v2518, %v2700
        %v2747 = vadd.f32 %v2519, %v2705
        %v2748 = vadd.f32 %v2520, %v2708
        %v2749 = vadd.f32 %v2521, %v2713
        %v2750 = vadd.f32 %v2522, %v2716
        %v2752 = vrot.slane %v299, 5
        %v2753 = vrot.slane %v2752, 4
        %v2754 = vrot.slane %v300, 5
        %v2755 = vsel %vm1264, %v2753, %v2754
        %v2756 = vrot.slane %v2754, 4
        %v2757 = vrot.slane %v301, 5
        %v2758 = vsel %vm1264, %v2756, %v2757
        %s2759 = scalar_lea.vmem [#allocation5], 32
        %v2760 = vld [vmem:[%s2759] sm:$0xf]
        %v2761 = vunpack.c.l.b16 %v2755
        %v2762 = vunpack.c.l.b16 %v2758
        %v2763 = vpack.c.b16 %v2762, %v2761
        %v2765 = vsel %vm740, %v2763, 0
        %v2768 = vsel %vm789, %v2760, 0
        %2770 = vmatprep.subr.bf16.mxu0 0
        %2771 = vmatpush1.bf16.msra.mxu0 %v2768
        %2772 = vmatprep.subr.bf16.mxu0 0
        %2773 = vmatpush1.bf16.msra.mxu0 0
        %2774 = vmatprep.subr.bf16.mxu0 0
        %2775 = vmatpush1.bf16.msra.mxu0 0
        %2776 = vmatprep.subr.bf16.mxu0 0
        %2777 = vmatpush1.bf16.msra.mxu0 0
        %2778 = vmatprep.subr.bf16.mxu0 0
        %2779 = vmatpush1.bf16.msra.mxu0 0
        %2780 = vmatprep.subr.bf16.mxu0 0
        %2781 = vmatpush1.bf16.msra.mxu0 0
        %2782 = vmatprep.subr.bf16.mxu0 0
        %2783 = vmatpush1.bf16.msra.mxu0 0
        %2784 = vmatprep.subr.bf16.mxu0 0
        %2785 = vmatpush1.bf16.msra.mxu0 0
        %2786 = vmatprep.subr.bf16.mxu0 0
        %2787 = vmatpush1.bf16.msra.mxu0 0
        %2788 = vmatprep.subr.bf16.mxu0 0
        %2789 = vmatpush1.bf16.msra.mxu0 0
        %2790 = vmatprep.subr.bf16.mxu0 0
        %2791 = vmatpush1.bf16.msra.mxu0 0
        %2792 = vmatprep.subr.bf16.mxu0 0
        %2793 = vmatpush1.bf16.msra.mxu0 0
        %2794 = vmatprep.subr.bf16.mxu0 0
        %2795 = vmatpush1.bf16.msra.mxu0 0
        %2796 = vmatprep.subr.bf16.mxu0 0
        %2797 = vmatpush1.bf16.msra.mxu0 0
        %2798 = vmatprep.subr.bf16.mxu0 0
        %2799 = vmatpush1.bf16.msra.mxu0 0
        %2800 = vmatprep.subr.bf16.mxu0 0
        %2801 = vmatpush1.bf16.msra.mxu0 0
        %2802 = vmatprep.mubr.bf16.mxu0 0
        %2803 = vmatmul.mubr.bf16.gmra.mrb[0].mxu0 %v1434
        %v2804 = vpop.f32.mrb[0].mxu0
        %v2805 = vadd.f32 0.0, %v2804
        %v2806 = vpop.f32.mrb[0].mxu0
        %v2807 = vpop.f32.mrb[0].mxu0
        %v2808 = vadd.f32 0.0, %v2807
        %v2809 = vpop.f32.mrb[0].mxu0
        %2810 = vmatprep.mubr.bf16.mxu0 0
        %2811 = vmatmul.mubr.bf16.gmra.mrb[0].mxu0 %v1437
        %v2812 = vpop.f32.mrb[0].mxu0
        %v2813 = vadd.f32 0.0, %v2812
        %v2814 = vpop.f32.mrb[0].mxu0
        %v2815 = vpop.f32.mrb[0].mxu0
        %v2816 = vadd.f32 0.0, %v2815
        %v2817 = vpop.f32.mrb[0].mxu0
        %2818 = vmatprep.mubr.bf16.mxu0 0
        %2819 = vmatmul.mubr.bf16.gmra.mrb[0].mxu0 %v1440
        %v2820 = vpop.f32.mrb[0].mxu0
        %v2821 = vadd.f32 0.0, %v2820
        %v2822 = vpop.f32.mrb[0].mxu0
        %v2823 = vpop.f32.mrb[0].mxu0
        %v2824 = vadd.f32 0.0, %v2823
        %v2825 = vpop.f32.mrb[0].mxu0
        %2826 = vmatprep.mubr.bf16.mxu0 0
        %2827 = vmatmul.mubr.bf16.gmra.mrb[0].mxu0 %v1443
        %v2828 = vpop.f32.mrb[0].mxu0
        %v2829 = vadd.f32 0.0, %v2828
        %v2830 = vpop.f32.mrb[0].mxu0
        %v2831 = vpop.f32.mrb[0].mxu0
        %v2832 = vadd.f32 0.0, %v2831
        %v2833 = vpop.f32.mrb[0].mxu0
        %2834 = vmatprep.mubr.bf16.mxu0 0
        %2835 = vmatmul.mubr.bf16.gmra.mrb[0].mxu0 %v1446
        %v2836 = vpop.f32.mrb[0].mxu0
        %v2837 = vadd.f32 0.0, %v2836
        %v2838 = vpop.f32.mrb[0].mxu0
        %v2839 = vpop.f32.mrb[0].mxu0
        %v2840 = vadd.f32 0.0, %v2839
        %v2841 = vpop.f32.mrb[0].mxu0
        %2842 = vmatprep.mubr.bf16.mxu0 0
        %2843 = vmatmul.mubr.bf16.gmra.mrb[0].mxu0 %v1449
        %v2844 = vpop.f32.mrb[0].mxu0
        %v2845 = vadd.f32 0.0, %v2844
        %v2846 = vpop.f32.mrb[0].mxu0
        %v2847 = vpop.f32.mrb[0].mxu0
        %v2848 = vadd.f32 0.0, %v2847
        %v2849 = vpop.f32.mrb[0].mxu0
        %2850 = vmatprep.mubr.bf16.mxu0 0
        %2851 = vmatmul.mubr.bf16.gmra.mrb[0].mxu0 %v1452
        %v2852 = vpop.f32.mrb[0].mxu0
        %v2853 = vadd.f32 0.0, %v2852
        %v2854 = vpop.f32.mrb[0].mxu0
        %v2855 = vpop.f32.mrb[0].mxu0
        %v2856 = vadd.f32 0.0, %v2855
        %v2857 = vpop.f32.mrb[0].mxu0
        %2858 = vmatprep.mubr.bf16.mxu0 0
        %2859 = vmatmul.mubr.bf16.gmra.mrb[0].mxu0 %v1455
        %v2860 = vpop.f32.mrb[0].mxu0
        %v2861 = vadd.f32 0.0, %v2860
        %v2862 = vpop.f32.mrb[0].mxu0
        %v2863 = vpop.f32.mrb[0].mxu0
        %v2864 = vadd.f32 0.0, %v2863
        %v2865 = vpop.f32.mrb[0].mxu0
        %2866 = vmatprep.mubr.bf16.mxu0 0
        %2867 = vmatmul.mubr.bf16.gmra.mrb[0].mxu0 %v1458
        %v2868 = vpop.f32.mrb[0].mxu0
        %v2869 = vadd.f32 0.0, %v2868
        %v2870 = vpop.f32.mrb[0].mxu0
        %v2871 = vpop.f32.mrb[0].mxu0
        %v2872 = vadd.f32 0.0, %v2871
        %v2873 = vpop.f32.mrb[0].mxu0
        %2874 = vmatprep.mubr.bf16.mxu0 0
        %2875 = vmatmul.mubr.bf16.gmra.mrb[0].mxu0 %v1461
        %v2876 = vpop.f32.mrb[0].mxu0
        %v2877 = vadd.f32 0.0, %v2876
        %v2878 = vpop.f32.mrb[0].mxu0
        %v2879 = vpop.f32.mrb[0].mxu0
        %v2880 = vadd.f32 0.0, %v2879
        %v2881 = vpop.f32.mrb[0].mxu0
        %2882 = vmatprep.mubr.bf16.mxu0 0
        %2883 = vmatmul.mubr.bf16.gmra.mrb[0].mxu0 %v1464
        %v2884 = vpop.f32.mrb[0].mxu0
        %v2885 = vadd.f32 0.0, %v2884
        %v2886 = vpop.f32.mrb[0].mxu0
        %v2887 = vpop.f32.mrb[0].mxu0
        %v2888 = vadd.f32 0.0, %v2887
        %v2889 = vpop.f32.mrb[0].mxu0
        %2890 = vmatprep.mubr.bf16.mxu0 0
        %2891 = vmatmul.mubr.bf16.gmra.mrb[0].mxu0 %v1467
        %v2892 = vpop.f32.mrb[0].mxu0
        %v2893 = vadd.f32 0.0, %v2892
        %v2894 = vpop.f32.mrb[0].mxu0
        %v2895 = vpop.f32.mrb[0].mxu0
        %v2896 = vadd.f32 0.0, %v2895
        %v2897 = vpop.f32.mrb[0].mxu0
        %2898 = vmatprep.mubr.bf16.mxu0 0
        %2899 = vmatmul.mubr.bf16.gmra.mrb[0].mxu0 %v1470
        %v2900 = vpop.f32.mrb[0].mxu0
        %v2901 = vadd.f32 0.0, %v2900
        %v2902 = vpop.f32.mrb[0].mxu0
        %v2903 = vpop.f32.mrb[0].mxu0
        %v2904 = vadd.f32 0.0, %v2903
        %v2905 = vpop.f32.mrb[0].mxu0
        %2906 = vmatprep.mubr.bf16.mxu0 0
        %2907 = vmatmul.mubr.bf16.gmra.mrb[0].mxu0 %v1473
        %v2908 = vpop.f32.mrb[0].mxu0
        %v2909 = vadd.f32 0.0, %v2908
        %v2910 = vpop.f32.mrb[0].mxu0
        %v2911 = vpop.f32.mrb[0].mxu0
        %v2912 = vadd.f32 0.0, %v2911
        %v2913 = vpop.f32.mrb[0].mxu0
        %2914 = vmatprep.mubr.bf16.mxu0 0
        %2915 = vmatmul.mubr.bf16.gmra.mrb[0].mxu0 %v2119
        %v2916 = vpop.f32.mrb[0].mxu0
        %v2917 = vadd.f32 0.0, %v2916
        %v2918 = vpop.f32.mrb[0].mxu0
        %v2919 = vpop.f32.mrb[0].mxu0
        %v2920 = vadd.f32 0.0, %v2919
        %v2921 = vpop.f32.mrb[0].mxu0
        %2922 = vmatprep.mubr.bf16.mxu0 0
        %2923 = vmatmul.mubr.bf16.gmra.mrb[0].mxu0 %v2765
        %v2924 = vpop.f32.mrb[0].mxu0
        %v2925 = vadd.f32 0.0, %v2924
        %v2926 = vpop.f32.mrb[0].mxu0
        %v2927 = vpop.f32.mrb[0].mxu0
        %v2928 = vadd.f32 0.0, %v2927
        %v2929 = vpop.f32.mrb[0].mxu0
        %2930 = vdwg.mxu0
        %v2931 = vadd.f32 %v2719, %v2805
        %v2932 = vadd.f32 %v2720, %v2808
        %v2933 = vadd.f32 %v2721, %v2813
        %v2934 = vadd.f32 %v2722, %v2816
        %v2935 = vadd.f32 %v2723, %v2821
        %v2936 = vadd.f32 %v2724, %v2824
        %v2937 = vadd.f32 %v2725, %v2829
        %v2938 = vadd.f32 %v2726, %v2832
        %v2939 = vadd.f32 %v2727, %v2837
        %v2940 = vadd.f32 %v2728, %v2840
        %v2941 = vadd.f32 %v2729, %v2845
        %v2942 = vadd.f32 %v2730, %v2848
        %v2943 = vadd.f32 %v2731, %v2853
        %v2944 = vadd.f32 %v2732, %v2856
        %v2945 = vadd.f32 %v2733, %v2861
        %v2946 = vadd.f32 %v2734, %v2864
        %v2947 = vadd.f32 %v2735, %v2869
        %v2948 = vadd.f32 %v2736, %v2872
        %v2949 = vadd.f32 %v2737, %v2877
        %v2950 = vadd.f32 %v2738, %v2880
        %v2951 = vadd.f32 %v2739, %v2885
        %v2952 = vadd.f32 %v2740, %v2888
        %v2953 = vadd.f32 %v2741, %v2893
        %v2954 = vadd.f32 %v2742, %v2896
        %v2955 = vadd.f32 %v2743, %v2901
        %v2956 = vadd.f32 %v2744, %v2904
        %v2957 = vadd.f32 %v2745, %v2909
        %v2958 = vadd.f32 %v2746, %v2912
        %v2959 = vadd.f32 %v2747, %v2917
        %v2960 = vadd.f32 %v2748, %v2920
        %v2961 = vadd.f32 %v2749, %v2925
        %v2962 = vadd.f32 %v2750, %v2928
        %2963 = vst [vmem:[%s234] sm:$0xff] %v2931
        %2964 = vst [vmem:[%s234 + $0x8] sm:$0xff] %v2932
        %2965 = vst [vmem:[%s234 + $0x10] sm:$0xff] %v2933
        %2966 = vst [vmem:[%s234 + $0x18] sm:$0xff] %v2934
        %2967 = vst [vmem:[%s234 + $0x20] sm:$0xff] %v2935
        %2968 = vst [vmem:[%s234 + $0x28] sm:$0xff] %v2936
        %2969 = vst [vmem:[%s234 + $0x30] sm:$0xff] %v2937
        %2970 = vst [vmem:[%s234 + $0x38] sm:$0xff] %v2938
        %2971 = vst [vmem:[%s234 + $0x40] sm:$0xff] %v2939
        %2972 = vst [vmem:[%s234 + $0x48] sm:$0xff] %v2940
        %2973 = vst [vmem:[%s234 + $0x50] sm:$0xff] %v2941
        %2974 = vst [vmem:[%s234 + $0x58] sm:$0xff] %v2942
        %2975 = vst [vmem:[%s234 + $0x60] sm:$0xff] %v2943
        %2976 = vst [vmem:[%s234 + $0x68] sm:$0xff] %v2944
        %2977 = vst [vmem:[%s234 + $0x70] sm:$0xff] %v2945
        %2978 = vst [vmem:[%s234 + $0x78] sm:$0xff] %v2946
        %2979 = vst [vmem:[%s234 + $0x80] sm:$0xff] %v2947
        %2980 = vst [vmem:[%s234 + $0x88] sm:$0xff] %v2948
        %2981 = vst [vmem:[%s234 + $0x90] sm:$0xff] %v2949
        %2982 = vst [vmem:[%s234 + $0x98] sm:$0xff] %v2950
        %2983 = vst [vmem:[%s234 + $0xa0] sm:$0xff] %v2951
        %2984 = vst [vmem:[%s234 + $0xa8] sm:$0xff] %v2952
        %2985 = vst [vmem:[%s234 + $0xb0] sm:$0xff] %v2953
        %2986 = vst [vmem:[%s234 + $0xb8] sm:$0xff] %v2954
        %2987 = vst [vmem:[%s234 + $0xc0] sm:$0xff] %v2955
        %2988 = vst [vmem:[%s234 + $0xc8] sm:$0xff] %v2956
        %2989 = vst [vmem:[%s234 + $0xd0] sm:$0xff] %v2957
        %2990 = vst [vmem:[%s234 + $0xd8] sm:$0xff] %v2958
        %2991 = vst [vmem:[%s234 + $0xe0] sm:$0xff] %v2959
        %2992 = vst [vmem:[%s234 + $0xe8] sm:$0xff] %v2960
        %2993 = vst [vmem:[%s234 + $0xf0] sm:$0xff] %v2961
        %2994 = vst [vmem:[%s234 + $0xf8] sm:$0xff] %v2962
        %v2995 = vadd.f32 %v2931, %v2932
        %v2996 = vadd.f32 %v2995, %v2933
        %v2997 = vadd.f32 %v2996, %v2934
        %v2998 = vadd.f32 %v2997, %v2935
        %v2999 = vadd.f32 %v2998, %v2936
        %v3000 = vadd.f32 %v2999, %v2937
        %v3001 = vadd.f32 %v3000, %v2938
        %v3002 = vadd.f32 %v3001, %v2939
        %v3003 = vadd.f32 %v3002, %v2940
        %v3004 = vadd.f32 %v3003, %v2941
        %v3005 = vadd.f32 %v3004, %v2942
        %v3006 = vadd.f32 %v3005, %v2943
        %v3007 = vadd.f32 %v3006, %v2944
        %v3008 = vadd.f32 %v3007, %v2945
        %v3009 = vadd.f32 %v3008, %v2946
        %v3010 = vadd.f32 %v3009, %v2947
        %v3011 = vadd.f32 %v3010, %v2948
        %v3012 = vadd.f32 %v3011, %v2949
        %v3013 = vadd.f32 %v3012, %v2950
        %v3014 = vadd.f32 %v3013, %v2951
        %v3015 = vadd.f32 %v3014, %v2952
        %v3016 = vadd.f32 %v3015, %v2953
        %v3017 = vadd.f32 %v3016, %v2954
        %v3018 = vadd.f32 %v3017, %v2955
        %v3019 = vadd.f32 %v3018, %v2956
        %v3020 = vadd.f32 %v3019, %v2957
        %v3021 = vadd.f32 %v3020, %v2958
        %v3022 = vadd.f32 %v3021, %v2959
        %v3023 = vadd.f32 %v3022, %v2960
        %v3024 = vadd.f32 %v3023, %v2961
        %v3025 = vadd.f32 %v3024, %v2962
        %v3026 = vrot.slane %v3025, 4
        %v3027 = vadd.f32 %v3025, %v3026
        %v3028 = vrot.slane %v3027, 2
        %v3029 = vadd.f32 %v3027, %v3028
        %v3030 = vrot.slane %v3029, 1
        %v3031 = vadd.f32 %v3029, %v3030
        %3032 = vst [vmem:[%s240] sm:$0x1] %v3031
        %v3033 = vmul.f32 %v2931, %v2931
        %v3034 = vmul.f32 %v2932, %v2932
        %v3035 = vmul.f32 %v2933, %v2933
        %v3036 = vmul.f32 %v2934, %v2934
        %v3037 = vmul.f32 %v2935, %v2935
        %v3038 = vmul.f32 %v2936, %v2936
        %v3039 = vmul.f32 %v2937, %v2937
        %v3040 = vmul.f32 %v2938, %v2938
        %v3041 = vmul.f32 %v2939, %v2939
        %v3042 = vmul.f32 %v2940, %v2940
        %v3043 = vmul.f32 %v2941, %v2941
        %v3044 = vmul.f32 %v2942, %v2942
        %v3045 = vmul.f32 %v2943, %v2943
        %v3046 = vmul.f32 %v2944, %v2944
        %v3047 = vmul.f32 %v2945, %v2945
        %v3048 = vmul.f32 %v2946, %v2946
        %v3049 = vmul.f32 %v2947, %v2947
        %v3050 = vmul.f32 %v2948, %v2948
        %v3051 = vmul.f32 %v2949, %v2949
        %v3052 = vmul.f32 %v2950, %v2950
        %v3053 = vmul.f32 %v2951, %v2951
        %v3054 = vmul.f32 %v2952, %v2952
        %v3055 = vmul.f32 %v2953, %v2953
        %v3056 = vmul.f32 %v2954, %v2954
        %v3057 = vmul.f32 %v2955, %v2955
        %v3058 = vmul.f32 %v2956, %v2956
        %v3059 = vmul.f32 %v2957, %v2957
        %v3060 = vmul.f32 %v2958, %v2958
        %v3061 = vmul.f32 %v2959, %v2959
        %v3062 = vmul.f32 %v2960, %v2960
        %v3063 = vmul.f32 %v2961, %v2961
        %v3064 = vmul.f32 %v2962, %v2962
        %v3065 = vadd.f32 %v3033, %v3034
        %v3066 = vadd.f32 %v3065, %v3035
        %v3067 = vadd.f32 %v3066, %v3036
        %v3068 = vadd.f32 %v3067, %v3037
        %v3069 = vadd.f32 %v3068, %v3038
        %v3070 = vadd.f32 %v3069, %v3039
        %v3071 = vadd.f32 %v3070, %v3040
        %v3072 = vadd.f32 %v3071, %v3041
        %v3073 = vadd.f32 %v3072, %v3042
        %v3074 = vadd.f32 %v3073, %v3043
        %v3075 = vadd.f32 %v3074, %v3044
        %v3076 = vadd.f32 %v3075, %v3045
        %v3077 = vadd.f32 %v3076, %v3046
        %v3078 = vadd.f32 %v3077, %v3047
        %v3079 = vadd.f32 %v3078, %v3048
        %v3080 = vadd.f32 %v3079, %v3049
        %v3081 = vadd.f32 %v3080, %v3050
        %v3082 = vadd.f32 %v3081, %v3051
        %v3083 = vadd.f32 %v3082, %v3052
        %v3084 = vadd.f32 %v3083, %v3053
        %v3085 = vadd.f32 %v3084, %v3054
        %v3086 = vadd.f32 %v3085, %v3055
        %v3087 = vadd.f32 %v3086, %v3056
        %v3088 = vadd.f32 %v3087, %v3057
        %v3089 = vadd.f32 %v3088, %v3058
        %v3090 = vadd.f32 %v3089, %v3059
        %v3091 = vadd.f32 %v3090, %v3060
        %v3092 = vadd.f32 %v3091, %v3061
        %v3093 = vadd.f32 %v3092, %v3062
        %v3094 = vadd.f32 %v3093, %v3063
        %v3095 = vadd.f32 %v3094, %v3064
        %v3096 = vrot.slane %v3095, 4
        %v3097 = vadd.f32 %v3095, %v3096
        %v3098 = vrot.slane %v3097, 2
        %v3099 = vadd.f32 %v3097, %v3098
        %v3100 = vrot.slane %v3099, 1
        %v3101 = vadd.f32 %v3099, %v3100
        %3102 = vst [vmem:[%s246] sm:$0x1] %v3101
        %s3103 = sand.u32 %s81, 1
        %s3104 = scalar_lea.sflag [#allocation4], %s3103
        %s3105 = sand.u32 %s81, 1
        %s3106 = smul.addr %s3105, 256
        %s3107 = scalar_lea.vmem [#allocation7], %s3106
        %s3108 = sand.u32 %s26, 1
        %s3109 = scalar_lea.sflag [#allocation9], %s3108
        %s3110 = sand.u32 %s107, 1
        %s3111 = scalar_lea.vmem [#allocation8], %s3110
        %s3112 = sand.u32 %s26, 1
        %s3113 = scalar_lea.sflag [#allocation9], %s3112
        %s3114 = sand.u32 %s133, 1
        %s3115 = scalar_lea.vmem [#allocation10], %s3114
        // Predicated region
        $region37: #{basic_conv2d.2} parent=27 // pred_check
          %p3116 = pneg %p91
        $region38: #{basic_conv2d.2} parent=27 // pred_check_branch
          %3118 = sbr.rel (%p3116) target = $region40
        $region39: #{basic_conv2d.2} parent=27 // pred_region
          %s3120 = ssub.s32 4096, 4096
          %3121 = vsyncadd %s3104, %s3120
          %s3122 = smul.addr %s26, 32
          %s3123 = smul.addr %s3122, 128
          %s3124 = scalar_lea.hbm %s2, %s3123
          %s3125 = sshll.u32 %s3107, 4
          %s3126 = int_to_ptr.vmem [resolvable:$true] %s3125
          %3131 = dma.vmem_to_hbm [thread:$0]  %s3126, 4096, %s3124, %s3104, 128, 128, 8
        $region40: #{basic_conv2d.2} parent=27 // pred_fallthru
          _
        // Predicated region
        $region41: #{basic_conv2d.2} parent=27 // pred_check
          %p3132 = pneg %p117
        $region42: #{basic_conv2d.2} parent=27 // pred_check_branch
          %3134 = sbr.rel (%p3132) target = $region44
        $region43: #{basic_conv2d.2} parent=27 // pred_region
          %s3136 = ssub.s32 16, 16
          %3137 = vsyncadd %s3109, %s3136
          %s3138 = smul.addr %s26, 16
          %s3139 = scalar_lea.hbm %s3, %s3138
          %s3141 = sshll.u32 %s3111, 4
          %s3142 = int_to_ptr.vmem [resolvable:$true] %s3141
          %3144 = dma.vmem_to_hbm [thread:$0]  %s3142, 16, %s3139, %s3109
        $region44: #{basic_conv2d.2} parent=27 // pred_fallthru
          _
        // Predicated region
        $region45: #{basic_conv2d.2} parent=27 // pred_check
          %p3145 = pneg %p143
        $region46: #{basic_conv2d.2} parent=27 // pred_check_branch
          %3147 = sbr.rel (%p3145) target = $region48
        $region47: #{basic_conv2d.2} parent=27 // pred_region
          %s3149 = ssub.s32 16, 16
          %3150 = vsyncadd %s3113, %s3149
          %s3151 = smul.addr %s26, 16
          %s3152 = scalar_lea.hbm %s4, %s3151
          %s3154 = sshll.u32 %s3115, 4
          %s3155 = int_to_ptr.vmem [resolvable:$true] %s3154
          %3157 = dma.vmem_to_hbm [thread:$0]  %s3155, 16, %s3152, %s3113
        $region48: #{basic_conv2d.2} parent=27 // pred_fallthru
          _
      $region28: #{basic_conv2d.2} parent=5 // pred_fallthru
        _
      %p3158 = scmp.le.s32.totalorder 2, %s21
      // Predicated region
      $region49: #{basic_conv2d.2} parent=5 // pred_check
        %p3159 = pneg %p3158
      $region50: #{basic_conv2d.2} parent=5 // pred_check_branch
        %3161 = sbr.rel (%p3159) target = $region52
      $region51: #{basic_conv2d.2} parent=5 // pred_region
        %s3162 = ssub.s32 %s21, 2
        // Predicated region
        $region53: #{basic_conv2d.2} parent=51 // pred_check
          %p3163 = pneg %p97
        $region54: #{basic_conv2d.2} parent=51 // pred_check_branch
          %3165 = sbr.rel (%p3163) target = $region56
        $region55: #{basic_conv2d.2} parent=51 // pred_region
          %s3166 = sand.u32 %s82, 1
          %s3167 = scalar_lea.sflag [#allocation4], %s3166
          %s3168 = sand.u32 %s82, 1
          %s3169 = smul.addr %s3168, 256
          %s3170 = scalar_lea.vmem [#allocation7], %s3169
          %3171 = dma.done %s3167, 4096
        $region56: #{basic_conv2d.2} parent=51 // pred_fallthru
          _
        // Predicated region
        $region57: #{basic_conv2d.2} parent=51 // pred_check
          %p3172 = pneg %p123
        $region58: #{basic_conv2d.2} parent=51 // pred_check_branch
          %3174 = sbr.rel (%p3172) target = $region60
        $region59: #{basic_conv2d.2} parent=51 // pred_region
          %s3175 = sand.u32 %s27, 1
          %s3176 = scalar_lea.sflag [#allocation9], %s3175
          %s3177 = sand.u32 %s108, 1
          %s3178 = scalar_lea.vmem [#allocation8], %s3177
          %3179 = dma.done %s3176, 16
        $region60: #{basic_conv2d.2} parent=51 // pred_fallthru
          _
        // Predicated region
        $region61: #{basic_conv2d.2} parent=51 // pred_check
          %p3180 = pneg %p149
        $region62: #{basic_conv2d.2} parent=51 // pred_check_branch
          %3182 = sbr.rel (%p3180) target = $region64
        $region63: #{basic_conv2d.2} parent=51 // pred_region
          %s3183 = sand.u32 %s27, 1
          %s3184 = scalar_lea.sflag [#allocation9], %s3183
          %s3185 = sand.u32 %s134, 1
          %s3186 = scalar_lea.vmem [#allocation10], %s3185
          %3187 = dma.done %s3184, 16
        $region64: #{basic_conv2d.2} parent=51 // pred_fallthru
          _
      $region52: #{basic_conv2d.2} parent=5 // pred_fallthru
        _
    $region6: #{basic_conv2d.2} parent=1 // loop_footer
      %s25 = sadd.s32 1, %s21
    $region7: #{basic_conv2d.2} parent=1 // loop_footer_branch
      %20 = sbr.rel target = $region3
    $region8: #{basic_conv2d.2} parent=1 // loop_exit
      _
    %3188 = vsyncpa [#allocation3], 1
    %s3189 = scalar_lea.sflag [#allocation3], 1
    %3190 = vsyncpa %s3189, 1
    %3191 = vsyncpa [#allocation6], 1
    %3192 = vsyncpa [#allocation4], 1
    %s3193 = scalar_lea.sflag [#allocation4], 1
    %3194 = vsyncpa %s3193, 1
    %3195 = vsyncpa [#allocation9], 1
    %s3196 = scalar_lea.sflag [#allocation9], 1
    %3197 = vsyncpa %s3196, 1

</llo_original>
